<compile_context>
chip_gen: v7x
topology: tpu7x:2x2x1
jax: 0.10.0
libtpu: 0.0.40
codegen_flags: <defaults>
</compile_context>

<pallas_src>
import jax
import jax.numpy as jnp
import numpy as np
from jax import lax
from jax.experimental import pallas as pl
from jax.experimental.pallas import tpu as pltpu


def _round_up(x, m):
    return ((x + m - 1) // m) * m


def _scatter_gates_t(w, H, Hp):
    """w: (4H, K) PyTorch gate-stacked weight -> (K, 4*Hp) transposed, with each
    gate's columns placed at a 128-aligned offset k*Hp (zeros elsewhere)."""
    K = w.shape[1]
    out = jnp.zeros((K, 4 * Hp), jnp.float32)
    for k in range(4):
        out = out.at[:, k * Hp:k * Hp + H].set(
            jnp.transpose(w[k * H:(k + 1) * H, :]).astype(jnp.float32))
    return out


def _scatter_gates_bias(b, H, Hp):
    out = jnp.zeros((1, 4 * Hp), jnp.float32)
    for k in range(4):
        out = out.at[0, k * Hp:k * Hp + H].set(
            b[k * H:(k + 1) * H].astype(jnp.float32))
    return out


def lstm_forward(x, w_ih, w_hh, b_ih, b_hh, w_fc, b_fc, *,
                 block_t=32, num_batch_blocks=None, unroll=4):
    """x: (B, T, D); weights follow PyTorch conventions:
       w_ih (4H, D), w_hh (4H, H), b_ih/b_hh (4H,), w_fc (C, H), b_fc (C,)."""
    B, T, D = x.shape
    H = w_hh.shape[1]
    C = w_fc.shape[0]

    # Lane-aligned gate / class padding.
    Hp = _round_up(H, 128)
    Gp = 4 * Hp
    Cp = _round_up(C, 128)

    # Batch blocking: pad to bf16 sublane packing (16); optionally shard the
    # recurrence over batch blocks on multi-TensorCore chips (v7x).
    if num_batch_blocks is None:
        kind = ""
        try:
            kind = jax.devices()[0].device_kind.lower()
        except Exception:
            pass
        num_batch_blocks = 2 if ("v7" in kind and B >= 32) else 1
    nb = max(1, int(num_batch_blocks))
    Bb = _round_up(pl.cdiv(B, nb), 16)
    Bp = nb * Bb

    # VMEM-budget-derived block_t + explicit vmem limit.
    try:
        vmem_cap = int(pltpu.get_tpu_info().vmem_capacity_bytes)
    except Exception:
        vmem_cap = 64 * 1024 * 1024
    fixed_bytes = (D * Gp * 2            # W_ih^T (bf16)
                   + Hp * Gp * 2         # W_hh^T (bf16)
                   + Gp * 4              # bias (f32)
                   + Hp * Cp * 4         # W_fc (f32)
                   + Cp * 4              # b_fc (f32)
                   + 2 * Bb * Cp * 4     # double-buffered output
                   + 2 * Bb * Hp * 4)    # h / c scratch
    per_t_bytes = 2 * Bb * D * 2 + Bb * Gp * 4   # dbl-buffered x + proj scratch
    budget = vmem_cap // 2
    bt_cap = max(1, (budget - fixed_bytes) // per_t_bytes)
    block_t = int(max(1, min(block_t, bt_cap, T)))
    nt = pl.cdiv(T, block_t)
    Tp = nt * block_t
    vmem_limit = int(min(vmem_cap,
                         max(fixed_bytes + per_t_bytes * block_t + (4 << 20),
                             32 << 20)))

    # Arrange x as (nb, nt, block_t*Bb, D), zero-padded in batch/time, bf16.
    x_tm = jnp.transpose(x.astype(jnp.float32), (1, 0, 2))          # (T, B, D)
    x_tm = jnp.pad(x_tm, ((0, Tp - T), (0, Bp - B), (0, 0)))        # (Tp, Bp, D)
    x_blk = (x_tm.reshape(Tp, nb, Bb, D)
                  .transpose(1, 0, 2, 3)                            # (nb, Tp, Bb, D)
                  .reshape(nb, nt, block_t * Bb, D)
                  .astype(jnp.bfloat16))

    # Lane-aligned, gate-reordered weights (PyTorch gate order [i, f, g, o]).
    wih_p = _scatter_gates_t(w_ih, H, Hp).astype(jnp.bfloat16)      # (D, Gp)
    whh_p = (jnp.zeros((Hp, Gp), jnp.float32)
             .at[:H, :].set(_scatter_gates_t(w_hh, H, Hp))
             .astype(jnp.bfloat16))                                 # (Hp, Gp)
    bias_p = _scatter_gates_bias(
        b_ih.astype(jnp.float32) + b_hh.astype(jnp.float32), H, Hp)  # (1, Gp)
    wfc_p = (jnp.zeros((Hp, Cp), jnp.float32)
             .at[:H, :C].set(jnp.transpose(w_fc).astype(jnp.float32)))
    bfc_p = (jnp.full((1, Cp), -1e30, jnp.float32)
             .at[0, :C].set(b_fc.astype(jnp.float32)))

    def kernel(x_ref, wih_ref, whh_ref, bias_ref, wfc_ref, bfc_ref, out_ref,
               h_sc, c_sc, proj_sc):
        tb = pl.program_id(1)

        @pl.when(tb == 0)
        def _init():
            h_sc[...] = jnp.zeros_like(h_sc)
            c_sc[...] = jnp.zeros_like(c_sc)

        # Block input projection: one big bf16 MXU matmul over block_t*Bb rows
        # with f32 accumulation, bias folded in -- off the per-timestep path.
        xb = x_ref[0, 0]                                       # (block_t*Bb, D)
        proj_sc[...] = (jnp.dot(xb, wih_ref[...],
                                preferred_element_type=jnp.float32)
                        + bias_ref[...])

        whh = whh_ref[...]                                     # (Hp, Gp) bf16

        def step(lt, carry):
            h, c = carry
            row0 = pl.multiple_of(lt * Bb, Bb)
            gates = proj_sc[pl.ds(row0, Bb), :] + jnp.dot(
                h.astype(jnp.bfloat16), whh,
                preferred_element_type=jnp.float32)
            # sigmoid(x) = 0.5*(tanh(0.5x)+1): one EUP op per gate.
            i = 0.5 * (jnp.tanh(0.5 * gates[:, 0 * Hp:1 * Hp]) + 1.0)
            f = 0.5 * (jnp.tanh(0.5 * gates[:, 1 * Hp:2 * Hp]) + 1.0)
            g = jnp.tanh(gates[:, 2 * Hp:3 * Hp])
            o = 0.5 * (jnp.tanh(0.5 * gates[:, 3 * Hp:4 * Hp]) + 1.0)
            c_new = f * c + i * g
            h_new = o * jnp.tanh(c_new)
            # Mask trailing (cdiv-padded) timesteps: leave h/c untouched.
            valid = (tb * block_t + lt) < T
            h = jnp.where(valid, h_new, h)
            c = jnp.where(valid, c_new, c)
            return (h, c)

        h, c = lax.fori_loop(0, block_t, step, (h_sc[...], c_sc[...]),
                             unroll=min(max(1, unroll), block_t))
        h_sc[...] = h
        c_sc[...] = c

        @pl.when(tb == pl.num_programs(1) - 1)
        def _finalize():
            # Fused fc + softmax head on the last hidden state (one-shot).
            logits = (jnp.dot(h, wfc_ref[...],
                              preferred_element_type=jnp.float32)
                      + bfc_ref[...])
            m = jnp.max(logits, axis=-1, keepdims=True)
            e = jnp.exp(logits - m)
            out_ref[...] = e * pl.reciprocal(
                jnp.sum(e, axis=-1, keepdims=True), approx=True)

    def build(single_buffer_weights):
        def inv_spec(shape):
            if single_buffer_weights:
                return pl.BlockSpec(shape, lambda bb, tb: (0, 0),
                                    pipeline_mode=pl.Buffered(1))
            return pl.BlockSpec(shape, lambda bb, tb: (0, 0))

        return pl.pallas_call(
            kernel,
            out_shape=jax.ShapeDtypeStruct((Bp, Cp), jnp.float32),
            grid_spec=pltpu.PrefetchScalarGridSpec(
                num_scalar_prefetch=0,
                grid=(nb, nt),
                in_specs=[
                    pl.BlockSpec((1, 1, block_t * Bb, D),
                                 lambda bb, tb: (bb, tb, 0, 0)),  # streamed x
                    inv_spec((D, Gp)),                            # W_ih^T
                    inv_spec((Hp, Gp)),                           # W_hh^T
                    inv_spec((1, Gp)),                            # bias
                    inv_spec((Hp, Cp)),                           # W_fc^T
                    inv_spec((1, Cp)),                            # b_fc
                ],
                out_specs=pl.BlockSpec((Bb, Cp), lambda bb, tb: (bb, 0)),
                scratch_shapes=[
                    pltpu.VMEM((Bb, Hp), jnp.float32),            # h carry
                    pltpu.VMEM((Bb, Hp), jnp.float32),            # c carry
                    pltpu.VMEM((block_t * Bb, Gp), jnp.float32),  # block xproj
                ],
            ),
            compiler_params=pltpu.CompilerParams(
                dimension_semantics=("parallel", "arbitrary"),
                vmem_limit_bytes=vmem_limit),
        )

    args = (x_blk, wih_p, whh_p, bias_p, wfc_p, bfc_p)
    try:
        probs = build(True)(*args)
    except Exception:
        # Fallback if single-buffered (pipeline_mode=pl.Buffered(1)) invariant
        # weights are not supported by this jax/Mosaic version.
        probs = build(False)(*args)

    return probs[:B, :C]


def lstm_reference(x, w_ih, w_hh, b_ih, b_hh, w_fc, b_fc):
    """Pure-JAX f32 reference matching PyTorch nn.LSTM + Linear + softmax."""
    B, T, D = x.shape
    H = w_hh.shape[1]
    x = x.astype(jnp.float32)

    def step(carry, x_t):
        h, c = carry
        gates = x_t @ w_ih.T + h @ w_hh.T + b_ih + b_hh
        i = jax.nn.sigmoid(gates[:, 0 * H:1 * H])
        f = jax.nn.sigmoid(gates[:, 1 * H:2 * H])
        g = jnp.tanh(gates[:, 2 * H:3 * H])
        o = jax.nn.sigmoid(gates[:, 3 * H:4 * H])
        c = f * c + i * g
        h = o * jnp.tanh(c)
        return (h, c), h

    h0 = jnp.zeros((B, H), jnp.float32)
    c0 = jnp.zeros((B, H), jnp.float32)
    (h_last, _), _ = lax.scan(step, (h0, c0), jnp.transpose(x, (1, 0, 2)))
    logits = h_last @ w_fc.T + b_fc
    return jax.nn.softmax(logits, axis=1)


if __name__ == "__main__":
    # Small shapes consistent with the module's forward.
    B, T, D, H, C = 2, 8, 16, 32, 10

    key = jax.random.PRNGKey(0)
    ks = jax.random.split(key, 7)
    scale = 1.0 / np.sqrt(H)
    x    = jax.random.normal(ks[0], (B, T, D), jnp.float32)
    w_ih = jax.random.uniform(ks[1], (4 * H, D), jnp.float32, -scale, scale)
    w_hh = jax.random.uniform(ks[2], (4 * H, H), jnp.float32, -scale, scale)
    b_ih = jax.random.uniform(ks[3], (4 * H,), jnp.float32, -scale, scale)
    b_hh = jax.random.uniform(ks[4], (4 * H,), jnp.float32, -scale, scale)
    w_fc = jax.random.uniform(ks[5], (C, H), jnp.float32, -scale, scale)
    b_fc = jax.random.uniform(ks[6], (C,), jnp.float32, -scale, scale)

    ref = lstm_reference(x, w_ih, w_hh, b_ih, b_hh, w_fc, b_fc)

    # bf16 matmul operands (f32 accumulation) -> relaxed tolerance vs f32 ref.
    TOL = 2e-2

    # Multi-block recurrence with an awkward block size (exercises the
    # cross-block h/c carry AND the cdiv + trailing-timestep masking path).
    out = lstm_forward(x, w_ih, w_hh, b_ih, b_hh, w_fc, b_fc, block_t=3)
    out = jax.block_until_ready(out)
    assert out.shape == (B, C)
    np.testing.assert_allclose(np.asarray(out), np.asarray(ref),
                               rtol=0.0, atol=TOL)

    # Default block size (whole sequence in one grid step for this tiny T).
    out2 = lstm_forward(x, w_ih, w_hh, b_ih, b_hh, w_fc, b_fc)
    out2 = jax.block_until_ready(out2)
    np.testing.assert_allclose(np.asarray(out2), np.asarray(ref),
                               rtol=0.0, atol=TOL)

    print("KERNEL_OK")
</pallas_src>

<mosaic_0001>
module attributes {stable_mosaic.version = 11 : i64} {
  func.func @kernel(%arg0: i32, %arg1: i32, %arg2: memref<1x1x48x16xbf16, #tpu.memory_space<vmem>>, %arg3: memref<16x512xbf16, #tpu.memory_space<vmem>>, %arg4: memref<128x512xbf16, #tpu.memory_space<vmem>>, %arg5: memref<1x512xf32, #tpu.memory_space<vmem>>, %arg6: memref<128x128xf32, #tpu.memory_space<vmem>>, %arg7: memref<1x128xf32, #tpu.memory_space<vmem>>, %arg8: memref<16x128xf32, #tpu.memory_space<vmem>>, %arg9: memref<16x128xf32, #tpu.memory_space<vmem>>, %arg10: memref<16x128xf32, #tpu.memory_space<vmem>>, %arg11: memref<48x512xf32, #tpu.memory_space<vmem>>) attributes {dimension_semantics = [#tpu.dimension_semantics<parallel>, #tpu.dimension_semantics<arbitrary>], iteration_bounds = array<i64: 1, 3>, scalar_prefetch = 0 : i64, scratch_operands = 3 : i64, tpu.core_type = #tpu.core_type<tc>, window_params = [{transform_indices = @transform_0, window_bounds = array<i64: 1, 1, 48, 16>}, {pipeline_mode = #tpu.pipeline_mode<synchronous>, transform_indices = @transform_1, window_bounds = array<i64: 16, 512>}, {pipeline_mode = #tpu.pipeline_mode<synchronous>, transform_indices = @transform_2, window_bounds = array<i64: 128, 512>}, {pipeline_mode = #tpu.pipeline_mode<synchronous>, transform_indices = @transform_3, window_bounds = array<i64: 1, 512>}, {pipeline_mode = #tpu.pipeline_mode<synchronous>, transform_indices = @transform_4, window_bounds = array<i64: 128, 128>}, {pipeline_mode = #tpu.pipeline_mode<synchronous>, transform_indices = @transform_5, window_bounds = array<i64: 1, 128>}, {transform_indices = @transform_6, window_bounds = array<i64: 16, 128>}]} {
    %c0_i32 = arith.constant 0 : i32
    %0 = arith.cmpi eq, %arg1, %c0_i32 : i32
    %1 = arith.extui %0 : i1 to i32
    %c0_i32_0 = arith.constant 0 : i32
    %2 = arith.cmpi ne, %1, %c0_i32_0 : i32
    scf.if %2 {
      %cst_63 = arith.constant 0.000000e+00 : f32
      %148 = vector.broadcast %cst_63 : f32 to vector<16x128xf32>
      %c0_64 = arith.constant 0 : index
      %c0_65 = arith.constant 0 : index
      %149 = vector.load %arg9[%c0_64, %c0_65] : memref<16x128xf32, #tpu.memory_space<vmem>>, vector<16x128xf32>
      tpu.vector_store %arg9[%c0_64, %c0_65], %148 {strides = array<i32>} : memref<16x128xf32, #tpu.memory_space<vmem>>, vector<16x128xf32>,
      %cst_66 = arith.constant 0.000000e+00 : f32
      %150 = vector.broadcast %cst_66 : f32 to vector<16x128xf32>
      %c0_67 = arith.constant 0 : index
      %c0_68 = arith.constant 0 : index
      %151 = vector.load %arg10[%c0_67, %c0_68] : memref<16x128xf32, #tpu.memory_space<vmem>>, vector<16x128xf32>
      tpu.vector_store %arg10[%c0_67, %c0_68], %150 {strides = array<i32>} : memref<16x128xf32, #tpu.memory_space<vmem>>, vector<16x128xf32>,
    } else {
    }
    %c0 = arith.constant 0 : index
    %c0_1 = arith.constant 0 : index
    %c0_2 = arith.constant 0 : index
    %c0_3 = arith.constant 0 : index
    %3 = vector.load %arg2[%c0, %c0_1, %c0_2, %c0_3] : memref<1x1x48x16xbf16, #tpu.memory_space<vmem>>, vector<1x1x48x16xbf16>
    %4 = vector.shape_cast %3 : vector<1x1x48x16xbf16> to vector<48x16xbf16>
    %c0_4 = arith.constant 0 : index
    %c0_5 = arith.constant 0 : index
    %5 = vector.load %arg3[%c0_4, %c0_5] : memref<16x512xbf16, #tpu.memory_space<vmem>>, vector<16x512xbf16>
    %cst = arith.constant dense<0.000000e+00> : vector<48x512xf32>
    %6 = tpu.matmul %4, %5, %cst {dimension_numbers = #tpu.dot_dimension_numbers<[1], [0], [0], [1], [0, 0, 1, 1], [], []>} : vector<48x16xbf16>, vector<16x512xbf16>, vector<48x512xf32> -> vector<48x512xf32>
    %c0_6 = arith.constant 0 : index
    %c0_7 = arith.constant 0 : index
    %7 = vector.load %arg5[%c0_6, %c0_7] : memref<1x512xf32, #tpu.memory_space<vmem>>, vector<1x512xf32>
    %8 = vector.broadcast %7 : vector<1x512xf32> to vector<48x512xf32>
    %9 = arith.addf %6, %8 : vector<48x512xf32>
    %c0_8 = arith.constant 0 : index
    %c0_9 = arith.constant 0 : index
    %10 = vector.load %arg11[%c0_8, %c0_9] : memref<48x512xf32, #tpu.memory_space<vmem>>, vector<48x512xf32>
    tpu.vector_store %arg11[%c0_8, %c0_9], %9 {strides = array<i32>} : memref<48x512xf32, #tpu.memory_space<vmem>>, vector<48x512xf32>,
    %c0_10 = arith.constant 0 : index
    %c0_11 = arith.constant 0 : index
    %11 = vector.load %arg4[%c0_10, %c0_11] : memref<128x512xbf16, #tpu.memory_space<vmem>>, vector<128x512xbf16>
    %c0_12 = arith.constant 0 : index
    %c0_13 = arith.constant 0 : index
    %12 = vector.load %arg9[%c0_12, %c0_13] : memref<16x128xf32, #tpu.memory_space<vmem>>, vector<16x128xf32>
    %c0_14 = arith.constant 0 : index
    %c0_15 = arith.constant 0 : index
    %13 = vector.load %arg10[%c0_14, %c0_15] : memref<16x128xf32, #tpu.memory_space<vmem>>, vector<16x128xf32>
    %c0_i32_16 = arith.constant 0 : i32
    %c16_i32 = arith.constant 16 : i32
    %14 = arith.muli %c0_i32_16, %c16_i32 : i32
    %15 = tpu.assume_multiple %14, 16 : i32
    %16 = arith.index_cast %15 : i32 to index
    %c0_17 = arith.constant 0 : index
    %17 = vector.load %arg11[%16, %c0_17] : memref<48x512xf32, #tpu.memory_space<vmem>>, vector<16x512xf32>
    %18 = arith.truncf %12 : vector<16x128xf32> to vector<16x128xbf16>
    %cst_18 = arith.constant dense<0.000000e+00> : vector<16x512xf32>
    %19 = tpu.matmul %18, %11, %cst_18 {dimension_numbers = #tpu.dot_dimension_numbers<[1], [0], [0], [1], [0, 0, 1, 1], [], []>} : vector<16x128xbf16>, vector<128x512xbf16>, vector<16x512xf32> -> vector<16x512xf32>
    %20 = arith.addf %17, %19 : vector<16x512xf32>
    %21 = vector.extract_strided_slice %20 {offsets = [0, 0], sizes = [16, 128], strides = [1, 1]} : vector<16x512xf32> to vector<16x128xf32>
    %cst_19 = arith.constant 5.000000e-01 : f32
    %22 = vector.broadcast %cst_19 : f32 to vector<16x128xf32>
    %23 = arith.mulf %22, %21 : vector<16x128xf32>
    %24 = math.tanh %23 : vector<16x128xf32>
    %cst_20 = arith.constant 1.000000e+00 : f32
    %25 = vector.broadcast %cst_20 : f32 to vector<16x128xf32>
    %26 = arith.addf %24, %25 : vector<16x128xf32>
    %cst_21 = arith.constant 5.000000e-01 : f32
    %27 = vector.broadcast %cst_21 : f32 to vector<16x128xf32>
    %28 = arith.mulf %27, %26 : vector<16x128xf32>
    %29 = vector.extract_strided_slice %20 {offsets = [0, 128], sizes = [16, 128], strides = [1, 1]} : vector<16x512xf32> to vector<16x128xf32>
    %cst_22 = arith.constant 5.000000e-01 : f32
    %30 = vector.broadcast %cst_22 : f32 to vector<16x128xf32>
    %31 = arith.mulf %30, %29 : vector<16x128xf32>
    %32 = math.tanh %31 : vector<16x128xf32>
    %cst_23 = arith.constant 1.000000e+00 : f32
    %33 = vector.broadcast %cst_23 : f32 to vector<16x128xf32>
    %34 = arith.addf %32, %33 : vector<16x128xf32>
    %cst_24 = arith.constant 5.000000e-01 : f32
    %35 = vector.broadcast %cst_24 : f32 to vector<16x128xf32>
    %36 = arith.mulf %35, %34 : vector<16x128xf32>
    %37 = vector.extract_strided_slice %20 {offsets = [0, 256], sizes = [16, 128], strides = [1, 1]} : vector<16x512xf32> to vector<16x128xf32>
    %38 = math.tanh %37 : vector<16x128xf32>
    %39 = vector.extract_strided_slice %20 {offsets = [0, 384], sizes = [16, 128], strides = [1, 1]} : vector<16x512xf32> to vector<16x128xf32>
    %cst_25 = arith.constant 5.000000e-01 : f32
    %40 = vector.broadcast %cst_25 : f32 to vector<16x128xf32>
    %41 = arith.mulf %40, %39 : vector<16x128xf32>
    %42 = math.tanh %41 : vector<16x128xf32>
    %cst_26 = arith.constant 1.000000e+00 : f32
    %43 = vector.broadcast %cst_26 : f32 to vector<16x128xf32>
    %44 = arith.addf %42, %43 : vector<16x128xf32>
    %cst_27 = arith.constant 5.000000e-01 : f32
    %45 = vector.broadcast %cst_27 : f32 to vector<16x128xf32>
    %46 = arith.mulf %45, %44 : vector<16x128xf32>
    %47 = arith.mulf %36, %13 : vector<16x128xf32>
    %48 = arith.mulf %28, %38 : vector<16x128xf32>
    %49 = arith.addf %47, %48 : vector<16x128xf32>
    %50 = math.tanh %49 : vector<16x128xf32>
    %51 = arith.mulf %46, %50 : vector<16x128xf32>
    %c3_i32 = arith.constant 3 : i32
    %52 = arith.muli %arg1, %c3_i32 : i32
    %53 = arith.addi %52, %c0_i32_16 : i32
    %c8_i32 = arith.constant 8 : i32
    %54 = arith.cmpi slt, %53, %c8_i32 : i32
    %55 = arith.select %54, %51, %12 : vector<16x128xf32>
    %56 = arith.select %54, %49, %13 : vector<16x128xf32>
    %c1_i32 = arith.constant 1 : i32
    %c16_i32_28 = arith.constant 16 : i32
    %57 = arith.muli %c1_i32, %c16_i32_28 : i32
    %58 = tpu.assume_multiple %57, 16 : i32
    %59 = arith.index_cast %58 : i32 to index
    %c0_29 = arith.constant 0 : index
    %60 = vector.load %arg11[%59, %c0_29] : memref<48x512xf32, #tpu.memory_space<vmem>>, vector<16x512xf32>
    %61 = arith.truncf %55 : vector<16x128xf32> to vector<16x128xbf16>
    %cst_30 = arith.constant dense<0.000000e+00> : vector<16x512xf32>
    %62 = tpu.matmul %61, %11, %cst_30 {dimension_numbers = #tpu.dot_dimension_numbers<[1], [0], [0], [1], [0, 0, 1, 1], [], []>} : vector<16x128xbf16>, vector<128x512xbf16>, vector<16x512xf32> -> vector<16x512xf32>
    %63 = arith.addf %60, %62 : vector<16x512xf32>
    %64 = vector.extract_strided_slice %63 {offsets = [0, 0], sizes = [16, 128], strides = [1, 1]} : vector<16x512xf32> to vector<16x128xf32>
    %cst_31 = arith.constant 5.000000e-01 : f32
    %65 = vector.broadcast %cst_31 : f32 to vector<16x128xf32>
    %66 = arith.mulf %65, %64 : vector<16x128xf32>
    %67 = math.tanh %66 : vector<16x128xf32>
    %cst_32 = arith.constant 1.000000e+00 : f32
    %68 = vector.broadcast %cst_32 : f32 to vector<16x128xf32>
    %69 = arith.addf %67, %68 : vector<16x128xf32>
    %cst_33 = arith.constant 5.000000e-01 : f32
    %70 = vector.broadcast %cst_33 : f32 to vector<16x128xf32>
    %71 = arith.mulf %70, %69 : vector<16x128xf32>
    %72 = vector.extract_strided_slice %63 {offsets = [0, 128], sizes = [16, 128], strides = [1, 1]} : vector<16x512xf32> to vector<16x128xf32>
    %cst_34 = arith.constant 5.000000e-01 : f32
    %73 = vector.broadcast %cst_34 : f32 to vector<16x128xf32>
    %74 = arith.mulf %73, %72 : vector<16x128xf32>
    %75 = math.tanh %74 : vector<16x128xf32>
    %cst_35 = arith.constant 1.000000e+00 : f32
    %76 = vector.broadcast %cst_35 : f32 to vector<16x128xf32>
    %77 = arith.addf %75, %76 : vector<16x128xf32>
    %cst_36 = arith.constant 5.000000e-01 : f32
    %78 = vector.broadcast %cst_36 : f32 to vector<16x128xf32>
    %79 = arith.mulf %78, %77 : vector<16x128xf32>
    %80 = vector.extract_strided_slice %63 {offsets = [0, 256], sizes = [16, 128], strides = [1, 1]} : vector<16x512xf32> to vector<16x128xf32>
    %81 = math.tanh %80 : vector<16x128xf32>
    %82 = vector.extract_strided_slice %63 {offsets = [0, 384], sizes = [16, 128], strides = [1, 1]} : vector<16x512xf32> to vector<16x128xf32>
    %cst_37 = arith.constant 5.000000e-01 : f32
    %83 = vector.broadcast %cst_37 : f32 to vector<16x128xf32>
    %84 = arith.mulf %83, %82 : vector<16x128xf32>
    %85 = math.tanh %84 : vector<16x128xf32>
    %cst_38 = arith.constant 1.000000e+00 : f32
    %86 = vector.broadcast %cst_38 : f32 to vector<16x128xf32>
    %87 = arith.addf %85, %86 : vector<16x128xf32>
    %cst_39 = arith.constant 5.000000e-01 : f32
    %88 = vector.broadcast %cst_39 : f32 to vector<16x128xf32>
    %89 = arith.mulf %88, %87 : vector<16x128xf32>
    %90 = arith.mulf %79, %56 : vector<16x128xf32>
    %91 = arith.mulf %71, %81 : vector<16x128xf32>
    %92 = arith.addf %90, %91 : vector<16x128xf32>
    %93 = math.tanh %92 : vector<16x128xf32>
    %94 = arith.mulf %89, %93 : vector<16x128xf32>
    %c3_i32_40 = arith.constant 3 : i32
    %95 = arith.muli %arg1, %c3_i32_40 : i32
    %96 = arith.addi %95, %c1_i32 : i32
    %c8_i32_41 = arith.constant 8 : i32
    %97 = arith.cmpi slt, %96, %c8_i32_41 : i32
    %98 = arith.select %97, %94, %55 : vector<16x128xf32>
    %99 = arith.select %97, %92, %56 : vector<16x128xf32>
    %c2_i32 = arith.constant 2 : i32
    %c16_i32_42 = arith.constant 16 : i32
    %100 = arith.muli %c2_i32, %c16_i32_42 : i32
    %101 = tpu.assume_multiple %100, 16 : i32
    %102 = arith.index_cast %101 : i32 to index
    %c0_43 = arith.constant 0 : index
    %103 = vector.load %arg11[%102, %c0_43] : memref<48x512xf32, #tpu.memory_space<vmem>>, vector<16x512xf32>
    %104 = arith.truncf %98 : vector<16x128xf32> to vector<16x128xbf16>
    %cst_44 = arith.constant dense<0.000000e+00> : vector<16x512xf32>
    %105 = tpu.matmul %104, %11, %cst_44 {dimension_numbers = #tpu.dot_dimension_numbers<[1], [0], [0], [1], [0, 0, 1, 1], [], []>} : vector<16x128xbf16>, vector<128x512xbf16>, vector<16x512xf32> -> vector<16x512xf32>
    %106 = arith.addf %103, %105 : vector<16x512xf32>
    %107 = vector.extract_strided_slice %106 {offsets = [0, 0], sizes = [16, 128], strides = [1, 1]} : vector<16x512xf32> to vector<16x128xf32>
    %cst_45 = arith.constant 5.000000e-01 : f32
    %108 = vector.broadcast %cst_45 : f32 to vector<16x128xf32>
    %109 = arith.mulf %108, %107 : vector<16x128xf32>
    %110 = math.tanh %109 : vector<16x128xf32>
    %cst_46 = arith.constant 1.000000e+00 : f32
    %111 = vector.broadcast %cst_46 : f32 to vector<16x128xf32>
    %112 = arith.addf %110, %111 : vector<16x128xf32>
    %cst_47 = arith.constant 5.000000e-01 : f32
    %113 = vector.broadcast %cst_47 : f32 to vector<16x128xf32>
    %114 = arith.mulf %113, %112 : vector<16x128xf32>
    %115 = vector.extract_strided_slice %106 {offsets = [0, 128], sizes = [16, 128], strides = [1, 1]} : vector<16x512xf32> to vector<16x128xf32>
    %cst_48 = arith.constant 5.000000e-01 : f32
    %116 = vector.broadcast %cst_48 : f32 to vector<16x128xf32>
    %117 = arith.mulf %116, %115 : vector<16x128xf32>
    %118 = math.tanh %117 : vector<16x128xf32>
    %cst_49 = arith.constant 1.000000e+00 : f32
    %119 = vector.broadcast %cst_49 : f32 to vector<16x128xf32>
    %120 = arith.addf %118, %119 : vector<16x128xf32>
    %cst_50 = arith.constant 5.000000e-01 : f32
    %121 = vector.broadcast %cst_50 : f32 to vector<16x128xf32>
    %122 = arith.mulf %121, %120 : vector<16x128xf32>
    %123 = vector.extract_strided_slice %106 {offsets = [0, 256], sizes = [16, 128], strides = [1, 1]} : vector<16x512xf32> to vector<16x128xf32>
    %124 = math.tanh %123 : vector<16x128xf32>
    %125 = vector.extract_strided_slice %106 {offsets = [0, 384], sizes = [16, 128], strides = [1, 1]} : vector<16x512xf32> to vector<16x128xf32>
    %cst_51 = arith.constant 5.000000e-01 : f32
    %126 = vector.broadcast %cst_51 : f32 to vector<16x128xf32>
    %127 = arith.mulf %126, %125 : vector<16x128xf32>
    %128 = math.tanh %127 : vector<16x128xf32>
    %cst_52 = arith.constant 1.000000e+00 : f32
    %129 = vector.broadcast %cst_52 : f32 to vector<16x128xf32>
    %130 = arith.addf %128, %129 : vector<16x128xf32>
    %cst_53 = arith.constant 5.000000e-01 : f32
    %131 = vector.broadcast %cst_53 : f32 to vector<16x128xf32>
    %132 = arith.mulf %131, %130 : vector<16x128xf32>
    %133 = arith.mulf %122, %99 : vector<16x128xf32>
    %134 = arith.mulf %114, %124 : vector<16x128xf32>
    %135 = arith.addf %133, %134 : vector<16x128xf32>
    %136 = math.tanh %135 : vector<16x128xf32>
    %137 = arith.mulf %132, %136 : vector<16x128xf32>
    %c3_i32_54 = arith.constant 3 : i32
    %138 = arith.muli %arg1, %c3_i32_54 : i32
    %139 = arith.addi %138, %c2_i32 : i32
    %c8_i32_55 = arith.constant 8 : i32
    %140 = arith.cmpi slt, %139, %c8_i32_55 : i32
    %141 = arith.select %140, %137, %98 : vector<16x128xf32>
    %142 = arith.select %140, %135, %99 : vector<16x128xf32>
    %c3_i32_56 = arith.constant 3 : i32
    %c0_57 = arith.constant 0 : index
    %c0_58 = arith.constant 0 : index
    %143 = vector.load %arg9[%c0_57, %c0_58] : memref<16x128xf32, #tpu.memory_space<vmem>>, vector<16x128xf32>
    tpu.vector_store %arg9[%c0_57, %c0_58], %141 {strides = array<i32>} : memref<16x128xf32, #tpu.memory_space<vmem>>, vector<16x128xf32>,
    %c0_59 = arith.constant 0 : index
    %c0_60 = arith.constant 0 : index
    %144 = vector.load %arg10[%c0_59, %c0_60] : memref<16x128xf32, #tpu.memory_space<vmem>>, vector<16x128xf32>
    tpu.vector_store %arg10[%c0_59, %c0_60], %142 {strides = array<i32>} : memref<16x128xf32, #tpu.memory_space<vmem>>, vector<16x128xf32>,
    %c2_i32_61 = arith.constant 2 : i32
    %145 = arith.cmpi eq, %arg1, %c2_i32_61 : i32
    %146 = arith.extui %145 : i1 to i32
    %c0_i32_62 = arith.constant 0 : i32
    %147 = arith.cmpi ne, %146, %c0_i32_62 : i32
    scf.if %147 {
      %c0_63 = arith.constant 0 : index
      %c0_64 = arith.constant 0 : index
      %148 = vector.load %arg6[%c0_63, %c0_64] : memref<128x128xf32, #tpu.memory_space<vmem>>, vector<128x128xf32>
      %cst_65 = arith.constant dense<0.000000e+00> : vector<16x128xf32>
      %149 = tpu.matmul %141, %148, %cst_65 {dimension_numbers = #tpu.dot_dimension_numbers<[1], [0], [0], [1], [0, 0, 1, 1], [], []>} : vector<16x128xf32>, vector<128x128xf32>, vector<16x128xf32> -> vector<16x128xf32>
      %c0_66 = arith.constant 0 : index
      %c0_67 = arith.constant 0 : index
      %150 = vector.load %arg7[%c0_66, %c0_67] : memref<1x128xf32, #tpu.memory_space<vmem>>, vector<1x128xf32>
      %151 = vector.broadcast %150 : vector<1x128xf32> to vector<16x128xf32>
      %152 = arith.addf %149, %151 : vector<16x128xf32>
      %cst_68 = arith.constant dense<0xFF800000> : vector<16xf32>
      %153 = vector.multi_reduction <maximumf>, %152, %cst_68 [1] : vector<16x128xf32> to vector<16xf32>
      %154 = vector.shape_cast %153 : vector<16xf32> to vector<16x1xf32>
      %155 = vector.broadcast %154 : vector<16x1xf32> to vector<16x128xf32>
      %156 = arith.subf %152, %155 : vector<16x128xf32>
      %157 = math.exp %156 : vector<16x128xf32>
      %cst_69 = arith.constant dense<0.000000e+00> : vector<16xf32>
      %158 = vector.multi_reduction <add>, %157, %cst_69 [1] : vector<16x128xf32> to vector<16xf32>
      %159 = vector.shape_cast %158 : vector<16xf32> to vector<16x1xf32>
      %160 = tpu.reciprocal %159 {approx = true} : vector<16x1xf32> -> vector<16x1xf32>
      %161 = vector.broadcast %160 : vector<16x1xf32> to vector<16x128xf32>
      %162 = arith.mulf %157, %161 : vector<16x128xf32>
      %c0_70 = arith.constant 0 : index
      %c0_71 = arith.constant 0 : index
      %163 = vector.load %arg8[%c0_70, %c0_71] : memref<16x128xf32, #tpu.memory_space<vmem>>, vector<16x128xf32>
      tpu.vector_store %arg8[%c0_70, %c0_71], %162 {strides = array<i32>} : memref<16x128xf32, #tpu.memory_space<vmem>>, vector<16x128xf32>,
    } else {
    }
    return
  }
  func.func @transform_0(%arg0: i32, %arg1: i32) -> (i32, i32, i32, i32) {
    %c0_i32 = arith.constant 0 : i32
    %c0_i32_0 = arith.constant 0 : i32
    %c0_i32_1 = arith.constant 0 : i32
    return %arg0, %arg1, %c0_i32, %c0_i32_0 : i32, i32, i32, i32
  }
  func.func @transform_1(%arg0: i32, %arg1: i32) -> (i32, i32) {
    %c0_i32 = arith.constant 0 : i32
    %c0_i32_0 = arith.constant 0 : i32
    %c0_i32_1 = arith.constant 0 : i32
    return %c0_i32, %c0_i32_0 : i32, i32
  }
  func.func @transform_2(%arg0: i32, %arg1: i32) -> (i32, i32) {
    %c0_i32 = arith.constant 0 : i32
    %c0_i32_0 = arith.constant 0 : i32
    %c0_i32_1 = arith.constant 0 : i32
    return %c0_i32, %c0_i32_0 : i32, i32
  }
  func.func @transform_3(%arg0: i32, %arg1: i32) -> (i32, i32) {
    %c0_i32 = arith.constant 0 : i32
    %c0_i32_0 = arith.constant 0 : i32
    %c0_i32_1 = arith.constant 0 : i32
    return %c0_i32, %c0_i32_0 : i32, i32
  }
  func.func @transform_4(%arg0: i32, %arg1: i32) -> (i32, i32) {
    %c0_i32 = arith.constant 0 : i32
    %c0_i32_0 = arith.constant 0 : i32
    %c0_i32_1 = arith.constant 0 : i32
    return %c0_i32, %c0_i32_0 : i32, i32
  }
  func.func @transform_5(%arg0: i32, %arg1: i32) -> (i32, i32) {
    %c0_i32 = arith.constant 0 : i32
    %c0_i32_0 = arith.constant 0 : i32
    %c0_i32_1 = arith.constant 0 : i32
    return %c0_i32, %c0_i32_0 : i32, i32
  }
  func.func @transform_6(%arg0: i32, %arg1: i32) -> (i32, i32) {
    %c0_i32 = arith.constant 0 : i32
    %c0_i32_0 = arith.constant 0 : i32
    return %arg0, %c0_i32 : i32, i32
  }
}

module attributes {stable_mosaic.version = 11 : i64} {
  func.func @kernel(%arg0: i32, %arg1: i32, %arg2: memref<1x1x48x16xbf16, #tpu.memory_space<vmem>>, %arg3: memref<16x512xbf16, #tpu.memory_space<vmem>>, %arg4: memref<128x512xbf16, #tpu.memory_space<vmem>>, %arg5: memref<1x512xf32, #tpu.memory_space<vmem>>, %arg6: memref<128x128xf32, #tpu.memory_space<vmem>>, %arg7: memref<1x128xf32, #tpu.memory_space<vmem>>, %arg8: memref<16x128xf32, #tpu.memory_space<vmem>>, %arg9: memref<16x128xf32, #tpu.memory_space<vmem>>, %arg10: memref<16x128xf32, #tpu.memory_space<vmem>>, %arg11: memref<48x512xf32, #tpu.memory_space<vmem>>) attributes {dimension_semantics = [#tpu.dimension_semantics<parallel>, #tpu.dimension_semantics<arbitrary>], iteration_bounds = array<i64: 1, 3>, scalar_prefetch = 0 : i64, scratch_operands = 3 : i64, tpu.core_type = #tpu.core_type<tc>, window_params = [{transform_indices = @transform_0, window_bounds = array<i64: 1, 1, 48, 16>}, {pipeline_mode = #tpu.pipeline_mode<synchronous>, transform_indices = @transform_1, window_bounds = array<i64: 16, 512>}, {pipeline_mode = #tpu.pipeline_mode<synchronous>, transform_indices = @transform_2, window_bounds = array<i64: 128, 512>}, {pipeline_mode = #tpu.pipeline_mode<synchronous>, transform_indices = @transform_3, window_bounds = array<i64: 1, 512>}, {pipeline_mode = #tpu.pipeline_mode<synchronous>, transform_indices = @transform_4, window_bounds = array<i64: 128, 128>}, {pipeline_mode = #tpu.pipeline_mode<synchronous>, transform_indices = @transform_5, window_bounds = array<i64: 1, 128>}, {transform_indices = @transform_6, window_bounds = array<i64: 16, 128>}]} {
    %c0_i32 = arith.constant 0 : i32
    %0 = arith.cmpi eq, %arg1, %c0_i32 : i32
    %1 = arith.extui %0 : i1 to i32
    %c0_i32_0 = arith.constant 0 : i32
    %2 = arith.cmpi ne, %1, %c0_i32_0 : i32
    scf.if %2 {
      %cst_63 = arith.constant 0.000000e+00 : f32
      %148 = vector.broadcast %cst_63 : f32 to vector<16x128xf32>
      %c0_64 = arith.constant 0 : index
      %c0_65 = arith.constant 0 : index
      %149 = vector.load %arg9[%c0_64, %c0_65] : memref<16x128xf32, #tpu.memory_space<vmem>>, vector<16x128xf32>
      tpu.vector_store %arg9[%c0_64, %c0_65], %148 {strides = array<i32>} : memref<16x128xf32, #tpu.memory_space<vmem>>, vector<16x128xf32>,
      %cst_66 = arith.constant 0.000000e+00 : f32
      %150 = vector.broadcast %cst_66 : f32 to vector<16x128xf32>
      %c0_67 = arith.constant 0 : index
      %c0_68 = arith.constant 0 : index
      %151 = vector.load %arg10[%c0_67, %c0_68] : memref<16x128xf32, #tpu.memory_space<vmem>>, vector<16x128xf32>
      tpu.vector_store %arg10[%c0_67, %c0_68], %150 {strides = array<i32>} : memref<16x128xf32, #tpu.memory_space<vmem>>, vector<16x128xf32>,
    } else {
    }
    %c0 = arith.constant 0 : index
    %c0_1 = arith.constant 0 : index
    %c0_2 = arith.constant 0 : index
    %c0_3 = arith.constant 0 : index
    %3 = vector.load %arg2[%c0, %c0_1, %c0_2, %c0_3] : memref<1x1x48x16xbf16, #tpu.memory_space<vmem>>, vector<1x1x48x16xbf16>
    %4 = vector.shape_cast %3 : vector<1x1x48x16xbf16> to vector<48x16xbf16>
    %c0_4 = arith.constant 0 : index
    %c0_5 = arith.constant 0 : index
    %5 = vector.load %arg3[%c0_4, %c0_5] : memref<16x512xbf16, #tpu.memory_space<vmem>>, vector<16x512xbf16>
    %cst = arith.constant dense<0.000000e+00> : vector<48x512xf32>
    %6 = tpu.matmul %4, %5, %cst {dimension_numbers = #tpu.dot_dimension_numbers<[1], [0], [0], [1], [0, 0, 1, 1], [], []>} : vector<48x16xbf16>, vector<16x512xbf16>, vector<48x512xf32> -> vector<48x512xf32>
    %c0_6 = arith.constant 0 : index
    %c0_7 = arith.constant 0 : index
    %7 = vector.load %arg5[%c0_6, %c0_7] : memref<1x512xf32, #tpu.memory_space<vmem>>, vector<1x512xf32>
    %8 = vector.broadcast %7 : vector<1x512xf32> to vector<48x512xf32>
    %9 = arith.addf %6, %8 : vector<48x512xf32>
    %c0_8 = arith.constant 0 : index
    %c0_9 = arith.constant 0 : index
    %10 = vector.load %arg11[%c0_8, %c0_9] : memref<48x512xf32, #tpu.memory_space<vmem>>, vector<48x512xf32>
    tpu.vector_store %arg11[%c0_8, %c0_9], %9 {strides = array<i32>} : memref<48x512xf32, #tpu.memory_space<vmem>>, vector<48x512xf32>,
    %c0_10 = arith.constant 0 : index
    %c0_11 = arith.constant 0 : index
    %11 = vector.load %arg4[%c0_10, %c0_11] : memref<128x512xbf16, #tpu.memory_space<vmem>>, vector<128x512xbf16>
    %c0_12 = arith.constant 0 : index
    %c0_13 = arith.constant 0 : index
    %12 = vector.load %arg9[%c0_12, %c0_13] : memref<16x128xf32, #tpu.memory_space<vmem>>, vector<16x128xf32>
    %c0_14 = arith.constant 0 : index
    %c0_15 = arith.constant 0 : index
    %13 = vector.load %arg10[%c0_14, %c0_15] : memref<16x128xf32, #tpu.memory_space<vmem>>, vector<16x128xf32>
    %c0_i32_16 = arith.constant 0 : i32
    %c16_i32 = arith.constant 16 : i32
    %14 = arith.muli %c0_i32_16, %c16_i32 : i32
    %15 = tpu.assume_multiple %14, 16 : i32
    %16 = arith.index_cast %15 : i32 to index
    %c0_17 = arith.constant 0 : index
    %17 = vector.load %arg11[%16, %c0_17] : memref<48x512xf32, #tpu.memory_space<vmem>>, vector<16x512xf32>
    %18 = arith.truncf %12 : vector<16x128xf32> to vector<16x128xbf16>
    %cst_18 = arith.constant dense<0.000000e+00> : vector<16x512xf32>
    %19 = tpu.matmul %18, %11, %cst_18 {dimension_numbers = #tpu.dot_dimension_numbers<[1], [0], [0], [1], [0, 0, 1, 1], [], []>} : vector<16x128xbf16>, vector<128x512xbf16>, vector<16x512xf32> -> vector<16x512xf32>
    %20 = arith.addf %17, %19 : vector<16x512xf32>
    %21 = vector.extract_strided_slice %20 {offsets = [0, 0], sizes = [16, 128], strides = [1, 1]} : vector<16x512xf32> to vector<16x128xf32>
    %cst_19 = arith.constant 5.000000e-01 : f32
    %22 = vector.broadcast %cst_19 : f32 to vector<16x128xf32>
    %23 = arith.mulf %22, %21 : vector<16x128xf32>
    %24 = math.tanh %23 : vector<16x128xf32>
    %cst_20 = arith.constant 1.000000e+00 : f32
    %25 = vector.broadcast %cst_20 : f32 to vector<16x128xf32>
    %26 = arith.addf %24, %25 : vector<16x128xf32>
    %cst_21 = arith.constant 5.000000e-01 : f32
    %27 = vector.broadcast %cst_21 : f32 to vector<16x128xf32>
    %28 = arith.mulf %27, %26 : vector<16x128xf32>
    %29 = vector.extract_strided_slice %20 {offsets = [0, 128], sizes = [16, 128], strides = [1, 1]} : vector<16x512xf32> to vector<16x128xf32>
    %cst_22 = arith.constant 5.000000e-01 : f32
    %30 = vector.broadcast %cst_22 : f32 to vector<16x128xf32>
    %31 = arith.mulf %30, %29 : vector<16x128xf32>
    %32 = math.tanh %31 : vector<16x128xf32>
    %cst_23 = arith.constant 1.000000e+00 : f32
    %33 = vector.broadcast %cst_23 : f32 to vector<16x128xf32>
    %34 = arith.addf %32, %33 : vector<16x128xf32>
    %cst_24 = arith.constant 5.000000e-01 : f32
    %35 = vector.broadcast %cst_24 : f32 to vector<16x128xf32>
    %36 = arith.mulf %35, %34 : vector<16x128xf32>
    %37 = vector.extract_strided_slice %20 {offsets = [0, 256], sizes = [16, 128], strides = [1, 1]} : vector<16x512xf32> to vector<16x128xf32>
    %38 = math.tanh %37 : vector<16x128xf32>
    %39 = vector.extract_strided_slice %20 {offsets = [0, 384], sizes = [16, 128], strides = [1, 1]} : vector<16x512xf32> to vector<16x128xf32>
    %cst_25 = arith.constant 5.000000e-01 : f32
    %40 = vector.broadcast %cst_25 : f32 to vector<16x128xf32>
    %41 = arith.mulf %40, %39 : vector<16x128xf32>
    %42 = math.tanh %41 : vector<16x128xf32>
    %cst_26 = arith.constant 1.000000e+00 : f32
    %43 = vector.broadcast %cst_26 : f32 to vector<16x128xf32>
    %44 = arith.addf %42, %43 : vector<16x128xf32>
    %cst_27 = arith.constant 5.000000e-01 : f32
    %45 = vector.broadcast %cst_27 : f32 to vector<16x128xf32>
    %46 = arith.mulf %45, %44 : vector<16x128xf32>
    %47 = arith.mulf %36, %13 : vector<16x128xf32>
    %48 = arith.mulf %28, %38 : vector<16x128xf32>
    %49 = arith.addf %47, %48 : vector<16x128xf32>
    %50 = math.tanh %49 : vector<16x128xf32>
    %51 = arith.mulf %46, %50 : vector<16x128xf32>
    %c3_i32 = arith.constant 3 : i32
    %52 = arith.muli %arg1, %c3_i32 : i32
    %53 = arith.addi %52, %c0_i32_16 : i32
    %c8_i32 = arith.constant 8 : i32
    %54 = arith.cmpi slt, %53, %c8_i32 : i32
    %55 = arith.select %54, %51, %12 : vector<16x128xf32>
    %56 = arith.select %54, %49, %13 : vector<16x128xf32>
    %c1_i32 = arith.constant 1 : i32
    %c16_i32_28 = arith.constant 16 : i32
    %57 = arith.muli %c1_i32, %c16_i32_28 : i32
    %58 = tpu.assume_multiple %57, 16 : i32
    %59 = arith.index_cast %58 : i32 to index
    %c0_29 = arith.constant 0 : index
    %60 = vector.load %arg11[%59, %c0_29] : memref<48x512xf32, #tpu.memory_space<vmem>>, vector<16x512xf32>
    %61 = arith.truncf %55 : vector<16x128xf32> to vector<16x128xbf16>
    %cst_30 = arith.constant dense<0.000000e+00> : vector<16x512xf32>
    %62 = tpu.matmul %61, %11, %cst_30 {dimension_numbers = #tpu.dot_dimension_numbers<[1], [0], [0], [1], [0, 0, 1, 1], [], []>} : vector<16x128xbf16>, vector<128x512xbf16>, vector<16x512xf32> -> vector<16x512xf32>
    %63 = arith.addf %60, %62 : vector<16x512xf32>
    %64 = vector.extract_strided_slice %63 {offsets = [0, 0], sizes = [16, 128], strides = [1, 1]} : vector<16x512xf32> to vector<16x128xf32>
    %cst_31 = arith.constant 5.000000e-01 : f32
    %65 = vector.broadcast %cst_31 : f32 to vector<16x128xf32>
    %66 = arith.mulf %65, %64 : vector<16x128xf32>
    %67 = math.tanh %66 : vector<16x128xf32>
    %cst_32 = arith.constant 1.000000e+00 : f32
    %68 = vector.broadcast %cst_32 : f32 to vector<16x128xf32>
    %69 = arith.addf %67, %68 : vector<16x128xf32>
    %cst_33 = arith.constant 5.000000e-01 : f32
    %70 = vector.broadcast %cst_33 : f32 to vector<16x128xf32>
    %71 = arith.mulf %70, %69 : vector<16x128xf32>
    %72 = vector.extract_strided_slice %63 {offsets = [0, 128], sizes = [16, 128], strides = [1, 1]} : vector<16x512xf32> to vector<16x128xf32>
    %cst_34 = arith.constant 5.000000e-01 : f32
    %73 = vector.broadcast %cst_34 : f32 to vector<16x128xf32>
    %74 = arith.mulf %73, %72 : vector<16x128xf32>
    %75 = math.tanh %74 : vector<16x128xf32>
    %cst_35 = arith.constant 1.000000e+00 : f32
    %76 = vector.broadcast %cst_35 : f32 to vector<16x128xf32>
    %77 = arith.addf %75, %76 : vector<16x128xf32>
    %cst_36 = arith.constant 5.000000e-01 : f32
    %78 = vector.broadcast %cst_36 : f32 to vector<16x128xf32>
    %79 = arith.mulf %78, %77 : vector<16x128xf32>
    %80 = vector.extract_strided_slice %63 {offsets = [0, 256], sizes = [16, 128], strides = [1, 1]} : vector<16x512xf32> to vector<16x128xf32>
    %81 = math.tanh %80 : vector<16x128xf32>
    %82 = vector.extract_strided_slice %63 {offsets = [0, 384], sizes = [16, 128], strides = [1, 1]} : vector<16x512xf32> to vector<16x128xf32>
    %cst_37 = arith.constant 5.000000e-01 : f32
    %83 = vector.broadcast %cst_37 : f32 to vector<16x128xf32>
    %84 = arith.mulf %83, %82 : vector<16x128xf32>
    %85 = math.tanh %84 : vector<16x128xf32>
    %cst_38 = arith.constant 1.000000e+00 : f32
    %86 = vector.broadcast %cst_38 : f32 to vector<16x128xf32>
    %87 = arith.addf %85, %86 : vector<16x128xf32>
    %cst_39 = arith.constant 5.000000e-01 : f32
    %88 = vector.broadcast %cst_39 : f32 to vector<16x128xf32>
    %89 = arith.mulf %88, %87 : vector<16x128xf32>
    %90 = arith.mulf %79, %56 : vector<16x128xf32>
    %91 = arith.mulf %71, %81 : vector<16x128xf32>
    %92 = arith.addf %90, %91 : vector<16x128xf32>
    %93 = math.tanh %92 : vector<16x128xf32>
    %94 = arith.mulf %89, %93 : vector<16x128xf32>
    %c3_i32_40 = arith.constant 3 : i32
    %95 = arith.muli %arg1, %c3_i32_40 : i32
    %96 = arith.addi %95, %c1_i32 : i32
    %c8_i32_41 = arith.constant 8 : i32
    %97 = arith.cmpi slt, %96, %c8_i32_41 : i32
    %98 = arith.select %97, %94, %55 : vector<16x128xf32>
    %99 = arith.select %97, %92, %56 : vector<16x128xf32>
    %c2_i32 = arith.constant 2 : i32
    %c16_i32_42 = arith.constant 16 : i32
    %100 = arith.muli %c2_i32, %c16_i32_42 : i32
    %101 = tpu.assume_multiple %100, 16 : i32
    %102 = arith.index_cast %101 : i32 to index
    %c0_43 = arith.constant 0 : index
    %103 = vector.load %arg11[%102, %c0_43] : memref<48x512xf32, #tpu.memory_space<vmem>>, vector<16x512xf32>
    %104 = arith.truncf %98 : vector<16x128xf32> to vector<16x128xbf16>
    %cst_44 = arith.constant dense<0.000000e+00> : vector<16x512xf32>
    %105 = tpu.matmul %104, %11, %cst_44 {dimension_numbers = #tpu.dot_dimension_numbers<[1], [0], [0], [1], [0, 0, 1, 1], [], []>} : vector<16x128xbf16>, vector<128x512xbf16>, vector<16x512xf32> -> vector<16x512xf32>
    %106 = arith.addf %103, %105 : vector<16x512xf32>
    %107 = vector.extract_strided_slice %106 {offsets = [0, 0], sizes = [16, 128], strides = [1, 1]} : vector<16x512xf32> to vector<16x128xf32>
    %cst_45 = arith.constant 5.000000e-01 : f32
    %108 = vector.broadcast %cst_45 : f32 to vector<16x128xf32>
    %109 = arith.mulf %108, %107 : vector<16x128xf32>
    %110 = math.tanh %109 : vector<16x128xf32>
    %cst_46 = arith.constant 1.000000e+00 : f32
    %111 = vector.broadcast %cst_46 : f32 to vector<16x128xf32>
    %112 = arith.addf %110, %111 : vector<16x128xf32>
    %cst_47 = arith.constant 5.000000e-01 : f32
    %113 = vector.broadcast %cst_47 : f32 to vector<16x128xf32>
    %114 = arith.mulf %113, %112 : vector<16x128xf32>
    %115 = vector.extract_strided_slice %106 {offsets = [0, 128], sizes = [16, 128], strides = [1, 1]} : vector<16x512xf32> to vector<16x128xf32>
    %cst_48 = arith.constant 5.000000e-01 : f32
    %116 = vector.broadcast %cst_48 : f32 to vector<16x128xf32>
    %117 = arith.mulf %116, %115 : vector<16x128xf32>
    %118 = math.tanh %117 : vector<16x128xf32>
    %cst_49 = arith.constant 1.000000e+00 : f32
    %119 = vector.broadcast %cst_49 : f32 to vector<16x128xf32>
    %120 = arith.addf %118, %119 : vector<16x128xf32>
    %cst_50 = arith.constant 5.000000e-01 : f32
    %121 = vector.broadcast %cst_50 : f32 to vector<16x128xf32>
    %122 = arith.mulf %121, %120 : vector<16x128xf32>
    %123 = vector.extract_strided_slice %106 {offsets = [0, 256], sizes = [16, 128], strides = [1, 1]} : vector<16x512xf32> to vector<16x128xf32>
    %124 = math.tanh %123 : vector<16x128xf32>
    %125 = vector.extract_strided_slice %106 {offsets = [0, 384], sizes = [16, 128], strides = [1, 1]} : vector<16x512xf32> to vector<16x128xf32>
    %cst_51 = arith.constant 5.000000e-01 : f32
    %126 = vector.broadcast %cst_51 : f32 to vector<16x128xf32>
    %127 = arith.mulf %126, %125 : vector<16x128xf32>
    %128 = math.tanh %127 : vector<16x128xf32>
    %cst_52 = arith.constant 1.000000e+00 : f32
    %129 = vector.broadcast %cst_52 : f32 to vector<16x128xf32>
    %130 = arith.addf %128, %129 : vector<16x128xf32>
    %cst_53 = arith.constant 5.000000e-01 : f32
    %131 = vector.broadcast %cst_53 : f32 to vector<16x128xf32>
    %132 = arith.mulf %131, %130 : vector<16x128xf32>
    %133 = arith.mulf %122, %99 : vector<16x128xf32>
    %134 = arith.mulf %114, %124 : vector<16x128xf32>
    %135 = arith.addf %133, %134 : vector<16x128xf32>
    %136 = math.tanh %135 : vector<16x128xf32>
    %137 = arith.mulf %132, %136 : vector<16x128xf32>
    %c3_i32_54 = arith.constant 3 : i32
    %138 = arith.muli %arg1, %c3_i32_54 : i32
    %139 = arith.addi %138, %c2_i32 : i32
    %c8_i32_55 = arith.constant 8 : i32
    %140 = arith.cmpi slt, %139, %c8_i32_55 : i32
    %141 = arith.select %140, %137, %98 : vector<16x128xf32>
    %142 = arith.select %140, %135, %99 : vector<16x128xf32>
    %c3_i32_56 = arith.constant 3 : i32
    %c0_57 = arith.constant 0 : index
    %c0_58 = arith.constant 0 : index
    %143 = vector.load %arg9[%c0_57, %c0_58] : memref<16x128xf32, #tpu.memory_space<vmem>>, vector<16x128xf32>
    tpu.vector_store %arg9[%c0_57, %c0_58], %141 {strides = array<i32>} : memref<16x128xf32, #tpu.memory_space<vmem>>, vector<16x128xf32>,
    %c0_59 = arith.constant 0 : index
    %c0_60 = arith.constant 0 : index
    %144 = vector.load %arg10[%c0_59, %c0_60] : memref<16x128xf32, #tpu.memory_space<vmem>>, vector<16x128xf32>
    tpu.vector_store %arg10[%c0_59, %c0_60], %142 {strides = array<i32>} : memref<16x128xf32, #tpu.memory_space<vmem>>, vector<16x128xf32>,
    %c2_i32_61 = arith.constant 2 : i32
    %145 = arith.cmpi eq, %arg1, %c2_i32_61 : i32
    %146 = arith.extui %145 : i1 to i32
    %c0_i32_62 = arith.constant 0 : i32
    %147 = arith.cmpi ne, %146, %c0_i32_62 : i32
    scf.if %147 {
      %c0_63 = arith.constant 0 : index
      %c0_64 = arith.constant 0 : index
      %148 = vector.load %arg6[%c0_63, %c0_64] : memref<128x128xf32, #tpu.memory_space<vmem>>, vector<128x128xf32>
      %cst_65 = arith.constant dense<0.000000e+00> : vector<16x128xf32>
      %149 = tpu.matmul %141, %148, %cst_65 {dimension_numbers = #tpu.dot_dimension_numbers<[1], [0], [0], [1], [0, 0, 1, 1], [], []>} : vector<16x128xf32>, vector<128x128xf32>, vector<16x128xf32> -> vector<16x128xf32>
      %c0_66 = arith.constant 0 : index
      %c0_67 = arith.constant 0 : index
      %150 = vector.load %arg7[%c0_66, %c0_67] : memref<1x128xf32, #tpu.memory_space<vmem>>, vector<1x128xf32>
      %151 = vector.broadcast %150 : vector<1x128xf32> to vector<16x128xf32>
      %152 = arith.addf %149, %151 : vector<16x128xf32>
      %cst_68 = arith.constant dense<0xFF800000> : vector<16xf32>
      %153 = vector.multi_reduction <maximumf>, %152, %cst_68 [1] : vector<16x128xf32> to vector<16xf32>
      %154 = vector.shape_cast %153 : vector<16xf32> to vector<16x1xf32>
      %155 = vector.broadcast %154 : vector<16x1xf32> to vector<16x128xf32>
      %156 = arith.subf %152, %155 : vector<16x128xf32>
      %157 = math.exp %156 : vector<16x128xf32>
      %cst_69 = arith.constant dense<0.000000e+00> : vector<16xf32>
      %158 = vector.multi_reduction <add>, %157, %cst_69 [1] : vector<16x128xf32> to vector<16xf32>
      %159 = vector.shape_cast %158 : vector<16xf32> to vector<16x1xf32>
      %160 = tpu.reciprocal %159 {approx = true} : vector<16x1xf32> -> vector<16x1xf32>
      %161 = vector.broadcast %160 : vector<16x1xf32> to vector<16x128xf32>
      %162 = arith.mulf %157, %161 : vector<16x128xf32>
      %c0_70 = arith.constant 0 : index
      %c0_71 = arith.constant 0 : index
      %163 = vector.load %arg8[%c0_70, %c0_71] : memref<16x128xf32, #tpu.memory_space<vmem>>, vector<16x128xf32>
      tpu.vector_store %arg8[%c0_70, %c0_71], %162 {strides = array<i32>} : memref<16x128xf32, #tpu.memory_space<vmem>>, vector<16x128xf32>,
    } else {
    }
    return
  }
  func.func @transform_0(%arg0: i32, %arg1: i32) -> (i32, i32, i32, i32) {
    %c0_i32 = arith.constant 0 : i32
    %c0_i32_0 = arith.constant 0 : i32
    %c0_i32_1 = arith.constant 0 : i32
    return %arg0, %arg1, %c0_i32, %c0_i32_0 : i32, i32, i32, i32
  }
  func.func @transform_1(%arg0: i32, %arg1: i32) -> (i32, i32) {
    %c0_i32 = arith.constant 0 : i32
    %c0_i32_0 = arith.constant 0 : i32
    %c0_i32_1 = arith.constant 0 : i32
    return %c0_i32, %c0_i32_0 : i32, i32
  }
  func.func @transform_2(%arg0: i32, %arg1: i32) -> (i32, i32) {
    %c0_i32 = arith.constant 0 : i32
    %c0_i32_0 = arith.constant 0 : i32
    %c0_i32_1 = arith.constant 0 : i32
    return %c0_i32, %c0_i32_0 : i32, i32
  }
  func.func @transform_3(%arg0: i32, %arg1: i32) -> (i32, i32) {
    %c0_i32 = arith.constant 0 : i32
    %c0_i32_0 = arith.constant 0 : i32
    %c0_i32_1 = arith.constant 0 : i32
    return %c0_i32, %c0_i32_0 : i32, i32
  }
  func.func @transform_4(%arg0: i32, %arg1: i32) -> (i32, i32) {
    %c0_i32 = arith.constant 0 : i32
    %c0_i32_0 = arith.constant 0 : i32
    %c0_i32_1 = arith.constant 0 : i32
    return %c0_i32, %c0_i32_0 : i32, i32
  }
  func.func @transform_5(%arg0: i32, %arg1: i32) -> (i32, i32) {
    %c0_i32 = arith.constant 0 : i32
    %c0_i32_0 = arith.constant 0 : i32
    %c0_i32_1 = arith.constant 0 : i32
    return %c0_i32, %c0_i32_0 : i32, i32
  }
  func.func @transform_6(%arg0: i32, %arg1: i32) -> (i32, i32) {
    %c0_i32 = arith.constant 0 : i32
    %c0_i32_0 = arith.constant 0 : i32
    return %arg0, %c0_i32 : i32, i32
  }
}

</mosaic_0001>

<llo_original>
// kernel: tpu_custom_call.1
$region0: #{tpu_custom_call.1}
  #allocation0 [shape = 'u32[]', space=smem, size = 0x4, offset = 0x4, fixed_abs, tag = 'smem constant byte address 0x4 - core index']
  #allocation1 [shape = 'u32[144,128]{1,0:T(1,128)}', space=vmem, size = 0x12000, scoped, tag = 'internal scratch']
  #allocation2 [shape = 'f32[16,128]{1,0:T(8,128)}', space=vmem, size = 0x2000, scoped, tag = 'scratch operand']
  #allocation3 [shape = 'f32[16,128]{1,0:T(8,128)}', space=vmem, size = 0x2000, scoped, tag = 'scratch operand']
  #allocation4 [shape = 'f32[48,512]{1,0:T(8,128)}', space=vmem, size = 0x18000, scoped, tag = 'scratch operand']
  %s0 = inlined_call_operand.vmem [shape: bf16[1,3,48,16], index: 0, kind: input, shape index: {}]
  %s1 = inlined_call_operand.vmem [shape: bf16[16,512], index: 1, kind: input, shape index: {}]
  %s2 = inlined_call_operand.hbm [shape: bf16[128,512], index: 2, kind: input, shape index: {}]
  %s3 = inlined_call_operand.vmem [shape: f32[1,512], index: 3, kind: input, shape index: {}]
  %s4 = inlined_call_operand.hbm [shape: f32[128,128], index: 4, kind: input, shape index: {}]
  %s5 = inlined_call_operand.vmem [shape: f32[1,128], index: 5, kind: input, shape index: {}]
  %s6 = inlined_call_operand.hbm [shape: f32[16,128], index: 6, kind: output, shape index: {}]
  %s7 = sld [smem:[#allocation0]]
  $region73: #{tpu_custom_call.1} parent=0
    _
  %s9 = ssub.s32 1, %s7
  %s10 = scalar_select 0, %s9, %s7
  $region1: #{tpu_custom_call.1} parent=0
    #allocation5 [shape = 'u8[131072]{0}', space=vmem, size = 0x20000, scoped, tag = 'input window, operand 2, single buffered']
    #allocation6 [shape = 's32[2]{0}', space=sflag, size = 0x8, scoped, tag = 'scoped memory for tpu_custom_call.1']
    #allocation7 [shape = 's32[2]{0}', space=sflag, size = 0x8, scoped, tag = 'scoped memory for tpu_custom_call.1']
    #allocation8 [shape = 'u8[65536]{0}', space=vmem, size = 0x10000, scoped, tag = 'input window, operand 4, single buffered']
    #allocation9 [shape = 's32[1]{0}', space=sflag, size = 0x4, scoped, tag = 'scoped memory for tpu_custom_call.1']
    #allocation10 [shape = 'u8[8192]{0}', space=vmem, size = 0x2000, scoped, tag = 'output window, operand 0, single buffered']
    %11 = vsyncpa [#allocation6], 0
    %12 = vsyncpa [#allocation9], 0
    %13 = vsyncpa [#allocation7], 0
    loop: start=0, step=1, limit=5
    $region2: #{tpu_custom_call.1} parent=1 // loop_pre_header
      _
    $region3: #{tpu_custom_call.1} parent=1 // loop_header
      %s15 = sphi 0, %s19
      %p16 = scmp.ge.s32.totalorder %s15, 5
      %s22 = sphi 0, %s34
      %s23 = sphi 0, %s30
      %s24 = sphi 0, %s22
      %s25 = sphi 0, %s23
      %s26 = sphi 0, %s24
      %s27 = sphi 0, %s25
      %s39 = sphi 0, %s41
      %s42 = sphi 0, %s39
      %s43 = sphi 0, %s42
      %s59 = sphi 0, %s43
      %s63 = sphi 0, %s63
      %s65 = sphi 0, %s63
      %s66 = sphi 0, %s65
      %s80 = sphi 0, %s66
      %s84 = sphi 0, %s84
      %s86 = sphi 0, %s84
      %s87 = sphi 0, %s86
      %s101 = sphi 0, %s87
      %s105 = sphi 0, %s105
      %s107 = sphi 0, %s105
      %s108 = sphi 0, %s107
      %s122 = sphi 0, %s108
      %s126 = sphi 0, %s126
      %s128 = sphi 0, %s126
      %s129 = sphi 0, %s128
      %s143 = sphi 0, %s129
      %s147 = sphi 0, %s147
      %s149 = sphi 0, %s147
      %s150 = sphi 0, %s149
      %s164 = sphi 0, %s150
      %s170 = sphi 0, %s172
      %s173 = sphi 0, %s170
      %s174 = sphi 0, %s173
      %s190 = sphi 0, %s174
    $region4: #{tpu_custom_call.1} parent=1 // loop_header_branch
      %18 = sbr.rel (%p16) target = $region8
    $region5: #{tpu_custom_call.1} parent=1 // loop_body
      %s20 = ssub.s32 %s15, 1
      %s21 = ssub.s32 %s15, 2
      %s28 = sadd.s32 1, %s23
      %p29 = scmp.ge.s32.totalorder %s28, 3
      %s30 = scalar_select %p29, 0, %s28
      %s31 = sadd.s32 1, %s22
      %s32 = scalar_select %p29, %s31, %s22
      %p33 = scmp.ge.s32.totalorder %s32, 1
      %s34 = scalar_select %p33, 0, %s32
      %s35 = ssub.s32 %s22, %s34
      %s36 = ssub.s32 %s23, %s30
      %s37 = sor.u32 %s35, %s36
      %p38 = scmp.eq.s32.totalorder %s37, 0
      %s40 = sadd.s32 %s39, 1
      %s41 = scalar_select %p38, %s39, %s40
      %p44 = pneg %p38
      %p45 = scmp.eq.s32.totalorder %s15, 2
      %p46 = por %p44, %p45
      %p47 = scmp.ne.s32.totalorder %s39, %s42
      %p48 = scmp.eq.s32.totalorder %s15, 0
      %p49 = por %p47, %p48
      %p50 = scmp.ne.s32.totalorder %s39, %s42
      %p51 = scmp.eq.s32.totalorder %s20, 2
      %p52 = por %p50, %p51
      %p53 = scmp.ne.s32.totalorder %s42, %s43
      %p54 = scmp.eq.s32.totalorder %s20, 0
      %p55 = por %p53, %p54
      %p56 = scmp.ne.s32.totalorder %s42, %s43
      %p57 = scmp.eq.s32.totalorder %s21, 2
      %p58 = por %p56, %p57
      %p60 = scmp.ne.s32.totalorder %s43, %s59
      %p61 = scmp.eq.s32.totalorder %s21, 0
      %p62 = por %p60, %p61
      %s64 = sadd.s32 %s63, 1
      %p67 = scmp.eq.s32.totalorder %s15, 2
      %p68 = scmp.ne.s32.totalorder %s63, %s65
      %p69 = scmp.eq.s32.totalorder %s15, 0
      %p70 = por %p68, %p69
      %p71 = scmp.ne.s32.totalorder %s63, %s65
      %p72 = scmp.eq.s32.totalorder %s20, 2
      %p73 = por %p71, %p72
      %p74 = scmp.ne.s32.totalorder %s65, %s66
      %p75 = scmp.eq.s32.totalorder %s20, 0
      %p76 = por %p74, %p75
      %p77 = scmp.ne.s32.totalorder %s65, %s66
      %p78 = scmp.eq.s32.totalorder %s21, 2
      %p79 = por %p77, %p78
      %p81 = scmp.ne.s32.totalorder %s66, %s80
      %p82 = scmp.eq.s32.totalorder %s21, 0
      %p83 = por %p81, %p82
      %s85 = sadd.s32 %s84, 1
      %p88 = scmp.eq.s32.totalorder %s15, 2
      %p89 = scmp.ne.s32.totalorder %s84, %s86
      %p90 = scmp.eq.s32.totalorder %s15, 0
      %p91 = por %p89, %p90
      %p92 = scmp.ne.s32.totalorder %s84, %s86
      %p93 = scmp.eq.s32.totalorder %s20, 2
      %p94 = por %p92, %p93
      %p95 = scmp.ne.s32.totalorder %s86, %s87
      %p96 = scmp.eq.s32.totalorder %s20, 0
      %p97 = por %p95, %p96
      %p98 = scmp.ne.s32.totalorder %s86, %s87
      %p99 = scmp.eq.s32.totalorder %s21, 2
      %p100 = por %p98, %p99
      %p102 = scmp.ne.s32.totalorder %s87, %s101
      %p103 = scmp.eq.s32.totalorder %s21, 0
      %p104 = por %p102, %p103
      %s106 = sadd.s32 %s105, 1
      %p109 = scmp.eq.s32.totalorder %s15, 2
      %p110 = scmp.ne.s32.totalorder %s105, %s107
      %p111 = scmp.eq.s32.totalorder %s15, 0
      %p112 = por %p110, %p111
      %p113 = scmp.ne.s32.totalorder %s105, %s107
      %p114 = scmp.eq.s32.totalorder %s20, 2
      %p115 = por %p113, %p114
      %p116 = scmp.ne.s32.totalorder %s107, %s108
      %p117 = scmp.eq.s32.totalorder %s20, 0
      %p118 = por %p116, %p117
      %p119 = scmp.ne.s32.totalorder %s107, %s108
      %p120 = scmp.eq.s32.totalorder %s21, 2
      %p121 = por %p119, %p120
      %p123 = scmp.ne.s32.totalorder %s108, %s122
      %p124 = scmp.eq.s32.totalorder %s21, 0
      %p125 = por %p123, %p124
      %s127 = sadd.s32 %s126, 1
      %p130 = scmp.eq.s32.totalorder %s15, 2
      %p131 = scmp.ne.s32.totalorder %s126, %s128
      %p132 = scmp.eq.s32.totalorder %s15, 0
      %p133 = por %p131, %p132
      %p134 = scmp.ne.s32.totalorder %s126, %s128
      %p135 = scmp.eq.s32.totalorder %s20, 2
      %p136 = por %p134, %p135
      %p137 = scmp.ne.s32.totalorder %s128, %s129
      %p138 = scmp.eq.s32.totalorder %s20, 0
      %p139 = por %p137, %p138
      %p140 = scmp.ne.s32.totalorder %s128, %s129
      %p141 = scmp.eq.s32.totalorder %s21, 2
      %p142 = por %p140, %p141
      %p144 = scmp.ne.s32.totalorder %s129, %s143
      %p145 = scmp.eq.s32.totalorder %s21, 0
      %p146 = por %p144, %p145
      %s148 = sadd.s32 %s147, 1
      %p151 = scmp.eq.s32.totalorder %s15, 2
      %p152 = scmp.ne.s32.totalorder %s147, %s149
      %p153 = scmp.eq.s32.totalorder %s15, 0
      %p154 = por %p152, %p153
      %p155 = scmp.ne.s32.totalorder %s147, %s149
      %p156 = scmp.eq.s32.totalorder %s20, 2
      %p157 = por %p155, %p156
      %p158 = scmp.ne.s32.totalorder %s149, %s150
      %p159 = scmp.eq.s32.totalorder %s20, 0
      %p160 = por %p158, %p159
      %p161 = scmp.ne.s32.totalorder %s149, %s150
      %p162 = scmp.eq.s32.totalorder %s21, 2
      %p163 = por %p161, %p162
      %p165 = scmp.ne.s32.totalorder %s150, %s164
      %p166 = scmp.eq.s32.totalorder %s21, 0
      %p167 = por %p165, %p166
      %s168 = ssub.s32 %s22, %s34
      %p169 = scmp.eq.s32.totalorder %s168, 0
      %s171 = sadd.s32 %s170, 1
      %s172 = scalar_select %p169, %s170, %s171
      %p175 = pneg %p169
      %p176 = scmp.eq.s32.totalorder %s15, 2
      %p177 = por %p175, %p176
      %p178 = scmp.ne.s32.totalorder %s170, %s173
      %p179 = scmp.eq.s32.totalorder %s15, 0
      %p180 = por %p178, %p179
      %p181 = scmp.ne.s32.totalorder %s170, %s173
      %p182 = scmp.eq.s32.totalorder %s20, 2
      %p183 = por %p181, %p182
      %p184 = scmp.ne.s32.totalorder %s173, %s174
      %p185 = scmp.eq.s32.totalorder %s20, 0
      %p186 = por %p184, %p185
      %p187 = scmp.ne.s32.totalorder %s173, %s174
      %p188 = scmp.eq.s32.totalorder %s21, 2
      %p189 = por %p187, %p188
      %p191 = scmp.ne.s32.totalorder %s174, %s190
      %p192 = scmp.eq.s32.totalorder %s21, 0
      %p193 = por %p191, %p192
      %p194 = scmp.le.s32.totalorder 1, %s15
      %p195 = scmp.lt.s32.totalorder %s15, 4
      %p196 = pnand %p194, %p195
      %p197 = pneg %p196
      // Predicated region
      $region9: #{tpu_custom_call.1} parent=5 // pred_check
        _
      $region10: #{tpu_custom_call.1} parent=5 // pred_check_branch
        %199 = sbr.rel (%p196) target = $region12
      $region11: #{tpu_custom_call.1} parent=5 // pred_region
        %s200 = ssub.s32 %s15, 1
        // Predicated region
        $region13: #{tpu_custom_call.1} parent=11 // pred_check
          %p201 = pneg %p76
        $region14: #{tpu_custom_call.1} parent=11 // pred_check_branch
          %203 = sbr.rel (%p201) target = $region16
        $region15: #{tpu_custom_call.1} parent=11 // pred_region
          _
        $region16: #{tpu_custom_call.1} parent=11 // pred_fallthru
          _
        // Predicated region
        $region17: #{tpu_custom_call.1} parent=11 // pred_check
          %p204 = pneg %p97
        $region18: #{tpu_custom_call.1} parent=11 // pred_check_branch
          %206 = sbr.rel (%p204) target = $region20
        $region19: #{tpu_custom_call.1} parent=11 // pred_region
          %s208 = ssub.s32 4096, 4096
          %209 = vsyncadd [#allocation6], %s208
          %s210 = sshll.u32 [#allocation5], 4
          %s211 = int_to_ptr.vmem [resolvable:$true] %s210
          %216 = dma.hbm_to_vmem [thread:$0]  %s2, 4096, %s211, [#allocation6], 256, 256, 16
        $region20: #{tpu_custom_call.1} parent=11 // pred_fallthru
          _
        // Predicated region
        $region21: #{tpu_custom_call.1} parent=11 // pred_check
          %p217 = pneg %p118
        $region22: #{tpu_custom_call.1} parent=11 // pred_check_branch
          %219 = sbr.rel (%p217) target = $region24
        $region23: #{tpu_custom_call.1} parent=11 // pred_region
          _
        $region24: #{tpu_custom_call.1} parent=11 // pred_fallthru
          _
        // Predicated region
        $region25: #{tpu_custom_call.1} parent=11 // pred_check
          %p220 = pneg %p139
        $region26: #{tpu_custom_call.1} parent=11 // pred_check_branch
          %222 = sbr.rel (%p220) target = $region28
        $region27: #{tpu_custom_call.1} parent=11 // pred_region
          %s224 = ssub.s32 2048, 2048
          %225 = vsyncadd [#allocation9], %s224
          %s226 = sshll.u32 [#allocation8], 4
          %s227 = int_to_ptr.vmem [resolvable:$true] %s226
          %232 = dma.hbm_to_vmem [thread:$0]  %s4, 2048, %s227, [#allocation9], 128, 128, 8
        $region28: #{tpu_custom_call.1} parent=11 // pred_fallthru
          _
        // Predicated region
        $region29: #{tpu_custom_call.1} parent=11 // pred_check
          %p233 = pneg %p160
        $region30: #{tpu_custom_call.1} parent=11 // pred_check_branch
          %235 = sbr.rel (%p233) target = $region32
        $region31: #{tpu_custom_call.1} parent=11 // pred_region
          _
        $region32: #{tpu_custom_call.1} parent=11 // pred_fallthru
          _
      $region12: #{tpu_custom_call.1} parent=5 // pred_fallthru
        _
      %p236 = scmp.lt.s32.totalorder %s15, 3
      // Predicated region
      $region33: #{tpu_custom_call.1} parent=5 // pred_check
        %p237 = pneg %p236
      $region34: #{tpu_custom_call.1} parent=5 // pred_check_branch
        %239 = sbr.rel (%p237) target = $region36
      $region35: #{tpu_custom_call.1} parent=5 // pred_region
        // Predicated region
        $region37: #{tpu_custom_call.1} parent=35 // pred_check
          %p240 = pneg %p49
        $region38: #{tpu_custom_call.1} parent=35 // pred_check_branch
          %242 = sbr.rel (%p240) target = $region40
        $region39: #{tpu_custom_call.1} parent=35 // pred_region
          %p243 = scmp.lt.s32.totalorder %s22, 0
          %s244 = scalar_select %p243, %s22, 0
          %p245 = scmp.lt.s32.totalorder %s23, 2
          %s246 = scalar_select %p245, %s23, 2
          %s247 = smul.addr %s246, 6
          %s248 = smul.addr %s244, 18
          %s249 = sadd.s32 %s247, %s248
          %s250 = smul.addr %s249, 4
          %s251 = scalar_lea.vmem %s0, %s250
        $region40: #{tpu_custom_call.1} parent=35 // pred_fallthru
          _
      $region36: #{tpu_custom_call.1} parent=5 // pred_fallthru
        _
      %p252 = scmp.le.s32.totalorder 1, %s15
      %p253 = scmp.lt.s32.totalorder %s15, 4
      %p254 = pnand %p252, %p253
      %p255 = pneg %p254
      // Predicated region
      $region41: #{tpu_custom_call.1} parent=5 // pred_check
        _
      $region42: #{tpu_custom_call.1} parent=5 // pred_check_branch
        %257 = sbr.rel (%p254) target = $region44
      $region43: #{tpu_custom_call.1} parent=5 // pred_region
        %s258 = ssub.s32 %s15, 1
        // Predicated region
        $region45: #{tpu_custom_call.1} parent=43 // pred_check
          %p259 = pneg %p97
        $region46: #{tpu_custom_call.1} parent=43 // pred_check_branch
          %261 = sbr.rel (%p259) target = $region48
        $region47: #{tpu_custom_call.1} parent=43 // pred_region
          %262 = dma.done [#allocation6], 4096
        $region48: #{tpu_custom_call.1} parent=43 // pred_fallthru
          _
        // Predicated region
        $region49: #{tpu_custom_call.1} parent=43 // pred_check
          %p263 = pneg %p139
        $region50: #{tpu_custom_call.1} parent=43 // pred_check_branch
          %265 = sbr.rel (%p263) target = $region52
        $region51: #{tpu_custom_call.1} parent=43 // pred_region
          %266 = dma.done [#allocation9], 2048
        $region52: #{tpu_custom_call.1} parent=43 // pred_fallthru
          _
        %p267 = scmp.lt.s32.totalorder %s24, 0
        %s268 = scalar_select %p267, %s24, 0
        %p269 = scmp.lt.s32.totalorder %s25, 2
        %s270 = scalar_select %p269, %s25, 2
        %s271 = smul.addr %s270, 6
        %s272 = smul.addr %s268, 18
        %s273 = sadd.s32 %s271, %s272
        %s274 = smul.addr %s273, 4
        %s275 = scalar_lea.vmem %s0, %s274
        %p276 = pneg %p55
        %p277 = pneg %p52
        %p278 = pneg %p76
        %p279 = pneg %p73
        %p280 = pneg %p97
        %p281 = pneg %p94
        %p282 = pneg %p118
        %p283 = pneg %p115
        %p284 = pneg %p139
        %p285 = pneg %p136
        %p286 = pneg %p160
        %p287 = pneg %p157
        %p288 = pneg %p186
        %p289 = pneg %p183
        %p290 = scmp.lt.s32.totalorder %s24, 0
        %s291 = scalar_select %p290, %s24, 0
        %p292 = scmp.lt.s32.totalorder %s25, 2
        %s293 = scalar_select %p292, %s25, 2
        %s294 = smul.addr %s293, 6
        %s295 = smul.addr %s291, 18
        %s296 = sadd.s32 %s294, %s295
        %s297 = smul.addr %s296, 4
        %s298 = scalar_lea.vmem %s0, %s297
        %s299 = smul.u32 2, %s24
        %p301 = scmp.eq.s32.totalorder %s25, 0
        // Predicated region
        $region53: #{tpu_custom_call.1} parent=43 // pred_check
          %p302 = pneg %p301
        $region54: #{tpu_custom_call.1} parent=43 // pred_check_branch
          %304 = sbr.rel (%p302) target = $region56
        $region55: #{tpu_custom_call.1} parent=43 // pred_region
          %305 = vst [vmem:[#allocation2] sm:$0xff] 0.0
          %306 = vst [vmem:[#allocation2 + $0x8] sm:$0xff] 0.0
          %307 = vst [vmem:[#allocation3] sm:$0xff] 0.0
          %308 = vst [vmem:[#allocation3 + $0x8] sm:$0xff] 0.0
        $region56: #{tpu_custom_call.1} parent=43 // pred_fallthru
          _
        %v309 = vld [vmem:[%s298] sm:$0xf]
        %v310 = vld [vmem:[%s298 + $0x4] sm:$0xf]
        %v311 = vld [vmem:[%s298 + $0x8] sm:$0xf]
        %v312 = vld [vmem:[%s298 + $0xc] sm:$0xf]
        %v313 = vld [vmem:[%s298 + $0x10] sm:$0xf]
        %v314 = vld [vmem:[%s298 + $0x14] sm:$0xf]
        %v315 = vld [vmem:[%s1] sm:$0xff]
        %v316 = vld [vmem:[%s1 + $0x8] sm:$0xff]
        %v317 = vld [vmem:[%s1 + $0x10] sm:$0xff]
        %v318 = vld [vmem:[%s1 + $0x18] sm:$0xff]
        %v319 = vld [vmem:[%s3] sm:$0xf]
        %v321 = vlaneseq
        %v322 = vshrl.u32 %v321, 7
        %v323 = vsub.s32 0, %v322
        %v324 = vrot.slane %v319, %v323
        %v325 = vlaneseq
        %v326 = vshrl.u32 %v325, 7
        %v327 = vsub.s32 1, %v326
        %v328 = vrot.slane %v319, %v327
        %v329 = vlaneseq
        %v330 = vshrl.u32 %v329, 7
        %v331 = vsub.s32 2, %v330
        %v332 = vrot.slane %v319, %v331
        %v333 = vlaneseq
        %v334 = vshrl.u32 %v333, 7
        %v335 = vsub.s32 3, %v334
        %v336 = vrot.slane %v319, %v335
        %v347 = vunpack.c.l.b16 %v309
        %v348 = vunpack.c.l.b16 %v310
        %v349 = vunpack.c.l.b16 %v311
        %v350 = vunpack.c.l.b16 %v312
        %v351 = vunpack.c.l.b16 %v313
        %v352 = vunpack.c.l.b16 %v314
        %v353 = vpack.c.b16 %v348, %v347
        %v354 = vpack.c.b16 %v350, %v349
        %v355 = vpack.c.b16 %v352, %v351
        %v360 = vunpack.c.l.b16 %v315
        %v361 = vunpack.c.h.b16 %v315
        %v362 = vunpack.c.l.b16 %v316
        %v363 = vunpack.c.h.b16 %v316
        %v364 = vunpack.c.l.b16 %v317
        %v365 = vunpack.c.h.b16 %v317
        %v366 = vunpack.c.l.b16 %v318
        %v367 = vunpack.c.h.b16 %v318
        %v368 = vpack.c.b16 %v364, %v360
        %v369 = vpack.c.b16 %v365, %v361
        %v370 = vpack.c.b16 %v366, %v362
        %v371 = vpack.c.b16 %v367, %v363
        %vm376 = vcmask 130048
        %v378 = vsel %vm376, %v353, 0
        %v381 = vsel %vm376, %v354, 0
        %v384 = vsel %vm376, %v355, 0
        %386 = vmatprep.subr.bf16.mxu0 %v369
        %387 = vmatpush1.bf16.msra.mxu0 %v368
        %388 = vmatprep.subr.bf16.mxu0 0
        %389 = vmatpush1.bf16.msra.mxu0 0
        %390 = vmatprep.subr.bf16.mxu0 0
        %391 = vmatpush1.bf16.msra.mxu0 0
        %392 = vmatprep.subr.bf16.mxu0 0
        %393 = vmatpush1.bf16.msra.mxu0 0
        %394 = vmatprep.subr.bf16.mxu0 0
        %395 = vmatpush1.bf16.msra.mxu0 0
        %396 = vmatprep.subr.bf16.mxu0 0
        %397 = vmatpush1.bf16.msra.mxu0 0
        %398 = vmatprep.subr.bf16.mxu0 0
        %399 = vmatpush1.bf16.msra.mxu0 0
        %400 = vmatprep.subr.bf16.mxu0 0
        %401 = vmatpush1.bf16.msra.mxu0 0
        %402 = vmatprep.subr.bf16.mxu0 0
        %403 = vmatpush1.bf16.msra.mxu0 0
        %404 = vmatprep.subr.bf16.mxu0 0
        %405 = vmatpush1.bf16.msra.mxu0 0
        %406 = vmatprep.subr.bf16.mxu0 0
        %407 = vmatpush1.bf16.msra.mxu0 0
        %408 = vmatprep.subr.bf16.mxu0 0
        %409 = vmatpush1.bf16.msra.mxu0 0
        %410 = vmatprep.subr.bf16.mxu0 0
        %411 = vmatpush1.bf16.msra.mxu0 0
        %412 = vmatprep.subr.bf16.mxu0 0
        %413 = vmatpush1.bf16.msra.mxu0 0
        %414 = vmatprep.subr.bf16.mxu0 0
        %415 = vmatpush1.bf16.msra.mxu0 0
        %416 = vmatprep.subr.bf16.mxu0 0
        %417 = vmatpush1.bf16.msra.mxu0 0
        %418 = vmatprep.mubr.bf16.mxu0 0
        %419 = vmatmul.mubr.bf16.gmra.mrb[0].mxu0 %v378
        %v420 = vpop.f32.mrb[0].mxu0
        %v421 = vadd.f32 %v324, %v420
        %v422 = vpop.f32.mrb[0].mxu0
        %v423 = vadd.f32 %v328, %v422
        %v424 = vpop.f32.mrb[0].mxu0
        %v425 = vadd.f32 %v324, %v424
        %v426 = vpop.f32.mrb[0].mxu0
        %v427 = vadd.f32 %v328, %v426
        %428 = vmatprep.mubr.bf16.mxu0 0
        %429 = vmatmul.mubr.bf16.gmra.mrb[0].mxu0 %v381
        %v430 = vpop.f32.mrb[0].mxu0
        %v431 = vadd.f32 %v324, %v430
        %v432 = vpop.f32.mrb[0].mxu0
        %v433 = vadd.f32 %v328, %v432
        %v434 = vpop.f32.mrb[0].mxu0
        %v435 = vadd.f32 %v324, %v434
        %v436 = vpop.f32.mrb[0].mxu0
        %v437 = vadd.f32 %v328, %v436
        %438 = vmatprep.mubr.bf16.mxu0 0
        %439 = vmatmul.mubr.bf16.gmra.mrb[0].mxu0 %v384
        %v440 = vpop.f32.mrb[0].mxu0
        %v441 = vadd.f32 %v324, %v440
        %v442 = vpop.f32.mrb[0].mxu0
        %v443 = vadd.f32 %v328, %v442
        %v444 = vpop.f32.mrb[0].mxu0
        %v445 = vadd.f32 %v324, %v444
        %v446 = vpop.f32.mrb[0].mxu0
        %v447 = vadd.f32 %v328, %v446
        %448 = vdwg.mxu0
        %449 = vmatprep.subr.bf16.mxu0 %v371
        %450 = vmatpush1.bf16.msra.mxu0 %v370
        %451 = vmatprep.subr.bf16.mxu0 0
        %452 = vmatpush1.bf16.msra.mxu0 0
        %453 = vmatprep.subr.bf16.mxu0 0
        %454 = vmatpush1.bf16.msra.mxu0 0
        %455 = vmatprep.subr.bf16.mxu0 0
        %456 = vmatpush1.bf16.msra.mxu0 0
        %457 = vmatprep.subr.bf16.mxu0 0
        %458 = vmatpush1.bf16.msra.mxu0 0
        %459 = vmatprep.subr.bf16.mxu0 0
        %460 = vmatpush1.bf16.msra.mxu0 0
        %461 = vmatprep.subr.bf16.mxu0 0
        %462 = vmatpush1.bf16.msra.mxu0 0
        %463 = vmatprep.subr.bf16.mxu0 0
        %464 = vmatpush1.bf16.msra.mxu0 0
        %465 = vmatprep.subr.bf16.mxu0 0
        %466 = vmatpush1.bf16.msra.mxu0 0
        %467 = vmatprep.subr.bf16.mxu0 0
        %468 = vmatpush1.bf16.msra.mxu0 0
        %469 = vmatprep.subr.bf16.mxu0 0
        %470 = vmatpush1.bf16.msra.mxu0 0
        %471 = vmatprep.subr.bf16.mxu0 0
        %472 = vmatpush1.bf16.msra.mxu0 0
        %473 = vmatprep.subr.bf16.mxu0 0
        %474 = vmatpush1.bf16.msra.mxu0 0
        %475 = vmatprep.subr.bf16.mxu0 0
        %476 = vmatpush1.bf16.msra.mxu0 0
        %477 = vmatprep.subr.bf16.mxu0 0
        %478 = vmatpush1.bf16.msra.mxu0 0
        %479 = vmatprep.subr.bf16.mxu0 0
        %480 = vmatpush1.bf16.msra.mxu0 0
        %481 = vmatprep.mubr.bf16.mxu0 0
        %482 = vmatmul.mubr.bf16.gmra.mrb[0].mxu0 %v378
        %v483 = vpop.f32.mrb[0].mxu0
        %v484 = vadd.f32 %v332, %v483
        %v485 = vpop.f32.mrb[0].mxu0
        %v486 = vadd.f32 %v336, %v485
        %v487 = vpop.f32.mrb[0].mxu0
        %v488 = vadd.f32 %v332, %v487
        %v489 = vpop.f32.mrb[0].mxu0
        %v490 = vadd.f32 %v336, %v489
        %491 = vmatprep.mubr.bf16.mxu0 0
        %492 = vmatmul.mubr.bf16.gmra.mrb[0].mxu0 %v381
        %v493 = vpop.f32.mrb[0].mxu0
        %v494 = vadd.f32 %v332, %v493
        %v495 = vpop.f32.mrb[0].mxu0
        %v496 = vadd.f32 %v336, %v495
        %v497 = vpop.f32.mrb[0].mxu0
        %v498 = vadd.f32 %v332, %v497
        %v499 = vpop.f32.mrb[0].mxu0
        %v500 = vadd.f32 %v336, %v499
        %501 = vmatprep.mubr.bf16.mxu0 0
        %502 = vmatmul.mubr.bf16.gmra.mrb[0].mxu0 %v384
        %v503 = vpop.f32.mrb[0].mxu0
        %v504 = vadd.f32 %v332, %v503
        %v505 = vpop.f32.mrb[0].mxu0
        %v506 = vadd.f32 %v336, %v505
        %v507 = vpop.f32.mrb[0].mxu0
        %v508 = vadd.f32 %v332, %v507
        %v509 = vpop.f32.mrb[0].mxu0
        %v510 = vadd.f32 %v336, %v509
        %511 = vdwg.mxu0
        %512 = vst [vmem:[#allocation4] sm:$0xff] %v421
        %513 = vst [vmem:[#allocation4 + $0x8] sm:$0xff] %v423
        %514 = vst [vmem:[#allocation4 + $0x10] sm:$0xff] %v484
        %515 = vst [vmem:[#allocation4 + $0x18] sm:$0xff] %v486
        %516 = vst [vmem:[#allocation4 + $0x20] sm:$0xff] %v425
        %517 = vst [vmem:[#allocation4 + $0x28] sm:$0xff] %v427
        %518 = vst [vmem:[#allocation4 + $0x30] sm:$0xff] %v488
        %519 = vst [vmem:[#allocation4 + $0x38] sm:$0xff] %v490
        %520 = vst [vmem:[#allocation4 + $0x40] sm:$0xff] %v431
        %521 = vst [vmem:[#allocation4 + $0x48] sm:$0xff] %v433
        %522 = vst [vmem:[#allocation4 + $0x50] sm:$0xff] %v494
        %523 = vst [vmem:[#allocation4 + $0x58] sm:$0xff] %v496
        %524 = vst [vmem:[#allocation4 + $0x60] sm:$0xff] %v435
        %525 = vst [vmem:[#allocation4 + $0x68] sm:$0xff] %v437
        %526 = vst [vmem:[#allocation4 + $0x70] sm:$0xff] %v498
        %527 = vst [vmem:[#allocation4 + $0x78] sm:$0xff] %v500
        %528 = vst [vmem:[#allocation4 + $0x80] sm:$0xff] %v441
        %529 = vst [vmem:[#allocation4 + $0x88] sm:$0xff] %v443
        %530 = vst [vmem:[#allocation4 + $0x90] sm:$0xff] %v504
        %531 = vst [vmem:[#allocation4 + $0x98] sm:$0xff] %v506
        %532 = vst [vmem:[#allocation4 + $0xa0] sm:$0xff] %v445
        %533 = vst [vmem:[#allocation4 + $0xa8] sm:$0xff] %v447
        %534 = vst [vmem:[#allocation4 + $0xb0] sm:$0xff] %v508
        %535 = vst [vmem:[#allocation4 + $0xb8] sm:$0xff] %v510
        %v536 = vld [vmem:[#allocation5] sm:$0xff]
        %v537 = vld [vmem:[#allocation5 + $0x8] sm:$0xff]
        %v538 = vld [vmem:[#allocation5 + $0x10] sm:$0xff]
        %v539 = vld [vmem:[#allocation5 + $0x18] sm:$0xff]
        %v540 = vld [vmem:[#allocation5 + $0x20] sm:$0xff]
        %v541 = vld [vmem:[#allocation5 + $0x28] sm:$0xff]
        %v542 = vld [vmem:[#allocation5 + $0x30] sm:$0xff]
        %v543 = vld [vmem:[#allocation5 + $0x38] sm:$0xff]
        %v544 = vld [vmem:[#allocation5 + $0x40] sm:$0xff]
        %v545 = vld [vmem:[#allocation5 + $0x48] sm:$0xff]
        %v546 = vld [vmem:[#allocation5 + $0x50] sm:$0xff]
        %v547 = vld [vmem:[#allocation5 + $0x58] sm:$0xff]
        %v548 = vld [vmem:[#allocation5 + $0x60] sm:$0xff]
        %v549 = vld [vmem:[#allocation5 + $0x68] sm:$0xff]
        %v550 = vld [vmem:[#allocation5 + $0x70] sm:$0xff]
        %v551 = vld [vmem:[#allocation5 + $0x78] sm:$0xff]
        %v552 = vld [vmem:[#allocation5 + $0x80] sm:$0xff]
        %v553 = vld [vmem:[#allocation5 + $0x88] sm:$0xff]
        %v554 = vld [vmem:[#allocation5 + $0x90] sm:$0xff]
        %v555 = vld [vmem:[#allocation5 + $0x98] sm:$0xff]
        %v556 = vld [vmem:[#allocation5 + $0xa0] sm:$0xff]
        %v557 = vld [vmem:[#allocation5 + $0xa8] sm:$0xff]
        %v558 = vld [vmem:[#allocation5 + $0xb0] sm:$0xff]
        %v559 = vld [vmem:[#allocation5 + $0xb8] sm:$0xff]
        %v560 = vld [vmem:[#allocation5 + $0xc0] sm:$0xff]
        %v561 = vld [vmem:[#allocation5 + $0xc8] sm:$0xff]
        %v562 = vld [vmem:[#allocation5 + $0xd0] sm:$0xff]
        %v563 = vld [vmem:[#allocation5 + $0xd8] sm:$0xff]
        %v564 = vld [vmem:[#allocation5 + $0xe0] sm:$0xff]
        %v565 = vld [vmem:[#allocation5 + $0xe8] sm:$0xff]
        %v566 = vld [vmem:[#allocation5 + $0xf0] sm:$0xff]
        %v567 = vld [vmem:[#allocation5 + $0xf8] sm:$0xff]
        %v568 = vld [vmem:[#allocation2] sm:$0xff]
        %v569 = vld [vmem:[#allocation2 + $0x8] sm:$0xff]
        %v570 = vld [vmem:[#allocation3] sm:$0xff]
        %v571 = vld [vmem:[#allocation3 + $0x8] sm:$0xff]
        %s572 = smul.u32 0, 4
        %s573 = smul.addr %s572, 8
        %s574 = scalar_lea.vmem [#allocation4], %s573
        %v575 = vld [vmem:[%s574] sm:$0xff]
        %v576 = vld [vmem:[%s574 + $0x8] sm:$0xff]
        %v577 = vld [vmem:[%s574 + $0x10] sm:$0xff]
        %v578 = vld [vmem:[%s574 + $0x18] sm:$0xff]
        %v579 = vld [vmem:[%s574 + $0x20] sm:$0xff]
        %v580 = vld [vmem:[%s574 + $0x28] sm:$0xff]
        %v581 = vld [vmem:[%s574 + $0x30] sm:$0xff]
        %v582 = vld [vmem:[%s574 + $0x38] sm:$0xff]
        %v583 = vpack.c.bf16 %v569, %v568
        %v616 = vunpack.c.l.b16 %v536
        %v617 = vunpack.c.h.b16 %v536
        %v618 = vunpack.c.l.b16 %v537
        %v619 = vunpack.c.h.b16 %v537
        %v620 = vunpack.c.l.b16 %v538
        %v621 = vunpack.c.h.b16 %v538
        %v622 = vunpack.c.l.b16 %v539
        %v623 = vunpack.c.h.b16 %v539
        %v624 = vunpack.c.l.b16 %v540
        %v625 = vunpack.c.h.b16 %v540
        %v626 = vunpack.c.l.b16 %v541
        %v627 = vunpack.c.h.b16 %v541
        %v628 = vunpack.c.l.b16 %v542
        %v629 = vunpack.c.h.b16 %v542
        %v630 = vunpack.c.l.b16 %v543
        %v631 = vunpack.c.h.b16 %v543
        %v632 = vunpack.c.l.b16 %v544
        %v633 = vunpack.c.h.b16 %v544
        %v634 = vunpack.c.l.b16 %v545
        %v635 = vunpack.c.h.b16 %v545
        %v636 = vunpack.c.l.b16 %v546
        %v637 = vunpack.c.h.b16 %v546
        %v638 = vunpack.c.l.b16 %v547
        %v639 = vunpack.c.h.b16 %v547
        %v640 = vunpack.c.l.b16 %v548
        %v641 = vunpack.c.h.b16 %v548
        %v642 = vunpack.c.l.b16 %v549
        %v643 = vunpack.c.h.b16 %v549
        %v644 = vunpack.c.l.b16 %v550
        %v645 = vunpack.c.h.b16 %v550
        %v646 = vunpack.c.l.b16 %v551
        %v647 = vunpack.c.h.b16 %v551
        %v648 = vunpack.c.l.b16 %v552
        %v649 = vunpack.c.h.b16 %v552
        %v650 = vunpack.c.l.b16 %v553
        %v651 = vunpack.c.h.b16 %v553
        %v652 = vunpack.c.l.b16 %v554
        %v653 = vunpack.c.h.b16 %v554
        %v654 = vunpack.c.l.b16 %v555
        %v655 = vunpack.c.h.b16 %v555
        %v656 = vunpack.c.l.b16 %v556
        %v657 = vunpack.c.h.b16 %v556
        %v658 = vunpack.c.l.b16 %v557
        %v659 = vunpack.c.h.b16 %v557
        %v660 = vunpack.c.l.b16 %v558
        %v661 = vunpack.c.h.b16 %v558
        %v662 = vunpack.c.l.b16 %v559
        %v663 = vunpack.c.h.b16 %v559
        %v664 = vunpack.c.l.b16 %v560
        %v665 = vunpack.c.h.b16 %v560
        %v666 = vunpack.c.l.b16 %v561
        %v667 = vunpack.c.h.b16 %v561
        %v668 = vunpack.c.l.b16 %v562
        %v669 = vunpack.c.h.b16 %v562
        %v670 = vunpack.c.l.b16 %v563
        %v671 = vunpack.c.h.b16 %v563
        %v672 = vunpack.c.l.b16 %v564
        %v673 = vunpack.c.h.b16 %v564
        %v674 = vunpack.c.l.b16 %v565
        %v675 = vunpack.c.h.b16 %v565
        %v676 = vunpack.c.l.b16 %v566
        %v677 = vunpack.c.h.b16 %v566
        %v678 = vunpack.c.l.b16 %v567
        %v679 = vunpack.c.h.b16 %v567
        %v680 = vpack.c.b16 %v620, %v616
        %v681 = vpack.c.b16 %v621, %v617
        %v682 = vpack.c.b16 %v622, %v618
        %v683 = vpack.c.b16 %v623, %v619
        %v684 = vpack.c.b16 %v628, %v624
        %v685 = vpack.c.b16 %v629, %v625
        %v686 = vpack.c.b16 %v630, %v626
        %v687 = vpack.c.b16 %v631, %v627
        %v688 = vpack.c.b16 %v636, %v632
        %v689 = vpack.c.b16 %v637, %v633
        %v690 = vpack.c.b16 %v638, %v634
        %v691 = vpack.c.b16 %v639, %v635
        %v692 = vpack.c.b16 %v644, %v640
        %v693 = vpack.c.b16 %v645, %v641
        %v694 = vpack.c.b16 %v646, %v642
        %v695 = vpack.c.b16 %v647, %v643
        %v696 = vpack.c.b16 %v652, %v648
        %v697 = vpack.c.b16 %v653, %v649
        %v698 = vpack.c.b16 %v654, %v650
        %v699 = vpack.c.b16 %v655, %v651
        %v700 = vpack.c.b16 %v660, %v656
        %v701 = vpack.c.b16 %v661, %v657
        %v702 = vpack.c.b16 %v662, %v658
        %v703 = vpack.c.b16 %v663, %v659
        %v704 = vpack.c.b16 %v668, %v664
        %v705 = vpack.c.b16 %v669, %v665
        %v706 = vpack.c.b16 %v670, %v666
        %v707 = vpack.c.b16 %v671, %v667
        %v708 = vpack.c.b16 %v676, %v672
        %v709 = vpack.c.b16 %v677, %v673
        %v710 = vpack.c.b16 %v678, %v674
        %v711 = vpack.c.b16 %v679, %v675
        %744 = vmatprep.subr.bf16.mxu0 %v681
        %745 = vmatpush1.bf16.msra.mxu0 %v680
        %746 = vmatprep.subr.bf16.mxu0 %v685
        %747 = vmatpush1.bf16.msra.mxu0 %v684
        %748 = vmatprep.subr.bf16.mxu0 %v689
        %749 = vmatpush1.bf16.msra.mxu0 %v688
        %750 = vmatprep.subr.bf16.mxu0 %v693
        %751 = vmatpush1.bf16.msra.mxu0 %v692
        %752 = vmatprep.subr.bf16.mxu0 %v697
        %753 = vmatpush1.bf16.msra.mxu0 %v696
        %754 = vmatprep.subr.bf16.mxu0 %v701
        %755 = vmatpush1.bf16.msra.mxu0 %v700
        %756 = vmatprep.subr.bf16.mxu0 %v705
        %757 = vmatpush1.bf16.msra.mxu0 %v704
        %758 = vmatprep.subr.bf16.mxu0 %v709
        %759 = vmatpush1.bf16.msra.mxu0 %v708
        %760 = vmatprep.subr.bf16.mxu0 0
        %761 = vmatpush1.bf16.msra.mxu0 0
        %762 = vmatprep.subr.bf16.mxu0 0
        %763 = vmatpush1.bf16.msra.mxu0 0
        %764 = vmatprep.subr.bf16.mxu0 0
        %765 = vmatpush1.bf16.msra.mxu0 0
        %766 = vmatprep.subr.bf16.mxu0 0
        %767 = vmatpush1.bf16.msra.mxu0 0
        %768 = vmatprep.subr.bf16.mxu0 0
        %769 = vmatpush1.bf16.msra.mxu0 0
        %770 = vmatprep.subr.bf16.mxu0 0
        %771 = vmatpush1.bf16.msra.mxu0 0
        %772 = vmatprep.subr.bf16.mxu0 0
        %773 = vmatpush1.bf16.msra.mxu0 0
        %774 = vmatprep.subr.bf16.mxu0 0
        %775 = vmatpush1.bf16.msra.mxu0 0
        %776 = vmatprep.mubr.bf16.mxu0 0
        %777 = vmatmul.mubr.bf16.gmra.mrb[0].mxu0 %v583
        %v778 = vpop.f32.mrb[0].mxu0
        %v779 = vadd.f32 0.0, %v778
        %v780 = vpop.f32.mrb[0].mxu0
        %v781 = vadd.f32 0.0, %v780
        %v782 = vpop.f32.mrb[0].mxu0
        %v783 = vadd.f32 0.0, %v782
        %v784 = vpop.f32.mrb[0].mxu0
        %v785 = vadd.f32 0.0, %v784
        %786 = vdwg.mxu0
        %787 = vmatprep.subr.bf16.mxu0 %v683
        %788 = vmatpush1.bf16.msra.mxu0 %v682
        %789 = vmatprep.subr.bf16.mxu0 %v687
        %790 = vmatpush1.bf16.msra.mxu0 %v686
        %791 = vmatprep.subr.bf16.mxu0 %v691
        %792 = vmatpush1.bf16.msra.mxu0 %v690
        %793 = vmatprep.subr.bf16.mxu0 %v695
        %794 = vmatpush1.bf16.msra.mxu0 %v694
        %795 = vmatprep.subr.bf16.mxu0 %v699
        %796 = vmatpush1.bf16.msra.mxu0 %v698
        %797 = vmatprep.subr.bf16.mxu0 %v703
        %798 = vmatpush1.bf16.msra.mxu0 %v702
        %799 = vmatprep.subr.bf16.mxu0 %v707
        %800 = vmatpush1.bf16.msra.mxu0 %v706
        %801 = vmatprep.subr.bf16.mxu0 %v711
        %802 = vmatpush1.bf16.msra.mxu0 %v710
        %803 = vmatprep.subr.bf16.mxu0 0
        %804 = vmatpush1.bf16.msra.mxu0 0
        %805 = vmatprep.subr.bf16.mxu0 0
        %806 = vmatpush1.bf16.msra.mxu0 0
        %807 = vmatprep.subr.bf16.mxu0 0
        %808 = vmatpush1.bf16.msra.mxu0 0
        %809 = vmatprep.subr.bf16.mxu0 0
        %810 = vmatpush1.bf16.msra.mxu0 0
        %811 = vmatprep.subr.bf16.mxu0 0
        %812 = vmatpush1.bf16.msra.mxu0 0
        %813 = vmatprep.subr.bf16.mxu0 0
        %814 = vmatpush1.bf16.msra.mxu0 0
        %815 = vmatprep.subr.bf16.mxu0 0
        %816 = vmatpush1.bf16.msra.mxu0 0
        %817 = vmatprep.subr.bf16.mxu0 0
        %818 = vmatpush1.bf16.msra.mxu0 0
        %819 = vmatprep.mubr.bf16.mxu0 0
        %820 = vmatmul.mubr.bf16.gmra.mrb[0].mxu0 %v583
        %v821 = vpop.f32.mrb[0].mxu0
        %v822 = vadd.f32 0.0, %v821
        %v823 = vpop.f32.mrb[0].mxu0
        %v824 = vadd.f32 0.0, %v823
        %v825 = vpop.f32.mrb[0].mxu0
        %v826 = vadd.f32 0.0, %v825
        %v827 = vpop.f32.mrb[0].mxu0
        %v828 = vadd.f32 0.0, %v827
        %829 = vdwg.mxu0
        %v830 = vadd.f32 %v575, %v779
        %v831 = vadd.f32 %v576, %v781
        %v832 = vadd.f32 %v577, %v822
        %v833 = vadd.f32 %v578, %v824
        %v834 = vadd.f32 %v579, %v783
        %v835 = vadd.f32 %v580, %v785
        %v836 = vadd.f32 %v581, %v826
        %v837 = vadd.f32 %v582, %v828
        %v838 = vmul.f32 %v830, 0.5
        %v839 = vmul.f32 %v834, 0.5
        %v840 = vtanh.pop %v838
        %v841 = vtanh.pop %v839
        %v842 = vadd.f32 %v840, 1.0
        %v843 = vadd.f32 %v841, 1.0
        %v844 = vmul.f32 %v842, 0.5
        %v845 = vmul.f32 %v843, 0.5
        %v846 = vmul.f32 %v831, 0.5
        %v847 = vmul.f32 %v835, 0.5
        %v848 = vtanh.pop %v846
        %v849 = vtanh.pop %v847
        %v850 = vadd.f32 %v848, 1.0
        %v851 = vadd.f32 %v849, 1.0
        %v852 = vmul.f32 %v850, 0.5
        %v853 = vmul.f32 %v851, 0.5
        %v854 = vtanh.pop %v832
        %v855 = vtanh.pop %v836
        %v856 = vmul.f32 %v833, 0.5
        %v857 = vmul.f32 %v837, 0.5
        %v858 = vtanh.pop %v856
        %v859 = vtanh.pop %v857
        %v860 = vadd.f32 %v858, 1.0
        %v861 = vadd.f32 %v859, 1.0
        %v862 = vmul.f32 %v860, 0.5
        %v863 = vmul.f32 %v861, 0.5
        %v864 = vmul.f32 %v852, %v570
        %v865 = vmul.f32 %v853, %v571
        %v866 = vmul.f32 %v844, %v854
        %v867 = vmul.f32 %v845, %v855
        %v868 = vadd.f32 %v864, %v866
        %v869 = vadd.f32 %v865, %v867
        %v870 = vtanh.pop %v868
        %v871 = vtanh.pop %v869
        %v872 = vmul.f32 %v862, %v870
        %v873 = vmul.f32 %v863, %v871
        %s874 = smul.u32 %s25, 3
        %p875 = scmp.lt.s32.totalorder %s874, 8
        %s876 = scalar_select %p875, 1, 0
        %v877 = vstv %s876
        %vm878 = vcmp.eq.s32.totalorder %v877, 1
        %v879 = vsel %vm878, %v872, %v568
        %v880 = vsel %vm878, %v873, %v569
        %v881 = vsel %vm878, %v868, %v570
        %v882 = vsel %vm878, %v869, %v571
        %s883 = smul.u32 2, 4
        %s884 = smul.addr %s883, 8
        %s885 = scalar_lea.vmem [#allocation4], %s884
        %v886 = vld [vmem:[%s885] sm:$0xff]
        %v887 = vld [vmem:[%s885 + $0x8] sm:$0xff]
        %v888 = vld [vmem:[%s885 + $0x10] sm:$0xff]
        %v889 = vld [vmem:[%s885 + $0x18] sm:$0xff]
        %v890 = vld [vmem:[%s885 + $0x20] sm:$0xff]
        %v891 = vld [vmem:[%s885 + $0x28] sm:$0xff]
        %v892 = vld [vmem:[%s885 + $0x30] sm:$0xff]
        %v893 = vld [vmem:[%s885 + $0x38] sm:$0xff]
        %v894 = vpack.c.bf16 %v880, %v879
        %895 = vmatprep.subr.bf16.mxu0 %v681
        %896 = vmatpush1.bf16.msra.mxu0 %v680
        %897 = vmatprep.subr.bf16.mxu0 %v685
        %898 = vmatpush1.bf16.msra.mxu0 %v684
        %899 = vmatprep.subr.bf16.mxu0 %v689
        %900 = vmatpush1.bf16.msra.mxu0 %v688
        %901 = vmatprep.subr.bf16.mxu0 %v693
        %902 = vmatpush1.bf16.msra.mxu0 %v692
        %903 = vmatprep.subr.bf16.mxu0 %v697
        %904 = vmatpush1.bf16.msra.mxu0 %v696
        %905 = vmatprep.subr.bf16.mxu0 %v701
        %906 = vmatpush1.bf16.msra.mxu0 %v700
        %907 = vmatprep.subr.bf16.mxu0 %v705
        %908 = vmatpush1.bf16.msra.mxu0 %v704
        %909 = vmatprep.subr.bf16.mxu0 %v709
        %910 = vmatpush1.bf16.msra.mxu0 %v708
        %911 = vmatprep.subr.bf16.mxu0 0
        %912 = vmatpush1.bf16.msra.mxu0 0
        %913 = vmatprep.subr.bf16.mxu0 0
        %914 = vmatpush1.bf16.msra.mxu0 0
        %915 = vmatprep.subr.bf16.mxu0 0
        %916 = vmatpush1.bf16.msra.mxu0 0
        %917 = vmatprep.subr.bf16.mxu0 0
        %918 = vmatpush1.bf16.msra.mxu0 0
        %919 = vmatprep.subr.bf16.mxu0 0
        %920 = vmatpush1.bf16.msra.mxu0 0
        %921 = vmatprep.subr.bf16.mxu0 0
        %922 = vmatpush1.bf16.msra.mxu0 0
        %923 = vmatprep.subr.bf16.mxu0 0
        %924 = vmatpush1.bf16.msra.mxu0 0
        %925 = vmatprep.subr.bf16.mxu0 0
        %926 = vmatpush1.bf16.msra.mxu0 0
        %927 = vmatprep.mubr.bf16.mxu0 0
        %928 = vmatmul.mubr.bf16.gmra.mrb[0].mxu0 %v894
        %v929 = vpop.f32.mrb[0].mxu0
        %v930 = vadd.f32 0.0, %v929
        %v931 = vpop.f32.mrb[0].mxu0
        %v932 = vadd.f32 0.0, %v931
        %v933 = vpop.f32.mrb[0].mxu0
        %v934 = vadd.f32 0.0, %v933
        %v935 = vpop.f32.mrb[0].mxu0
        %v936 = vadd.f32 0.0, %v935
        %937 = vdwg.mxu0
        %938 = vmatprep.subr.bf16.mxu0 %v683
        %939 = vmatpush1.bf16.msra.mxu0 %v682
        %940 = vmatprep.subr.bf16.mxu0 %v687
        %941 = vmatpush1.bf16.msra.mxu0 %v686
        %942 = vmatprep.subr.bf16.mxu0 %v691
        %943 = vmatpush1.bf16.msra.mxu0 %v690
        %944 = vmatprep.subr.bf16.mxu0 %v695
        %945 = vmatpush1.bf16.msra.mxu0 %v694
        %946 = vmatprep.subr.bf16.mxu0 %v699
        %947 = vmatpush1.bf16.msra.mxu0 %v698
        %948 = vmatprep.subr.bf16.mxu0 %v703
        %949 = vmatpush1.bf16.msra.mxu0 %v702
        %950 = vmatprep.subr.bf16.mxu0 %v707
        %951 = vmatpush1.bf16.msra.mxu0 %v706
        %952 = vmatprep.subr.bf16.mxu0 %v711
        %953 = vmatpush1.bf16.msra.mxu0 %v710
        %954 = vmatprep.subr.bf16.mxu0 0
        %955 = vmatpush1.bf16.msra.mxu0 0
        %956 = vmatprep.subr.bf16.mxu0 0
        %957 = vmatpush1.bf16.msra.mxu0 0
        %958 = vmatprep.subr.bf16.mxu0 0
        %959 = vmatpush1.bf16.msra.mxu0 0
        %960 = vmatprep.subr.bf16.mxu0 0
        %961 = vmatpush1.bf16.msra.mxu0 0
        %962 = vmatprep.subr.bf16.mxu0 0
        %963 = vmatpush1.bf16.msra.mxu0 0
        %964 = vmatprep.subr.bf16.mxu0 0
        %965 = vmatpush1.bf16.msra.mxu0 0
        %966 = vmatprep.subr.bf16.mxu0 0
        %967 = vmatpush1.bf16.msra.mxu0 0
        %968 = vmatprep.subr.bf16.mxu0 0
        %969 = vmatpush1.bf16.msra.mxu0 0
        %970 = vmatprep.mubr.bf16.mxu0 0
        %971 = vmatmul.mubr.bf16.gmra.mrb[0].mxu0 %v894
        %v972 = vpop.f32.mrb[0].mxu0
        %v973 = vadd.f32 0.0, %v972
        %v974 = vpop.f32.mrb[0].mxu0
        %v975 = vadd.f32 0.0, %v974
        %v976 = vpop.f32.mrb[0].mxu0
        %v977 = vadd.f32 0.0, %v976
        %v978 = vpop.f32.mrb[0].mxu0
        %v979 = vadd.f32 0.0, %v978
        %980 = vdwg.mxu0
        %v981 = vadd.f32 %v886, %v930
        %v982 = vadd.f32 %v887, %v932
        %v983 = vadd.f32 %v888, %v973
        %v984 = vadd.f32 %v889, %v975
        %v985 = vadd.f32 %v890, %v934
        %v986 = vadd.f32 %v891, %v936
        %v987 = vadd.f32 %v892, %v977
        %v988 = vadd.f32 %v893, %v979
        %v989 = vmul.f32 %v981, 0.5
        %v990 = vmul.f32 %v985, 0.5
        %v991 = vtanh.pop %v989
        %v992 = vtanh.pop %v990
        %v993 = vadd.f32 %v991, 1.0
        %v994 = vadd.f32 %v992, 1.0
        %v995 = vmul.f32 %v993, 0.5
        %v996 = vmul.f32 %v994, 0.5
        %v997 = vmul.f32 %v982, 0.5
        %v998 = vmul.f32 %v986, 0.5
        %v999 = vtanh.pop %v997
        %v1000 = vtanh.pop %v998
        %v1001 = vadd.f32 %v999, 1.0
        %v1002 = vadd.f32 %v1000, 1.0
        %v1003 = vmul.f32 %v1001, 0.5
        %v1004 = vmul.f32 %v1002, 0.5
        %v1005 = vtanh.pop %v983
        %v1006 = vtanh.pop %v987
        %v1007 = vmul.f32 %v984, 0.5
        %v1008 = vmul.f32 %v988, 0.5
        %v1009 = vtanh.pop %v1007
        %v1010 = vtanh.pop %v1008
        %v1011 = vadd.f32 %v1009, 1.0
        %v1012 = vadd.f32 %v1010, 1.0
        %v1013 = vmul.f32 %v1011, 0.5
        %v1014 = vmul.f32 %v1012, 0.5
        %v1015 = vmul.f32 %v1003, %v881
        %v1016 = vmul.f32 %v1004, %v882
        %v1017 = vmul.f32 %v995, %v1005
        %v1018 = vmul.f32 %v996, %v1006
        %v1019 = vadd.f32 %v1015, %v1017
        %v1020 = vadd.f32 %v1016, %v1018
        %v1021 = vtanh.pop %v1019
        %v1022 = vtanh.pop %v1020
        %v1023 = vmul.f32 %v1013, %v1021
        %v1024 = vmul.f32 %v1014, %v1022
        %s1025 = sadd.s32 %s874, 1
        %p1026 = scmp.lt.s32.totalorder %s1025, 8
        %s1027 = scalar_select %p1026, 1, 0
        %v1028 = vstv %s1027
        %vm1029 = vcmp.eq.s32.totalorder %v1028, 1
        %v1030 = vsel %vm1029, %v1023, %v879
        %v1031 = vsel %vm1029, %v1024, %v880
        %v1032 = vsel %vm1029, %v1019, %v881
        %v1033 = vsel %vm1029, %v1020, %v882
        %s1034 = smul.u32 4, 4
        %s1035 = smul.addr %s1034, 8
        %s1036 = scalar_lea.vmem [#allocation4], %s1035
        %v1037 = vld [vmem:[%s1036] sm:$0xff]
        %v1038 = vld [vmem:[%s1036 + $0x8] sm:$0xff]
        %v1039 = vld [vmem:[%s1036 + $0x10] sm:$0xff]
        %v1040 = vld [vmem:[%s1036 + $0x18] sm:$0xff]
        %v1041 = vld [vmem:[%s1036 + $0x20] sm:$0xff]
        %v1042 = vld [vmem:[%s1036 + $0x28] sm:$0xff]
        %v1043 = vld [vmem:[%s1036 + $0x30] sm:$0xff]
        %v1044 = vld [vmem:[%s1036 + $0x38] sm:$0xff]
        %v1045 = vpack.c.bf16 %v1031, %v1030
        %1046 = vmatprep.subr.bf16.mxu0 %v681
        %1047 = vmatpush1.bf16.msra.mxu0 %v680
        %1048 = vmatprep.subr.bf16.mxu0 %v685
        %1049 = vmatpush1.bf16.msra.mxu0 %v684
        %1050 = vmatprep.subr.bf16.mxu0 %v689
        %1051 = vmatpush1.bf16.msra.mxu0 %v688
        %1052 = vmatprep.subr.bf16.mxu0 %v693
        %1053 = vmatpush1.bf16.msra.mxu0 %v692
        %1054 = vmatprep.subr.bf16.mxu0 %v697
        %1055 = vmatpush1.bf16.msra.mxu0 %v696
        %1056 = vmatprep.subr.bf16.mxu0 %v701
        %1057 = vmatpush1.bf16.msra.mxu0 %v700
        %1058 = vmatprep.subr.bf16.mxu0 %v705
        %1059 = vmatpush1.bf16.msra.mxu0 %v704
        %1060 = vmatprep.subr.bf16.mxu0 %v709
        %1061 = vmatpush1.bf16.msra.mxu0 %v708
        %1062 = vmatprep.subr.bf16.mxu0 0
        %1063 = vmatpush1.bf16.msra.mxu0 0
        %1064 = vmatprep.subr.bf16.mxu0 0
        %1065 = vmatpush1.bf16.msra.mxu0 0
        %1066 = vmatprep.subr.bf16.mxu0 0
        %1067 = vmatpush1.bf16.msra.mxu0 0
        %1068 = vmatprep.subr.bf16.mxu0 0
        %1069 = vmatpush1.bf16.msra.mxu0 0
        %1070 = vmatprep.subr.bf16.mxu0 0
        %1071 = vmatpush1.bf16.msra.mxu0 0
        %1072 = vmatprep.subr.bf16.mxu0 0
        %1073 = vmatpush1.bf16.msra.mxu0 0
        %1074 = vmatprep.subr.bf16.mxu0 0
        %1075 = vmatpush1.bf16.msra.mxu0 0
        %1076 = vmatprep.subr.bf16.mxu0 0
        %1077 = vmatpush1.bf16.msra.mxu0 0
        %1078 = vmatprep.mubr.bf16.mxu0 0
        %1079 = vmatmul.mubr.bf16.gmra.mrb[0].mxu0 %v1045
        %v1080 = vpop.f32.mrb[0].mxu0
        %v1081 = vadd.f32 0.0, %v1080
        %v1082 = vpop.f32.mrb[0].mxu0
        %v1083 = vadd.f32 0.0, %v1082
        %v1084 = vpop.f32.mrb[0].mxu0
        %v1085 = vadd.f32 0.0, %v1084
        %v1086 = vpop.f32.mrb[0].mxu0
        %v1087 = vadd.f32 0.0, %v1086
        %1088 = vdwg.mxu0
        %1089 = vmatprep.subr.bf16.mxu0 %v683
        %1090 = vmatpush1.bf16.msra.mxu0 %v682
        %1091 = vmatprep.subr.bf16.mxu0 %v687
        %1092 = vmatpush1.bf16.msra.mxu0 %v686
        %1093 = vmatprep.subr.bf16.mxu0 %v691
        %1094 = vmatpush1.bf16.msra.mxu0 %v690
        %1095 = vmatprep.subr.bf16.mxu0 %v695
        %1096 = vmatpush1.bf16.msra.mxu0 %v694
        %1097 = vmatprep.subr.bf16.mxu0 %v699
        %1098 = vmatpush1.bf16.msra.mxu0 %v698
        %1099 = vmatprep.subr.bf16.mxu0 %v703
        %1100 = vmatpush1.bf16.msra.mxu0 %v702
        %1101 = vmatprep.subr.bf16.mxu0 %v707
        %1102 = vmatpush1.bf16.msra.mxu0 %v706
        %1103 = vmatprep.subr.bf16.mxu0 %v711
        %1104 = vmatpush1.bf16.msra.mxu0 %v710
        %1105 = vmatprep.subr.bf16.mxu0 0
        %1106 = vmatpush1.bf16.msra.mxu0 0
        %1107 = vmatprep.subr.bf16.mxu0 0
        %1108 = vmatpush1.bf16.msra.mxu0 0
        %1109 = vmatprep.subr.bf16.mxu0 0
        %1110 = vmatpush1.bf16.msra.mxu0 0
        %1111 = vmatprep.subr.bf16.mxu0 0
        %1112 = vmatpush1.bf16.msra.mxu0 0
        %1113 = vmatprep.subr.bf16.mxu0 0
        %1114 = vmatpush1.bf16.msra.mxu0 0
        %1115 = vmatprep.subr.bf16.mxu0 0
        %1116 = vmatpush1.bf16.msra.mxu0 0
        %1117 = vmatprep.subr.bf16.mxu0 0
        %1118 = vmatpush1.bf16.msra.mxu0 0
        %1119 = vmatprep.subr.bf16.mxu0 0
        %1120 = vmatpush1.bf16.msra.mxu0 0
        %1121 = vmatprep.mubr.bf16.mxu0 0
        %1122 = vmatmul.mubr.bf16.gmra.mrb[0].mxu0 %v1045
        %v1123 = vpop.f32.mrb[0].mxu0
        %v1124 = vadd.f32 0.0, %v1123
        %v1125 = vpop.f32.mrb[0].mxu0
        %v1126 = vadd.f32 0.0, %v1125
        %v1127 = vpop.f32.mrb[0].mxu0
        %v1128 = vadd.f32 0.0, %v1127
        %v1129 = vpop.f32.mrb[0].mxu0
        %v1130 = vadd.f32 0.0, %v1129
        %1131 = vdwg.mxu0
        %v1132 = vadd.f32 %v1037, %v1081
        %v1133 = vadd.f32 %v1038, %v1083
        %v1134 = vadd.f32 %v1039, %v1124
        %v1135 = vadd.f32 %v1040, %v1126
        %v1136 = vadd.f32 %v1041, %v1085
        %v1137 = vadd.f32 %v1042, %v1087
        %v1138 = vadd.f32 %v1043, %v1128
        %v1139 = vadd.f32 %v1044, %v1130
        %v1140 = vmul.f32 %v1132, 0.5
        %v1141 = vmul.f32 %v1136, 0.5
        %v1142 = vtanh.pop %v1140
        %v1143 = vtanh.pop %v1141
        %v1144 = vadd.f32 %v1142, 1.0
        %v1145 = vadd.f32 %v1143, 1.0
        %v1146 = vmul.f32 %v1144, 0.5
        %v1147 = vmul.f32 %v1145, 0.5
        %v1148 = vmul.f32 %v1133, 0.5
        %v1149 = vmul.f32 %v1137, 0.5
        %v1150 = vtanh.pop %v1148
        %v1151 = vtanh.pop %v1149
        %v1152 = vadd.f32 %v1150, 1.0
        %v1153 = vadd.f32 %v1151, 1.0
        %v1154 = vmul.f32 %v1152, 0.5
        %v1155 = vmul.f32 %v1153, 0.5
        %v1156 = vtanh.pop %v1134
        %v1157 = vtanh.pop %v1138
        %v1158 = vmul.f32 %v1135, 0.5
        %v1159 = vmul.f32 %v1139, 0.5
        %v1160 = vtanh.pop %v1158
        %v1161 = vtanh.pop %v1159
        %v1162 = vadd.f32 %v1160, 1.0
        %v1163 = vadd.f32 %v1161, 1.0
        %v1164 = vmul.f32 %v1162, 0.5
        %v1165 = vmul.f32 %v1163, 0.5
        %v1166 = vmul.f32 %v1154, %v1032
        %v1167 = vmul.f32 %v1155, %v1033
        %v1168 = vmul.f32 %v1146, %v1156
        %v1169 = vmul.f32 %v1147, %v1157
        %v1170 = vadd.f32 %v1166, %v1168
        %v1171 = vadd.f32 %v1167, %v1169
        %v1172 = vtanh.pop %v1170
        %v1173 = vtanh.pop %v1171
        %v1174 = vmul.f32 %v1164, %v1172
        %v1175 = vmul.f32 %v1165, %v1173
        %s1176 = sadd.s32 %s874, 2
        %p1177 = scmp.lt.s32.totalorder %s1176, 8
        %s1178 = scalar_select %p1177, 1, 0
        %v1179 = vstv %s1178
        %vm1180 = vcmp.eq.s32.totalorder %v1179, 1
        %v1181 = vsel %vm1180, %v1174, %v1030
        %v1182 = vsel %vm1180, %v1175, %v1031
        %v1183 = vsel %vm1180, %v1170, %v1032
        %v1184 = vsel %vm1180, %v1171, %v1033
        %1185 = vst [vmem:[#allocation2] sm:$0xff] %v1181
        %1186 = vst [vmem:[#allocation2 + $0x8] sm:$0xff] %v1182
        %1187 = vst [vmem:[#allocation3] sm:$0xff] %v1183
        %1188 = vst [vmem:[#allocation3 + $0x8] sm:$0xff] %v1184
        %p1189 = scmp.eq.s32.totalorder %s25, 2
        // Predicated region
        $region57: #{tpu_custom_call.1} parent=43 // pred_check
          %p1190 = pneg %p1189
        $region58: #{tpu_custom_call.1} parent=43 // pred_check_branch
          %1192 = sbr.rel (%p1190) target = $region60
        $region59: #{tpu_custom_call.1} parent=43 // pred_region
          %v1193 = vld [vmem:[#allocation8] sm:$0xff]
          %v1194 = vld [vmem:[#allocation8 + $0x8] sm:$0xff]
          %v1195 = vld [vmem:[#allocation8 + $0x10] sm:$0xff]
          %v1196 = vld [vmem:[#allocation8 + $0x18] sm:$0xff]
          %v1197 = vld [vmem:[#allocation8 + $0x20] sm:$0xff]
          %v1198 = vld [vmem:[#allocation8 + $0x28] sm:$0xff]
          %v1199 = vld [vmem:[#allocation8 + $0x30] sm:$0xff]
          %v1200 = vld [vmem:[#allocation8 + $0x38] sm:$0xff]
          %v1201 = vld [vmem:[#allocation8 + $0x40] sm:$0xff]
          %v1202 = vld [vmem:[#allocation8 + $0x48] sm:$0xff]
          %v1203 = vld [vmem:[#allocation8 + $0x50] sm:$0xff]
          %v1204 = vld [vmem:[#allocation8 + $0x58] sm:$0xff]
          %v1205 = vld [vmem:[#allocation8 + $0x60] sm:$0xff]
          %v1206 = vld [vmem:[#allocation8 + $0x68] sm:$0xff]
          %v1207 = vld [vmem:[#allocation8 + $0x70] sm:$0xff]
          %v1208 = vld [vmem:[#allocation8 + $0x78] sm:$0xff]
          %v1209 = vld [vmem:[%s5] sm:$0x1]
          %v1211 = vlaneseq
          %v1212 = vshrl.u32 %v1211, 7
          %v1213 = vsub.s32 0, %v1212
          %v1214 = vrot.slane %v1209, %v1213
          %1216 = vmatprep.subr.mxu0 0.0
          %1217 = vmatpush1.msra.mxu0 %v1193
          %1218 = vmatprep.subr.mxu0 0.0
          %1219 = vmatpush1.msra.mxu0 %v1194
          %1220 = vmatprep.subr.mxu0 0.0
          %1221 = vmatpush1.msra.mxu0 %v1195
          %1222 = vmatprep.subr.mxu0 0.0
          %1223 = vmatpush1.msra.mxu0 %v1196
          %1224 = vmatprep.subr.mxu0 0.0
          %1225 = vmatpush1.msra.mxu0 %v1197
          %1226 = vmatprep.subr.mxu0 0.0
          %1227 = vmatpush1.msra.mxu0 %v1198
          %1228 = vmatprep.subr.mxu0 0.0
          %1229 = vmatpush1.msra.mxu0 %v1199
          %1230 = vmatprep.subr.mxu0 0.0
          %1231 = vmatpush1.msra.mxu0 %v1200
          %1232 = vmatprep.subr.mxu0 0.0
          %1233 = vmatpush1.msra.mxu0 %v1201
          %1234 = vmatprep.subr.mxu0 0.0
          %1235 = vmatpush1.msra.mxu0 %v1202
          %1236 = vmatprep.subr.mxu0 0.0
          %1237 = vmatpush1.msra.mxu0 %v1203
          %1238 = vmatprep.subr.mxu0 0.0
          %1239 = vmatpush1.msra.mxu0 %v1204
          %1240 = vmatprep.subr.mxu0 0.0
          %1241 = vmatpush1.msra.mxu0 %v1205
          %1242 = vmatprep.subr.mxu0 0.0
          %1243 = vmatpush1.msra.mxu0 %v1206
          %1244 = vmatprep.subr.mxu0 0.0
          %1245 = vmatpush1.msra.mxu0 %v1207
          %1246 = vmatprep.subr.mxu0 0.0
          %1247 = vmatpush1.msra.mxu0 %v1208
          %1248 = vmatprep.subr.mxu0 0.0
          %1249 = vmatpush1.msra.mxu0 0.0
          %1250 = vmatprep.subr.mxu0 0.0
          %1251 = vmatpush1.msra.mxu0 0.0
          %1252 = vmatprep.subr.mxu0 0.0
          %1253 = vmatpush1.msra.mxu0 0.0
          %1254 = vmatprep.subr.mxu0 0.0
          %1255 = vmatpush1.msra.mxu0 0.0
          %1256 = vmatprep.subr.mxu0 0.0
          %1257 = vmatpush1.msra.mxu0 0.0
          %1258 = vmatprep.subr.mxu0 0.0
          %1259 = vmatpush1.msra.mxu0 0.0
          %1260 = vmatprep.subr.mxu0 0.0
          %1261 = vmatpush1.msra.mxu0 0.0
          %1262 = vmatprep.subr.mxu0 0.0
          %1263 = vmatpush1.msra.mxu0 0.0
          %1264 = vmatprep.subr.mxu0 0.0
          %1265 = vmatpush1.msra.mxu0 0.0
          %1266 = vmatprep.subr.mxu0 0.0
          %1267 = vmatpush1.msra.mxu0 0.0
          %1268 = vmatprep.subr.mxu0 0.0
          %1269 = vmatpush1.msra.mxu0 0.0
          %1270 = vmatprep.subr.mxu0 0.0
          %1271 = vmatpush1.msra.mxu0 0.0
          %1272 = vmatprep.subr.mxu0 0.0
          %1273 = vmatpush1.msra.mxu0 0.0
          %1274 = vmatprep.subr.mxu0 0.0
          %1275 = vmatpush1.msra.mxu0 0.0
          %1276 = vmatprep.subr.mxu0 0.0
          %1277 = vmatpush1.msra.mxu0 0.0
          %1278 = vmatprep.subr.mxu0 0.0
          %1279 = vmatpush1.msra.mxu0 0.0
          %1280 = vmatprep.mubr.f32.mxu0 0.0
          %1281 = vmatmul.mubr.f32.gmra.mrb[0].mxu0 %v1181
          %v1282 = vpop.f32.mrb[0].mxu0
          %v1283 = vadd.f32 %v1214, %v1282
          %v1284 = vpop.f32.mrb[0].mxu0
          %1285 = vmatprep.mubr.f32.mxu0 0.0
          %1286 = vmatmul.mubr.f32.gmra.mrb[0].mxu0 %v1182
          %v1287 = vpop.f32.mrb[0].mxu0
          %v1288 = vadd.f32 %v1214, %v1287
          %v1289 = vpop.f32.mrb[0].mxu0
          %1290 = vdwg.mxu0
          %1291 = vmax.xlane.f32.xlu0 %v1283
          %v1292 = vpop.xlane.xlu0 %1291
          %1293 = vmax.xlane.f32.xlu0 %v1288
          %v1294 = vpop.xlane.xlu0 %1293
          %v1295 = vsub.f32 %v1283, %v1292
          %v1296 = vsub.f32 %v1288, %v1294
          %v1297 = vmul.f32 %v1295, 1.442695
          %v1298 = vpow.pop %v1297
          %v1299 = vmul.f32 %v1296, 1.442695
          %v1300 = vpow.pop %v1299
          %1301 = vadd.xlane.f32.xlu0 %v1298
          %v1302 = vpop.xlane.xlu0 %1301
          %1303 = vadd.xlane.f32.xlu0 %v1300
          %v1304 = vpop.xlane.xlu0 %1303
          %v1305 = vrcp.pop %v1302
          %v1306 = vrcp.pop %v1304
          %v1307 = vmul.f32 %v1298, %v1305
          %v1308 = vmul.f32 %v1300, %v1306
          %1309 = vst [vmem:[#allocation10] sm:$0xff] %v1307
          %1310 = vst [vmem:[#allocation10 + $0x8] sm:$0xff] %v1308
        $region60: #{tpu_custom_call.1} parent=43 // pred_fallthru
          _
        // Predicated region
        $region61: #{tpu_custom_call.1} parent=43 // pred_check
          %p1311 = pneg %p183
        $region62: #{tpu_custom_call.1} parent=43 // pred_check_branch
          %1313 = sbr.rel (%p1311) target = $region64
        $region63: #{tpu_custom_call.1} parent=43 // pred_region
          %s1314 = smul.u32 2, %s24
          %s1316 = ssub.s32 256, 256
          %1317 = vsyncadd [#allocation7], %s1316
          %s1318 = smul.addr %s1314, 128
          %s1319 = scalar_lea.hbm %s6, %s1318
          %s1320 = sshll.u32 [#allocation10], 4
          %s1321 = int_to_ptr.vmem [resolvable:$true] %s1320
          %1326 = dma.vmem_to_hbm [thread:$0]  %s1321, 256, %s1319, [#allocation7], 128, 128, 8
        $region64: #{tpu_custom_call.1} parent=43 // pred_fallthru
          _
        // Predicated region
        $region65: #{tpu_custom_call.1} parent=43 // pred_check
          %p1327 = pneg %p183
        $region66: #{tpu_custom_call.1} parent=43 // pred_check_branch
          %1329 = sbr.rel (%p1327) target = $region68
        $region67: #{tpu_custom_call.1} parent=43 // pred_region
          %1330 = dma.done [#allocation7], 256
        $region68: #{tpu_custom_call.1} parent=43 // pred_fallthru
          _
      $region44: #{tpu_custom_call.1} parent=5 // pred_fallthru
        _
      %p1331 = scmp.le.s32.totalorder 2, %s15
      // Predicated region
      $region69: #{tpu_custom_call.1} parent=5 // pred_check
        %p1332 = pneg %p1331
      $region70: #{tpu_custom_call.1} parent=5 // pred_check_branch
        %1334 = sbr.rel (%p1332) target = $region72
      $region71: #{tpu_custom_call.1} parent=5 // pred_region
        %s1335 = ssub.s32 %s15, 2
      $region72: #{tpu_custom_call.1} parent=5 // pred_fallthru
        _
    $region6: #{tpu_custom_call.1} parent=1 // loop_footer
      %s19 = sadd.s32 1, %s15
    $region7: #{tpu_custom_call.1} parent=1 // loop_footer_branch
      %14 = sbr.rel target = $region3
    $region8: #{tpu_custom_call.1} parent=1 // loop_exit
      _
    %1336 = vsyncpa [#allocation6], 1
    %s1337 = scalar_lea.sflag [#allocation6], 1
    %1338 = vsyncpa %s1337, 1
    %1339 = vsyncpa [#allocation9], 1
    %1340 = vsyncpa [#allocation7], 1
    %s1341 = scalar_lea.sflag [#allocation7], 1
    %1342 = vsyncpa %s1341, 1

// kernel: tpu_custom_call.1
$region0: #{tpu_custom_call.1}
  #allocation0 [shape = 'u32[]', space=smem, size = 0x4, offset = 0x4, fixed_abs, tag = 'smem constant byte address 0x4 - core index']
  #allocation1 [shape = 'u32[144,128]{1,0:T(1,128)}', space=vmem, size = 0x12000, scoped, tag = 'internal scratch']
  #allocation2 [shape = 'f32[16,128]{1,0:T(8,128)}', space=vmem, size = 0x2000, scoped, tag = 'scratch operand']
  #allocation3 [shape = 'f32[16,128]{1,0:T(8,128)}', space=vmem, size = 0x2000, scoped, tag = 'scratch operand']
  #allocation4 [shape = 'f32[48,512]{1,0:T(8,128)}', space=vmem, size = 0x18000, scoped, tag = 'scratch operand']
  %s0 = inlined_call_operand.vmem [shape: bf16[1,3,48,16], index: 0, kind: input, shape index: {}]
  %s1 = inlined_call_operand.vmem [shape: bf16[16,512], index: 1, kind: input, shape index: {}]
  %s2 = inlined_call_operand.hbm [shape: bf16[128,512], index: 2, kind: input, shape index: {}]
  %s3 = inlined_call_operand.vmem [shape: f32[1,512], index: 3, kind: input, shape index: {}]
  %s4 = inlined_call_operand.hbm [shape: f32[128,128], index: 4, kind: input, shape index: {}]
  %s5 = inlined_call_operand.vmem [shape: f32[1,128], index: 5, kind: input, shape index: {}]
  %s6 = inlined_call_operand.hbm [shape: f32[16,128], index: 6, kind: output, shape index: {}]
  %s7 = sld [smem:[#allocation0]]
  $region73: #{tpu_custom_call.1} parent=0
    _
  %s9 = ssub.s32 1, %s7
  %s10 = scalar_select 0, %s9, %s7
  $region1: #{tpu_custom_call.1} parent=0
    #allocation5 [shape = 'u8[131072]{0}', space=vmem, size = 0x20000, scoped, tag = 'input window, operand 2, single buffered']
    #allocation6 [shape = 's32[2]{0}', space=sflag, size = 0x8, scoped, tag = 'scoped memory for tpu_custom_call.1']
    #allocation7 [shape = 's32[2]{0}', space=sflag, size = 0x8, scoped, tag = 'scoped memory for tpu_custom_call.1']
    #allocation8 [shape = 'u8[65536]{0}', space=vmem, size = 0x10000, scoped, tag = 'input window, operand 4, single buffered']
    #allocation9 [shape = 's32[1]{0}', space=sflag, size = 0x4, scoped, tag = 'scoped memory for tpu_custom_call.1']
    #allocation10 [shape = 'u8[8192]{0}', space=vmem, size = 0x2000, scoped, tag = 'output window, operand 0, single buffered']
    %11 = vsyncpa [#allocation6], 0
    %12 = vsyncpa [#allocation9], 0
    %13 = vsyncpa [#allocation7], 0
    loop: start=0, step=1, limit=5
    $region2: #{tpu_custom_call.1} parent=1 // loop_pre_header
      _
    $region3: #{tpu_custom_call.1} parent=1 // loop_header
      %s15 = sphi 0, %s19
      %p16 = scmp.ge.s32.totalorder %s15, 5
      %s22 = sphi 0, %s34
      %s23 = sphi 0, %s30
      %s24 = sphi 0, %s22
      %s25 = sphi 0, %s23
      %s26 = sphi 0, %s24
      %s27 = sphi 0, %s25
      %s39 = sphi 0, %s41
      %s42 = sphi 0, %s39
      %s43 = sphi 0, %s42
      %s59 = sphi 0, %s43
      %s63 = sphi 0, %s63
      %s65 = sphi 0, %s63
      %s66 = sphi 0, %s65
      %s80 = sphi 0, %s66
      %s84 = sphi 0, %s84
      %s86 = sphi 0, %s84
      %s87 = sphi 0, %s86
      %s101 = sphi 0, %s87
      %s105 = sphi 0, %s105
      %s107 = sphi 0, %s105
      %s108 = sphi 0, %s107
      %s122 = sphi 0, %s108
      %s126 = sphi 0, %s126
      %s128 = sphi 0, %s126
      %s129 = sphi 0, %s128
      %s143 = sphi 0, %s129
      %s147 = sphi 0, %s147
      %s149 = sphi 0, %s147
      %s150 = sphi 0, %s149
      %s164 = sphi 0, %s150
      %s170 = sphi 0, %s172
      %s173 = sphi 0, %s170
      %s174 = sphi 0, %s173
      %s190 = sphi 0, %s174
    $region4: #{tpu_custom_call.1} parent=1 // loop_header_branch
      %18 = sbr.rel (%p16) target = $region8
    $region5: #{tpu_custom_call.1} parent=1 // loop_body
      %s20 = ssub.s32 %s15, 1
      %s21 = ssub.s32 %s15, 2
      %s28 = sadd.s32 1, %s23
      %p29 = scmp.ge.s32.totalorder %s28, 3
      %s30 = scalar_select %p29, 0, %s28
      %s31 = sadd.s32 1, %s22
      %s32 = scalar_select %p29, %s31, %s22
      %p33 = scmp.ge.s32.totalorder %s32, 1
      %s34 = scalar_select %p33, 0, %s32
      %s35 = ssub.s32 %s22, %s34
      %s36 = ssub.s32 %s23, %s30
      %s37 = sor.u32 %s35, %s36
      %p38 = scmp.eq.s32.totalorder %s37, 0
      %s40 = sadd.s32 %s39, 1
      %s41 = scalar_select %p38, %s39, %s40
      %p44 = pneg %p38
      %p45 = scmp.eq.s32.totalorder %s15, 2
      %p46 = por %p44, %p45
      %p47 = scmp.ne.s32.totalorder %s39, %s42
      %p48 = scmp.eq.s32.totalorder %s15, 0
      %p49 = por %p47, %p48
      %p50 = scmp.ne.s32.totalorder %s39, %s42
      %p51 = scmp.eq.s32.totalorder %s20, 2
      %p52 = por %p50, %p51
      %p53 = scmp.ne.s32.totalorder %s42, %s43
      %p54 = scmp.eq.s32.totalorder %s20, 0
      %p55 = por %p53, %p54
      %p56 = scmp.ne.s32.totalorder %s42, %s43
      %p57 = scmp.eq.s32.totalorder %s21, 2
      %p58 = por %p56, %p57
      %p60 = scmp.ne.s32.totalorder %s43, %s59
      %p61 = scmp.eq.s32.totalorder %s21, 0
      %p62 = por %p60, %p61
      %s64 = sadd.s32 %s63, 1
      %p67 = scmp.eq.s32.totalorder %s15, 2
      %p68 = scmp.ne.s32.totalorder %s63, %s65
      %p69 = scmp.eq.s32.totalorder %s15, 0
      %p70 = por %p68, %p69
      %p71 = scmp.ne.s32.totalorder %s63, %s65
      %p72 = scmp.eq.s32.totalorder %s20, 2
      %p73 = por %p71, %p72
      %p74 = scmp.ne.s32.totalorder %s65, %s66
      %p75 = scmp.eq.s32.totalorder %s20, 0
      %p76 = por %p74, %p75
      %p77 = scmp.ne.s32.totalorder %s65, %s66
      %p78 = scmp.eq.s32.totalorder %s21, 2
      %p79 = por %p77, %p78
      %p81 = scmp.ne.s32.totalorder %s66, %s80
      %p82 = scmp.eq.s32.totalorder %s21, 0
      %p83 = por %p81, %p82
      %s85 = sadd.s32 %s84, 1
      %p88 = scmp.eq.s32.totalorder %s15, 2
      %p89 = scmp.ne.s32.totalorder %s84, %s86
      %p90 = scmp.eq.s32.totalorder %s15, 0
      %p91 = por %p89, %p90
      %p92 = scmp.ne.s32.totalorder %s84, %s86
      %p93 = scmp.eq.s32.totalorder %s20, 2
      %p94 = por %p92, %p93
      %p95 = scmp.ne.s32.totalorder %s86, %s87
      %p96 = scmp.eq.s32.totalorder %s20, 0
      %p97 = por %p95, %p96
      %p98 = scmp.ne.s32.totalorder %s86, %s87
      %p99 = scmp.eq.s32.totalorder %s21, 2
      %p100 = por %p98, %p99
      %p102 = scmp.ne.s32.totalorder %s87, %s101
      %p103 = scmp.eq.s32.totalorder %s21, 0
      %p104 = por %p102, %p103
      %s106 = sadd.s32 %s105, 1
      %p109 = scmp.eq.s32.totalorder %s15, 2
      %p110 = scmp.ne.s32.totalorder %s105, %s107
      %p111 = scmp.eq.s32.totalorder %s15, 0
      %p112 = por %p110, %p111
      %p113 = scmp.ne.s32.totalorder %s105, %s107
      %p114 = scmp.eq.s32.totalorder %s20, 2
      %p115 = por %p113, %p114
      %p116 = scmp.ne.s32.totalorder %s107, %s108
      %p117 = scmp.eq.s32.totalorder %s20, 0
      %p118 = por %p116, %p117
      %p119 = scmp.ne.s32.totalorder %s107, %s108
      %p120 = scmp.eq.s32.totalorder %s21, 2
      %p121 = por %p119, %p120
      %p123 = scmp.ne.s32.totalorder %s108, %s122
      %p124 = scmp.eq.s32.totalorder %s21, 0
      %p125 = por %p123, %p124
      %s127 = sadd.s32 %s126, 1
      %p130 = scmp.eq.s32.totalorder %s15, 2
      %p131 = scmp.ne.s32.totalorder %s126, %s128
      %p132 = scmp.eq.s32.totalorder %s15, 0
      %p133 = por %p131, %p132
      %p134 = scmp.ne.s32.totalorder %s126, %s128
      %p135 = scmp.eq.s32.totalorder %s20, 2
      %p136 = por %p134, %p135
      %p137 = scmp.ne.s32.totalorder %s128, %s129
      %p138 = scmp.eq.s32.totalorder %s20, 0
      %p139 = por %p137, %p138
      %p140 = scmp.ne.s32.totalorder %s128, %s129
      %p141 = scmp.eq.s32.totalorder %s21, 2
      %p142 = por %p140, %p141
      %p144 = scmp.ne.s32.totalorder %s129, %s143
      %p145 = scmp.eq.s32.totalorder %s21, 0
      %p146 = por %p144, %p145
      %s148 = sadd.s32 %s147, 1
      %p151 = scmp.eq.s32.totalorder %s15, 2
      %p152 = scmp.ne.s32.totalorder %s147, %s149
      %p153 = scmp.eq.s32.totalorder %s15, 0
      %p154 = por %p152, %p153
      %p155 = scmp.ne.s32.totalorder %s147, %s149
      %p156 = scmp.eq.s32.totalorder %s20, 2
      %p157 = por %p155, %p156
      %p158 = scmp.ne.s32.totalorder %s149, %s150
      %p159 = scmp.eq.s32.totalorder %s20, 0
      %p160 = por %p158, %p159
      %p161 = scmp.ne.s32.totalorder %s149, %s150
      %p162 = scmp.eq.s32.totalorder %s21, 2
      %p163 = por %p161, %p162
      %p165 = scmp.ne.s32.totalorder %s150, %s164
      %p166 = scmp.eq.s32.totalorder %s21, 0
      %p167 = por %p165, %p166
      %s168 = ssub.s32 %s22, %s34
      %p169 = scmp.eq.s32.totalorder %s168, 0
      %s171 = sadd.s32 %s170, 1
      %s172 = scalar_select %p169, %s170, %s171
      %p175 = pneg %p169
      %p176 = scmp.eq.s32.totalorder %s15, 2
      %p177 = por %p175, %p176
      %p178 = scmp.ne.s32.totalorder %s170, %s173
      %p179 = scmp.eq.s32.totalorder %s15, 0
      %p180 = por %p178, %p179
      %p181 = scmp.ne.s32.totalorder %s170, %s173
      %p182 = scmp.eq.s32.totalorder %s20, 2
      %p183 = por %p181, %p182
      %p184 = scmp.ne.s32.totalorder %s173, %s174
      %p185 = scmp.eq.s32.totalorder %s20, 0
      %p186 = por %p184, %p185
      %p187 = scmp.ne.s32.totalorder %s173, %s174
      %p188 = scmp.eq.s32.totalorder %s21, 2
      %p189 = por %p187, %p188
      %p191 = scmp.ne.s32.totalorder %s174, %s190
      %p192 = scmp.eq.s32.totalorder %s21, 0
      %p193 = por %p191, %p192
      %p194 = scmp.le.s32.totalorder 1, %s15
      %p195 = scmp.lt.s32.totalorder %s15, 4
      %p196 = pnand %p194, %p195
      %p197 = pneg %p196
      // Predicated region
      $region9: #{tpu_custom_call.1} parent=5 // pred_check
        _
      $region10: #{tpu_custom_call.1} parent=5 // pred_check_branch
        %199 = sbr.rel (%p196) target = $region12
      $region11: #{tpu_custom_call.1} parent=5 // pred_region
        %s200 = ssub.s32 %s15, 1
        // Predicated region
        $region13: #{tpu_custom_call.1} parent=11 // pred_check
          %p201 = pneg %p76
        $region14: #{tpu_custom_call.1} parent=11 // pred_check_branch
          %203 = sbr.rel (%p201) target = $region16
        $region15: #{tpu_custom_call.1} parent=11 // pred_region
          _
        $region16: #{tpu_custom_call.1} parent=11 // pred_fallthru
          _
        // Predicated region
        $region17: #{tpu_custom_call.1} parent=11 // pred_check
          %p204 = pneg %p97
        $region18: #{tpu_custom_call.1} parent=11 // pred_check_branch
          %206 = sbr.rel (%p204) target = $region20
        $region19: #{tpu_custom_call.1} parent=11 // pred_region
          %s208 = ssub.s32 4096, 4096
          %209 = vsyncadd [#allocation6], %s208
          %s210 = sshll.u32 [#allocation5], 4
          %s211 = int_to_ptr.vmem [resolvable:$true] %s210
          %216 = dma.hbm_to_vmem [thread:$0]  %s2, 4096, %s211, [#allocation6], 256, 256, 16
        $region20: #{tpu_custom_call.1} parent=11 // pred_fallthru
          _
        // Predicated region
        $region21: #{tpu_custom_call.1} parent=11 // pred_check
          %p217 = pneg %p118
        $region22: #{tpu_custom_call.1} parent=11 // pred_check_branch
          %219 = sbr.rel (%p217) target = $region24
        $region23: #{tpu_custom_call.1} parent=11 // pred_region
          _
        $region24: #{tpu_custom_call.1} parent=11 // pred_fallthru
          _
        // Predicated region
        $region25: #{tpu_custom_call.1} parent=11 // pred_check
          %p220 = pneg %p139
        $region26: #{tpu_custom_call.1} parent=11 // pred_check_branch
          %222 = sbr.rel (%p220) target = $region28
        $region27: #{tpu_custom_call.1} parent=11 // pred_region
          %s224 = ssub.s32 2048, 2048
          %225 = vsyncadd [#allocation9], %s224
          %s226 = sshll.u32 [#allocation8], 4
          %s227 = int_to_ptr.vmem [resolvable:$true] %s226
          %232 = dma.hbm_to_vmem [thread:$0]  %s4, 2048, %s227, [#allocation9], 128, 128, 8
        $region28: #{tpu_custom_call.1} parent=11 // pred_fallthru
          _
        // Predicated region
        $region29: #{tpu_custom_call.1} parent=11 // pred_check
          %p233 = pneg %p160
        $region30: #{tpu_custom_call.1} parent=11 // pred_check_branch
          %235 = sbr.rel (%p233) target = $region32
        $region31: #{tpu_custom_call.1} parent=11 // pred_region
          _
        $region32: #{tpu_custom_call.1} parent=11 // pred_fallthru
          _
      $region12: #{tpu_custom_call.1} parent=5 // pred_fallthru
        _
      %p236 = scmp.lt.s32.totalorder %s15, 3
      // Predicated region
      $region33: #{tpu_custom_call.1} parent=5 // pred_check
        %p237 = pneg %p236
      $region34: #{tpu_custom_call.1} parent=5 // pred_check_branch
        %239 = sbr.rel (%p237) target = $region36
      $region35: #{tpu_custom_call.1} parent=5 // pred_region
        // Predicated region
        $region37: #{tpu_custom_call.1} parent=35 // pred_check
          %p240 = pneg %p49
        $region38: #{tpu_custom_call.1} parent=35 // pred_check_branch
          %242 = sbr.rel (%p240) target = $region40
        $region39: #{tpu_custom_call.1} parent=35 // pred_region
          %p243 = scmp.lt.s32.totalorder %s22, 0
          %s244 = scalar_select %p243, %s22, 0
          %p245 = scmp.lt.s32.totalorder %s23, 2
          %s246 = scalar_select %p245, %s23, 2
          %s247 = smul.addr %s246, 6
          %s248 = smul.addr %s244, 18
          %s249 = sadd.s32 %s247, %s248
          %s250 = smul.addr %s249, 4
          %s251 = scalar_lea.vmem %s0, %s250
        $region40: #{tpu_custom_call.1} parent=35 // pred_fallthru
          _
      $region36: #{tpu_custom_call.1} parent=5 // pred_fallthru
        _
      %p252 = scmp.le.s32.totalorder 1, %s15
      %p253 = scmp.lt.s32.totalorder %s15, 4
      %p254 = pnand %p252, %p253
      %p255 = pneg %p254
      // Predicated region
      $region41: #{tpu_custom_call.1} parent=5 // pred_check
        _
      $region42: #{tpu_custom_call.1} parent=5 // pred_check_branch
        %257 = sbr.rel (%p254) target = $region44
      $region43: #{tpu_custom_call.1} parent=5 // pred_region
        %s258 = ssub.s32 %s15, 1
        // Predicated region
        $region45: #{tpu_custom_call.1} parent=43 // pred_check
          %p259 = pneg %p97
        $region46: #{tpu_custom_call.1} parent=43 // pred_check_branch
          %261 = sbr.rel (%p259) target = $region48
        $region47: #{tpu_custom_call.1} parent=43 // pred_region
          %262 = dma.done [#allocation6], 4096
        $region48: #{tpu_custom_call.1} parent=43 // pred_fallthru
          _
        // Predicated region
        $region49: #{tpu_custom_call.1} parent=43 // pred_check
          %p263 = pneg %p139
        $region50: #{tpu_custom_call.1} parent=43 // pred_check_branch
          %265 = sbr.rel (%p263) target = $region52
        $region51: #{tpu_custom_call.1} parent=43 // pred_region
          %266 = dma.done [#allocation9], 2048
        $region52: #{tpu_custom_call.1} parent=43 // pred_fallthru
          _
        %p267 = scmp.lt.s32.totalorder %s24, 0
        %s268 = scalar_select %p267, %s24, 0
        %p269 = scmp.lt.s32.totalorder %s25, 2
        %s270 = scalar_select %p269, %s25, 2
        %s271 = smul.addr %s270, 6
        %s272 = smul.addr %s268, 18
        %s273 = sadd.s32 %s271, %s272
        %s274 = smul.addr %s273, 4
        %s275 = scalar_lea.vmem %s0, %s274
        %p276 = pneg %p55
        %p277 = pneg %p52
        %p278 = pneg %p76
        %p279 = pneg %p73
        %p280 = pneg %p97
        %p281 = pneg %p94
        %p282 = pneg %p118
        %p283 = pneg %p115
        %p284 = pneg %p139
        %p285 = pneg %p136
        %p286 = pneg %p160
        %p287 = pneg %p157
        %p288 = pneg %p186
        %p289 = pneg %p183
        %p290 = scmp.lt.s32.totalorder %s24, 0
        %s291 = scalar_select %p290, %s24, 0
        %p292 = scmp.lt.s32.totalorder %s25, 2
        %s293 = scalar_select %p292, %s25, 2
        %s294 = smul.addr %s293, 6
        %s295 = smul.addr %s291, 18
        %s296 = sadd.s32 %s294, %s295
        %s297 = smul.addr %s296, 4
        %s298 = scalar_lea.vmem %s0, %s297
        %s299 = smul.u32 2, %s24
        %p301 = scmp.eq.s32.totalorder %s25, 0
        // Predicated region
        $region53: #{tpu_custom_call.1} parent=43 // pred_check
          %p302 = pneg %p301
        $region54: #{tpu_custom_call.1} parent=43 // pred_check_branch
          %304 = sbr.rel (%p302) target = $region56
        $region55: #{tpu_custom_call.1} parent=43 // pred_region
          %305 = vst [vmem:[#allocation2] sm:$0xff] 0.0
          %306 = vst [vmem:[#allocation2 + $0x8] sm:$0xff] 0.0
          %307 = vst [vmem:[#allocation3] sm:$0xff] 0.0
          %308 = vst [vmem:[#allocation3 + $0x8] sm:$0xff] 0.0
        $region56: #{tpu_custom_call.1} parent=43 // pred_fallthru
          _
        %v309 = vld [vmem:[%s298] sm:$0xf]
        %v310 = vld [vmem:[%s298 + $0x4] sm:$0xf]
        %v311 = vld [vmem:[%s298 + $0x8] sm:$0xf]
        %v312 = vld [vmem:[%s298 + $0xc] sm:$0xf]
        %v313 = vld [vmem:[%s298 + $0x10] sm:$0xf]
        %v314 = vld [vmem:[%s298 + $0x14] sm:$0xf]
        %v315 = vld [vmem:[%s1] sm:$0xff]
        %v316 = vld [vmem:[%s1 + $0x8] sm:$0xff]
        %v317 = vld [vmem:[%s1 + $0x10] sm:$0xff]
        %v318 = vld [vmem:[%s1 + $0x18] sm:$0xff]
        %v319 = vld [vmem:[%s3] sm:$0xf]
        %v321 = vlaneseq
        %v322 = vshrl.u32 %v321, 7
        %v323 = vsub.s32 0, %v322
        %v324 = vrot.slane %v319, %v323
        %v325 = vlaneseq
        %v326 = vshrl.u32 %v325, 7
        %v327 = vsub.s32 1, %v326
        %v328 = vrot.slane %v319, %v327
        %v329 = vlaneseq
        %v330 = vshrl.u32 %v329, 7
        %v331 = vsub.s32 2, %v330
        %v332 = vrot.slane %v319, %v331
        %v333 = vlaneseq
        %v334 = vshrl.u32 %v333, 7
        %v335 = vsub.s32 3, %v334
        %v336 = vrot.slane %v319, %v335
        %v347 = vunpack.c.l.b16 %v309
        %v348 = vunpack.c.l.b16 %v310
        %v349 = vunpack.c.l.b16 %v311
        %v350 = vunpack.c.l.b16 %v312
        %v351 = vunpack.c.l.b16 %v313
        %v352 = vunpack.c.l.b16 %v314
        %v353 = vpack.c.b16 %v348, %v347
        %v354 = vpack.c.b16 %v350, %v349
        %v355 = vpack.c.b16 %v352, %v351
        %v360 = vunpack.c.l.b16 %v315
        %v361 = vunpack.c.h.b16 %v315
        %v362 = vunpack.c.l.b16 %v316
        %v363 = vunpack.c.h.b16 %v316
        %v364 = vunpack.c.l.b16 %v317
        %v365 = vunpack.c.h.b16 %v317
        %v366 = vunpack.c.l.b16 %v318
        %v367 = vunpack.c.h.b16 %v318
        %v368 = vpack.c.b16 %v364, %v360
        %v369 = vpack.c.b16 %v365, %v361
        %v370 = vpack.c.b16 %v366, %v362
        %v371 = vpack.c.b16 %v367, %v363
        %vm376 = vcmask 130048
        %v378 = vsel %vm376, %v353, 0
        %v381 = vsel %vm376, %v354, 0
        %v384 = vsel %vm376, %v355, 0
        %386 = vmatprep.subr.bf16.mxu0 %v369
        %387 = vmatpush1.bf16.msra.mxu0 %v368
        %388 = vmatprep.subr.bf16.mxu0 0
        %389 = vmatpush1.bf16.msra.mxu0 0
        %390 = vmatprep.subr.bf16.mxu0 0
        %391 = vmatpush1.bf16.msra.mxu0 0
        %392 = vmatprep.subr.bf16.mxu0 0
        %393 = vmatpush1.bf16.msra.mxu0 0
        %394 = vmatprep.subr.bf16.mxu0 0
        %395 = vmatpush1.bf16.msra.mxu0 0
        %396 = vmatprep.subr.bf16.mxu0 0
        %397 = vmatpush1.bf16.msra.mxu0 0
        %398 = vmatprep.subr.bf16.mxu0 0
        %399 = vmatpush1.bf16.msra.mxu0 0
        %400 = vmatprep.subr.bf16.mxu0 0
        %401 = vmatpush1.bf16.msra.mxu0 0
        %402 = vmatprep.subr.bf16.mxu0 0
        %403 = vmatpush1.bf16.msra.mxu0 0
        %404 = vmatprep.subr.bf16.mxu0 0
        %405 = vmatpush1.bf16.msra.mxu0 0
        %406 = vmatprep.subr.bf16.mxu0 0
        %407 = vmatpush1.bf16.msra.mxu0 0
        %408 = vmatprep.subr.bf16.mxu0 0
        %409 = vmatpush1.bf16.msra.mxu0 0
        %410 = vmatprep.subr.bf16.mxu0 0
        %411 = vmatpush1.bf16.msra.mxu0 0
        %412 = vmatprep.subr.bf16.mxu0 0
        %413 = vmatpush1.bf16.msra.mxu0 0
        %414 = vmatprep.subr.bf16.mxu0 0
        %415 = vmatpush1.bf16.msra.mxu0 0
        %416 = vmatprep.subr.bf16.mxu0 0
        %417 = vmatpush1.bf16.msra.mxu0 0
        %418 = vmatprep.mubr.bf16.mxu0 0
        %419 = vmatmul.mubr.bf16.gmra.mrb[0].mxu0 %v378
        %v420 = vpop.f32.mrb[0].mxu0
        %v421 = vadd.f32 %v324, %v420
        %v422 = vpop.f32.mrb[0].mxu0
        %v423 = vadd.f32 %v328, %v422
        %v424 = vpop.f32.mrb[0].mxu0
        %v425 = vadd.f32 %v324, %v424
        %v426 = vpop.f32.mrb[0].mxu0
        %v427 = vadd.f32 %v328, %v426
        %428 = vmatprep.mubr.bf16.mxu0 0
        %429 = vmatmul.mubr.bf16.gmra.mrb[0].mxu0 %v381
        %v430 = vpop.f32.mrb[0].mxu0
        %v431 = vadd.f32 %v324, %v430
        %v432 = vpop.f32.mrb[0].mxu0
        %v433 = vadd.f32 %v328, %v432
        %v434 = vpop.f32.mrb[0].mxu0
        %v435 = vadd.f32 %v324, %v434
        %v436 = vpop.f32.mrb[0].mxu0
        %v437 = vadd.f32 %v328, %v436
        %438 = vmatprep.mubr.bf16.mxu0 0
        %439 = vmatmul.mubr.bf16.gmra.mrb[0].mxu0 %v384
        %v440 = vpop.f32.mrb[0].mxu0
        %v441 = vadd.f32 %v324, %v440
        %v442 = vpop.f32.mrb[0].mxu0
        %v443 = vadd.f32 %v328, %v442
        %v444 = vpop.f32.mrb[0].mxu0
        %v445 = vadd.f32 %v324, %v444
        %v446 = vpop.f32.mrb[0].mxu0
        %v447 = vadd.f32 %v328, %v446
        %448 = vdwg.mxu0
        %449 = vmatprep.subr.bf16.mxu0 %v371
        %450 = vmatpush1.bf16.msra.mxu0 %v370
        %451 = vmatprep.subr.bf16.mxu0 0
        %452 = vmatpush1.bf16.msra.mxu0 0
        %453 = vmatprep.subr.bf16.mxu0 0
        %454 = vmatpush1.bf16.msra.mxu0 0
        %455 = vmatprep.subr.bf16.mxu0 0
        %456 = vmatpush1.bf16.msra.mxu0 0
        %457 = vmatprep.subr.bf16.mxu0 0
        %458 = vmatpush1.bf16.msra.mxu0 0
        %459 = vmatprep.subr.bf16.mxu0 0
        %460 = vmatpush1.bf16.msra.mxu0 0
        %461 = vmatprep.subr.bf16.mxu0 0
        %462 = vmatpush1.bf16.msra.mxu0 0
        %463 = vmatprep.subr.bf16.mxu0 0
        %464 = vmatpush1.bf16.msra.mxu0 0
        %465 = vmatprep.subr.bf16.mxu0 0
        %466 = vmatpush1.bf16.msra.mxu0 0
        %467 = vmatprep.subr.bf16.mxu0 0
        %468 = vmatpush1.bf16.msra.mxu0 0
        %469 = vmatprep.subr.bf16.mxu0 0
        %470 = vmatpush1.bf16.msra.mxu0 0
        %471 = vmatprep.subr.bf16.mxu0 0
        %472 = vmatpush1.bf16.msra.mxu0 0
        %473 = vmatprep.subr.bf16.mxu0 0
        %474 = vmatpush1.bf16.msra.mxu0 0
        %475 = vmatprep.subr.bf16.mxu0 0
        %476 = vmatpush1.bf16.msra.mxu0 0
        %477 = vmatprep.subr.bf16.mxu0 0
        %478 = vmatpush1.bf16.msra.mxu0 0
        %479 = vmatprep.subr.bf16.mxu0 0
        %480 = vmatpush1.bf16.msra.mxu0 0
        %481 = vmatprep.mubr.bf16.mxu0 0
        %482 = vmatmul.mubr.bf16.gmra.mrb[0].mxu0 %v378
        %v483 = vpop.f32.mrb[0].mxu0
        %v484 = vadd.f32 %v332, %v483
        %v485 = vpop.f32.mrb[0].mxu0
        %v486 = vadd.f32 %v336, %v485
        %v487 = vpop.f32.mrb[0].mxu0
        %v488 = vadd.f32 %v332, %v487
        %v489 = vpop.f32.mrb[0].mxu0
        %v490 = vadd.f32 %v336, %v489
        %491 = vmatprep.mubr.bf16.mxu0 0
        %492 = vmatmul.mubr.bf16.gmra.mrb[0].mxu0 %v381
        %v493 = vpop.f32.mrb[0].mxu0
        %v494 = vadd.f32 %v332, %v493
        %v495 = vpop.f32.mrb[0].mxu0
        %v496 = vadd.f32 %v336, %v495
        %v497 = vpop.f32.mrb[0].mxu0
        %v498 = vadd.f32 %v332, %v497
        %v499 = vpop.f32.mrb[0].mxu0
        %v500 = vadd.f32 %v336, %v499
        %501 = vmatprep.mubr.bf16.mxu0 0
        %502 = vmatmul.mubr.bf16.gmra.mrb[0].mxu0 %v384
        %v503 = vpop.f32.mrb[0].mxu0
        %v504 = vadd.f32 %v332, %v503
        %v505 = vpop.f32.mrb[0].mxu0
        %v506 = vadd.f32 %v336, %v505
        %v507 = vpop.f32.mrb[0].mxu0
        %v508 = vadd.f32 %v332, %v507
        %v509 = vpop.f32.mrb[0].mxu0
        %v510 = vadd.f32 %v336, %v509
        %511 = vdwg.mxu0
        %512 = vst [vmem:[#allocation4] sm:$0xff] %v421
        %513 = vst [vmem:[#allocation4 + $0x8] sm:$0xff] %v423
        %514 = vst [vmem:[#allocation4 + $0x10] sm:$0xff] %v484
        %515 = vst [vmem:[#allocation4 + $0x18] sm:$0xff] %v486
        %516 = vst [vmem:[#allocation4 + $0x20] sm:$0xff] %v425
        %517 = vst [vmem:[#allocation4 + $0x28] sm:$0xff] %v427
        %518 = vst [vmem:[#allocation4 + $0x30] sm:$0xff] %v488
        %519 = vst [vmem:[#allocation4 + $0x38] sm:$0xff] %v490
        %520 = vst [vmem:[#allocation4 + $0x40] sm:$0xff] %v431
        %521 = vst [vmem:[#allocation4 + $0x48] sm:$0xff] %v433
        %522 = vst [vmem:[#allocation4 + $0x50] sm:$0xff] %v494
        %523 = vst [vmem:[#allocation4 + $0x58] sm:$0xff] %v496
        %524 = vst [vmem:[#allocation4 + $0x60] sm:$0xff] %v435
        %525 = vst [vmem:[#allocation4 + $0x68] sm:$0xff] %v437
        %526 = vst [vmem:[#allocation4 + $0x70] sm:$0xff] %v498
        %527 = vst [vmem:[#allocation4 + $0x78] sm:$0xff] %v500
        %528 = vst [vmem:[#allocation4 + $0x80] sm:$0xff] %v441
        %529 = vst [vmem:[#allocation4 + $0x88] sm:$0xff] %v443
        %530 = vst [vmem:[#allocation4 + $0x90] sm:$0xff] %v504
        %531 = vst [vmem:[#allocation4 + $0x98] sm:$0xff] %v506
        %532 = vst [vmem:[#allocation4 + $0xa0] sm:$0xff] %v445
        %533 = vst [vmem:[#allocation4 + $0xa8] sm:$0xff] %v447
        %534 = vst [vmem:[#allocation4 + $0xb0] sm:$0xff] %v508
        %535 = vst [vmem:[#allocation4 + $0xb8] sm:$0xff] %v510
        %v536 = vld [vmem:[#allocation5] sm:$0xff]
        %v537 = vld [vmem:[#allocation5 + $0x8] sm:$0xff]
        %v538 = vld [vmem:[#allocation5 + $0x10] sm:$0xff]
        %v539 = vld [vmem:[#allocation5 + $0x18] sm:$0xff]
        %v540 = vld [vmem:[#allocation5 + $0x20] sm:$0xff]
        %v541 = vld [vmem:[#allocation5 + $0x28] sm:$0xff]
        %v542 = vld [vmem:[#allocation5 + $0x30] sm:$0xff]
        %v543 = vld [vmem:[#allocation5 + $0x38] sm:$0xff]
        %v544 = vld [vmem:[#allocation5 + $0x40] sm:$0xff]
        %v545 = vld [vmem:[#allocation5 + $0x48] sm:$0xff]
        %v546 = vld [vmem:[#allocation5 + $0x50] sm:$0xff]
        %v547 = vld [vmem:[#allocation5 + $0x58] sm:$0xff]
        %v548 = vld [vmem:[#allocation5 + $0x60] sm:$0xff]
        %v549 = vld [vmem:[#allocation5 + $0x68] sm:$0xff]
        %v550 = vld [vmem:[#allocation5 + $0x70] sm:$0xff]
        %v551 = vld [vmem:[#allocation5 + $0x78] sm:$0xff]
        %v552 = vld [vmem:[#allocation5 + $0x80] sm:$0xff]
        %v553 = vld [vmem:[#allocation5 + $0x88] sm:$0xff]
        %v554 = vld [vmem:[#allocation5 + $0x90] sm:$0xff]
        %v555 = vld [vmem:[#allocation5 + $0x98] sm:$0xff]
        %v556 = vld [vmem:[#allocation5 + $0xa0] sm:$0xff]
        %v557 = vld [vmem:[#allocation5 + $0xa8] sm:$0xff]
        %v558 = vld [vmem:[#allocation5 + $0xb0] sm:$0xff]
        %v559 = vld [vmem:[#allocation5 + $0xb8] sm:$0xff]
        %v560 = vld [vmem:[#allocation5 + $0xc0] sm:$0xff]
        %v561 = vld [vmem:[#allocation5 + $0xc8] sm:$0xff]
        %v562 = vld [vmem:[#allocation5 + $0xd0] sm:$0xff]
        %v563 = vld [vmem:[#allocation5 + $0xd8] sm:$0xff]
        %v564 = vld [vmem:[#allocation5 + $0xe0] sm:$0xff]
        %v565 = vld [vmem:[#allocation5 + $0xe8] sm:$0xff]
        %v566 = vld [vmem:[#allocation5 + $0xf0] sm:$0xff]
        %v567 = vld [vmem:[#allocation5 + $0xf8] sm:$0xff]
        %v568 = vld [vmem:[#allocation2] sm:$0xff]
        %v569 = vld [vmem:[#allocation2 + $0x8] sm:$0xff]
        %v570 = vld [vmem:[#allocation3] sm:$0xff]
        %v571 = vld [vmem:[#allocation3 + $0x8] sm:$0xff]
        %s572 = smul.u32 0, 4
        %s573 = smul.addr %s572, 8
        %s574 = scalar_lea.vmem [#allocation4], %s573
        %v575 = vld [vmem:[%s574] sm:$0xff]
        %v576 = vld [vmem:[%s574 + $0x8] sm:$0xff]
        %v577 = vld [vmem:[%s574 + $0x10] sm:$0xff]
        %v578 = vld [vmem:[%s574 + $0x18] sm:$0xff]
        %v579 = vld [vmem:[%s574 + $0x20] sm:$0xff]
        %v580 = vld [vmem:[%s574 + $0x28] sm:$0xff]
        %v581 = vld [vmem:[%s574 + $0x30] sm:$0xff]
        %v582 = vld [vmem:[%s574 + $0x38] sm:$0xff]
        %v583 = vpack.c.bf16 %v569, %v568
        %v616 = vunpack.c.l.b16 %v536
        %v617 = vunpack.c.h.b16 %v536
        %v618 = vunpack.c.l.b16 %v537
        %v619 = vunpack.c.h.b16 %v537
        %v620 = vunpack.c.l.b16 %v538
        %v621 = vunpack.c.h.b16 %v538
        %v622 = vunpack.c.l.b16 %v539
        %v623 = vunpack.c.h.b16 %v539
        %v624 = vunpack.c.l.b16 %v540
        %v625 = vunpack.c.h.b16 %v540
        %v626 = vunpack.c.l.b16 %v541
        %v627 = vunpack.c.h.b16 %v541
        %v628 = vunpack.c.l.b16 %v542
        %v629 = vunpack.c.h.b16 %v542
        %v630 = vunpack.c.l.b16 %v543
        %v631 = vunpack.c.h.b16 %v543
        %v632 = vunpack.c.l.b16 %v544
        %v633 = vunpack.c.h.b16 %v544
        %v634 = vunpack.c.l.b16 %v545
        %v635 = vunpack.c.h.b16 %v545
        %v636 = vunpack.c.l.b16 %v546
        %v637 = vunpack.c.h.b16 %v546
        %v638 = vunpack.c.l.b16 %v547
        %v639 = vunpack.c.h.b16 %v547
        %v640 = vunpack.c.l.b16 %v548
        %v641 = vunpack.c.h.b16 %v548
        %v642 = vunpack.c.l.b16 %v549
        %v643 = vunpack.c.h.b16 %v549
        %v644 = vunpack.c.l.b16 %v550
        %v645 = vunpack.c.h.b16 %v550
        %v646 = vunpack.c.l.b16 %v551
        %v647 = vunpack.c.h.b16 %v551
        %v648 = vunpack.c.l.b16 %v552
        %v649 = vunpack.c.h.b16 %v552
        %v650 = vunpack.c.l.b16 %v553
        %v651 = vunpack.c.h.b16 %v553
        %v652 = vunpack.c.l.b16 %v554
        %v653 = vunpack.c.h.b16 %v554
        %v654 = vunpack.c.l.b16 %v555
        %v655 = vunpack.c.h.b16 %v555
        %v656 = vunpack.c.l.b16 %v556
        %v657 = vunpack.c.h.b16 %v556
        %v658 = vunpack.c.l.b16 %v557
        %v659 = vunpack.c.h.b16 %v557
        %v660 = vunpack.c.l.b16 %v558
        %v661 = vunpack.c.h.b16 %v558
        %v662 = vunpack.c.l.b16 %v559
        %v663 = vunpack.c.h.b16 %v559
        %v664 = vunpack.c.l.b16 %v560
        %v665 = vunpack.c.h.b16 %v560
        %v666 = vunpack.c.l.b16 %v561
        %v667 = vunpack.c.h.b16 %v561
        %v668 = vunpack.c.l.b16 %v562
        %v669 = vunpack.c.h.b16 %v562
        %v670 = vunpack.c.l.b16 %v563
        %v671 = vunpack.c.h.b16 %v563
        %v672 = vunpack.c.l.b16 %v564
        %v673 = vunpack.c.h.b16 %v564
        %v674 = vunpack.c.l.b16 %v565
        %v675 = vunpack.c.h.b16 %v565
        %v676 = vunpack.c.l.b16 %v566
        %v677 = vunpack.c.h.b16 %v566
        %v678 = vunpack.c.l.b16 %v567
        %v679 = vunpack.c.h.b16 %v567
        %v680 = vpack.c.b16 %v620, %v616
        %v681 = vpack.c.b16 %v621, %v617
        %v682 = vpack.c.b16 %v622, %v618
        %v683 = vpack.c.b16 %v623, %v619
        %v684 = vpack.c.b16 %v628, %v624
        %v685 = vpack.c.b16 %v629, %v625
        %v686 = vpack.c.b16 %v630, %v626
        %v687 = vpack.c.b16 %v631, %v627
        %v688 = vpack.c.b16 %v636, %v632
        %v689 = vpack.c.b16 %v637, %v633
        %v690 = vpack.c.b16 %v638, %v634
        %v691 = vpack.c.b16 %v639, %v635
        %v692 = vpack.c.b16 %v644, %v640
        %v693 = vpack.c.b16 %v645, %v641
        %v694 = vpack.c.b16 %v646, %v642
        %v695 = vpack.c.b16 %v647, %v643
        %v696 = vpack.c.b16 %v652, %v648
        %v697 = vpack.c.b16 %v653, %v649
        %v698 = vpack.c.b16 %v654, %v650
        %v699 = vpack.c.b16 %v655, %v651
        %v700 = vpack.c.b16 %v660, %v656
        %v701 = vpack.c.b16 %v661, %v657
        %v702 = vpack.c.b16 %v662, %v658
        %v703 = vpack.c.b16 %v663, %v659
        %v704 = vpack.c.b16 %v668, %v664
        %v705 = vpack.c.b16 %v669, %v665
        %v706 = vpack.c.b16 %v670, %v666
        %v707 = vpack.c.b16 %v671, %v667
        %v708 = vpack.c.b16 %v676, %v672
        %v709 = vpack.c.b16 %v677, %v673
        %v710 = vpack.c.b16 %v678, %v674
        %v711 = vpack.c.b16 %v679, %v675
        %744 = vmatprep.subr.bf16.mxu0 %v681
        %745 = vmatpush1.bf16.msra.mxu0 %v680
        %746 = vmatprep.subr.bf16.mxu0 %v685
        %747 = vmatpush1.bf16.msra.mxu0 %v684
        %748 = vmatprep.subr.bf16.mxu0 %v689
        %749 = vmatpush1.bf16.msra.mxu0 %v688
        %750 = vmatprep.subr.bf16.mxu0 %v693
        %751 = vmatpush1.bf16.msra.mxu0 %v692
        %752 = vmatprep.subr.bf16.mxu0 %v697
        %753 = vmatpush1.bf16.msra.mxu0 %v696
        %754 = vmatprep.subr.bf16.mxu0 %v701
        %755 = vmatpush1.bf16.msra.mxu0 %v700
        %756 = vmatprep.subr.bf16.mxu0 %v705
        %757 = vmatpush1.bf16.msra.mxu0 %v704
        %758 = vmatprep.subr.bf16.mxu0 %v709
        %759 = vmatpush1.bf16.msra.mxu0 %v708
        %760 = vmatprep.subr.bf16.mxu0 0
        %761 = vmatpush1.bf16.msra.mxu0 0
        %762 = vmatprep.subr.bf16.mxu0 0
        %763 = vmatpush1.bf16.msra.mxu0 0
        %764 = vmatprep.subr.bf16.mxu0 0
        %765 = vmatpush1.bf16.msra.mxu0 0
        %766 = vmatprep.subr.bf16.mxu0 0
        %767 = vmatpush1.bf16.msra.mxu0 0
        %768 = vmatprep.subr.bf16.mxu0 0
        %769 = vmatpush1.bf16.msra.mxu0 0
        %770 = vmatprep.subr.bf16.mxu0 0
        %771 = vmatpush1.bf16.msra.mxu0 0
        %772 = vmatprep.subr.bf16.mxu0 0
        %773 = vmatpush1.bf16.msra.mxu0 0
        %774 = vmatprep.subr.bf16.mxu0 0
        %775 = vmatpush1.bf16.msra.mxu0 0
        %776 = vmatprep.mubr.bf16.mxu0 0
        %777 = vmatmul.mubr.bf16.gmra.mrb[0].mxu0 %v583
        %v778 = vpop.f32.mrb[0].mxu0
        %v779 = vadd.f32 0.0, %v778
        %v780 = vpop.f32.mrb[0].mxu0
        %v781 = vadd.f32 0.0, %v780
        %v782 = vpop.f32.mrb[0].mxu0
        %v783 = vadd.f32 0.0, %v782
        %v784 = vpop.f32.mrb[0].mxu0
        %v785 = vadd.f32 0.0, %v784
        %786 = vdwg.mxu0
        %787 = vmatprep.subr.bf16.mxu0 %v683
        %788 = vmatpush1.bf16.msra.mxu0 %v682
        %789 = vmatprep.subr.bf16.mxu0 %v687
        %790 = vmatpush1.bf16.msra.mxu0 %v686
        %791 = vmatprep.subr.bf16.mxu0 %v691
        %792 = vmatpush1.bf16.msra.mxu0 %v690
        %793 = vmatprep.subr.bf16.mxu0 %v695
        %794 = vmatpush1.bf16.msra.mxu0 %v694
        %795 = vmatprep.subr.bf16.mxu0 %v699
        %796 = vmatpush1.bf16.msra.mxu0 %v698
        %797 = vmatprep.subr.bf16.mxu0 %v703
        %798 = vmatpush1.bf16.msra.mxu0 %v702
        %799 = vmatprep.subr.bf16.mxu0 %v707
        %800 = vmatpush1.bf16.msra.mxu0 %v706
        %801 = vmatprep.subr.bf16.mxu0 %v711
        %802 = vmatpush1.bf16.msra.mxu0 %v710
        %803 = vmatprep.subr.bf16.mxu0 0
        %804 = vmatpush1.bf16.msra.mxu0 0
        %805 = vmatprep.subr.bf16.mxu0 0
        %806 = vmatpush1.bf16.msra.mxu0 0
        %807 = vmatprep.subr.bf16.mxu0 0
        %808 = vmatpush1.bf16.msra.mxu0 0
        %809 = vmatprep.subr.bf16.mxu0 0
        %810 = vmatpush1.bf16.msra.mxu0 0
        %811 = vmatprep.subr.bf16.mxu0 0
        %812 = vmatpush1.bf16.msra.mxu0 0
        %813 = vmatprep.subr.bf16.mxu0 0
        %814 = vmatpush1.bf16.msra.mxu0 0
        %815 = vmatprep.subr.bf16.mxu0 0
        %816 = vmatpush1.bf16.msra.mxu0 0
        %817 = vmatprep.subr.bf16.mxu0 0
        %818 = vmatpush1.bf16.msra.mxu0 0
        %819 = vmatprep.mubr.bf16.mxu0 0
        %820 = vmatmul.mubr.bf16.gmra.mrb[0].mxu0 %v583
        %v821 = vpop.f32.mrb[0].mxu0
        %v822 = vadd.f32 0.0, %v821
        %v823 = vpop.f32.mrb[0].mxu0
        %v824 = vadd.f32 0.0, %v823
        %v825 = vpop.f32.mrb[0].mxu0
        %v826 = vadd.f32 0.0, %v825
        %v827 = vpop.f32.mrb[0].mxu0
        %v828 = vadd.f32 0.0, %v827
        %829 = vdwg.mxu0
        %v830 = vadd.f32 %v575, %v779
        %v831 = vadd.f32 %v576, %v781
        %v832 = vadd.f32 %v577, %v822
        %v833 = vadd.f32 %v578, %v824
        %v834 = vadd.f32 %v579, %v783
        %v835 = vadd.f32 %v580, %v785
        %v836 = vadd.f32 %v581, %v826
        %v837 = vadd.f32 %v582, %v828
        %v838 = vmul.f32 %v830, 0.5
        %v839 = vmul.f32 %v834, 0.5
        %v840 = vtanh.pop %v838
        %v841 = vtanh.pop %v839
        %v842 = vadd.f32 %v840, 1.0
        %v843 = vadd.f32 %v841, 1.0
        %v844 = vmul.f32 %v842, 0.5
        %v845 = vmul.f32 %v843, 0.5
        %v846 = vmul.f32 %v831, 0.5
        %v847 = vmul.f32 %v835, 0.5
        %v848 = vtanh.pop %v846
        %v849 = vtanh.pop %v847
        %v850 = vadd.f32 %v848, 1.0
        %v851 = vadd.f32 %v849, 1.0
        %v852 = vmul.f32 %v850, 0.5
        %v853 = vmul.f32 %v851, 0.5
        %v854 = vtanh.pop %v832
        %v855 = vtanh.pop %v836
        %v856 = vmul.f32 %v833, 0.5
        %v857 = vmul.f32 %v837, 0.5
        %v858 = vtanh.pop %v856
        %v859 = vtanh.pop %v857
        %v860 = vadd.f32 %v858, 1.0
        %v861 = vadd.f32 %v859, 1.0
        %v862 = vmul.f32 %v860, 0.5
        %v863 = vmul.f32 %v861, 0.5
        %v864 = vmul.f32 %v852, %v570
        %v865 = vmul.f32 %v853, %v571
        %v866 = vmul.f32 %v844, %v854
        %v867 = vmul.f32 %v845, %v855
        %v868 = vadd.f32 %v864, %v866
        %v869 = vadd.f32 %v865, %v867
        %v870 = vtanh.pop %v868
        %v871 = vtanh.pop %v869
        %v872 = vmul.f32 %v862, %v870
        %v873 = vmul.f32 %v863, %v871
        %s874 = smul.u32 %s25, 3
        %p875 = scmp.lt.s32.totalorder %s874, 8
        %s876 = scalar_select %p875, 1, 0
        %v877 = vstv %s876
        %vm878 = vcmp.eq.s32.totalorder %v877, 1
        %v879 = vsel %vm878, %v872, %v568
        %v880 = vsel %vm878, %v873, %v569
        %v881 = vsel %vm878, %v868, %v570
        %v882 = vsel %vm878, %v869, %v571
        %s883 = smul.u32 2, 4
        %s884 = smul.addr %s883, 8
        %s885 = scalar_lea.vmem [#allocation4], %s884
        %v886 = vld [vmem:[%s885] sm:$0xff]
        %v887 = vld [vmem:[%s885 + $0x8] sm:$0xff]
        %v888 = vld [vmem:[%s885 + $0x10] sm:$0xff]
        %v889 = vld [vmem:[%s885 + $0x18] sm:$0xff]
        %v890 = vld [vmem:[%s885 + $0x20] sm:$0xff]
        %v891 = vld [vmem:[%s885 + $0x28] sm:$0xff]
        %v892 = vld [vmem:[%s885 + $0x30] sm:$0xff]
        %v893 = vld [vmem:[%s885 + $0x38] sm:$0xff]
        %v894 = vpack.c.bf16 %v880, %v879
        %895 = vmatprep.subr.bf16.mxu0 %v681
        %896 = vmatpush1.bf16.msra.mxu0 %v680
        %897 = vmatprep.subr.bf16.mxu0 %v685
        %898 = vmatpush1.bf16.msra.mxu0 %v684
        %899 = vmatprep.subr.bf16.mxu0 %v689
        %900 = vmatpush1.bf16.msra.mxu0 %v688
        %901 = vmatprep.subr.bf16.mxu0 %v693
        %902 = vmatpush1.bf16.msra.mxu0 %v692
        %903 = vmatprep.subr.bf16.mxu0 %v697
        %904 = vmatpush1.bf16.msra.mxu0 %v696
        %905 = vmatprep.subr.bf16.mxu0 %v701
        %906 = vmatpush1.bf16.msra.mxu0 %v700
        %907 = vmatprep.subr.bf16.mxu0 %v705
        %908 = vmatpush1.bf16.msra.mxu0 %v704
        %909 = vmatprep.subr.bf16.mxu0 %v709
        %910 = vmatpush1.bf16.msra.mxu0 %v708
        %911 = vmatprep.subr.bf16.mxu0 0
        %912 = vmatpush1.bf16.msra.mxu0 0
        %913 = vmatprep.subr.bf16.mxu0 0
        %914 = vmatpush1.bf16.msra.mxu0 0
        %915 = vmatprep.subr.bf16.mxu0 0
        %916 = vmatpush1.bf16.msra.mxu0 0
        %917 = vmatprep.subr.bf16.mxu0 0
        %918 = vmatpush1.bf16.msra.mxu0 0
        %919 = vmatprep.subr.bf16.mxu0 0
        %920 = vmatpush1.bf16.msra.mxu0 0
        %921 = vmatprep.subr.bf16.mxu0 0
        %922 = vmatpush1.bf16.msra.mxu0 0
        %923 = vmatprep.subr.bf16.mxu0 0
        %924 = vmatpush1.bf16.msra.mxu0 0
        %925 = vmatprep.subr.bf16.mxu0 0
        %926 = vmatpush1.bf16.msra.mxu0 0
        %927 = vmatprep.mubr.bf16.mxu0 0
        %928 = vmatmul.mubr.bf16.gmra.mrb[0].mxu0 %v894
        %v929 = vpop.f32.mrb[0].mxu0
        %v930 = vadd.f32 0.0, %v929
        %v931 = vpop.f32.mrb[0].mxu0
        %v932 = vadd.f32 0.0, %v931
        %v933 = vpop.f32.mrb[0].mxu0
        %v934 = vadd.f32 0.0, %v933
        %v935 = vpop.f32.mrb[0].mxu0
        %v936 = vadd.f32 0.0, %v935
        %937 = vdwg.mxu0
        %938 = vmatprep.subr.bf16.mxu0 %v683
        %939 = vmatpush1.bf16.msra.mxu0 %v682
        %940 = vmatprep.subr.bf16.mxu0 %v687
        %941 = vmatpush1.bf16.msra.mxu0 %v686
        %942 = vmatprep.subr.bf16.mxu0 %v691
        %943 = vmatpush1.bf16.msra.mxu0 %v690
        %944 = vmatprep.subr.bf16.mxu0 %v695
        %945 = vmatpush1.bf16.msra.mxu0 %v694
        %946 = vmatprep.subr.bf16.mxu0 %v699
        %947 = vmatpush1.bf16.msra.mxu0 %v698
        %948 = vmatprep.subr.bf16.mxu0 %v703
        %949 = vmatpush1.bf16.msra.mxu0 %v702
        %950 = vmatprep.subr.bf16.mxu0 %v707
        %951 = vmatpush1.bf16.msra.mxu0 %v706
        %952 = vmatprep.subr.bf16.mxu0 %v711
        %953 = vmatpush1.bf16.msra.mxu0 %v710
        %954 = vmatprep.subr.bf16.mxu0 0
        %955 = vmatpush1.bf16.msra.mxu0 0
        %956 = vmatprep.subr.bf16.mxu0 0
        %957 = vmatpush1.bf16.msra.mxu0 0
        %958 = vmatprep.subr.bf16.mxu0 0
        %959 = vmatpush1.bf16.msra.mxu0 0
        %960 = vmatprep.subr.bf16.mxu0 0
        %961 = vmatpush1.bf16.msra.mxu0 0
        %962 = vmatprep.subr.bf16.mxu0 0
        %963 = vmatpush1.bf16.msra.mxu0 0
        %964 = vmatprep.subr.bf16.mxu0 0
        %965 = vmatpush1.bf16.msra.mxu0 0
        %966 = vmatprep.subr.bf16.mxu0 0
        %967 = vmatpush1.bf16.msra.mxu0 0
        %968 = vmatprep.subr.bf16.mxu0 0
        %969 = vmatpush1.bf16.msra.mxu0 0
        %970 = vmatprep.mubr.bf16.mxu0 0
        %971 = vmatmul.mubr.bf16.gmra.mrb[0].mxu0 %v894
        %v972 = vpop.f32.mrb[0].mxu0
        %v973 = vadd.f32 0.0, %v972
        %v974 = vpop.f32.mrb[0].mxu0
        %v975 = vadd.f32 0.0, %v974
        %v976 = vpop.f32.mrb[0].mxu0
        %v977 = vadd.f32 0.0, %v976
        %v978 = vpop.f32.mrb[0].mxu0
        %v979 = vadd.f32 0.0, %v978
        %980 = vdwg.mxu0
        %v981 = vadd.f32 %v886, %v930
        %v982 = vadd.f32 %v887, %v932
        %v983 = vadd.f32 %v888, %v973
        %v984 = vadd.f32 %v889, %v975
        %v985 = vadd.f32 %v890, %v934
        %v986 = vadd.f32 %v891, %v936
        %v987 = vadd.f32 %v892, %v977
        %v988 = vadd.f32 %v893, %v979
        %v989 = vmul.f32 %v981, 0.5
        %v990 = vmul.f32 %v985, 0.5
        %v991 = vtanh.pop %v989
        %v992 = vtanh.pop %v990
        %v993 = vadd.f32 %v991, 1.0
        %v994 = vadd.f32 %v992, 1.0
        %v995 = vmul.f32 %v993, 0.5
        %v996 = vmul.f32 %v994, 0.5
        %v997 = vmul.f32 %v982, 0.5
        %v998 = vmul.f32 %v986, 0.5
        %v999 = vtanh.pop %v997
        %v1000 = vtanh.pop %v998
        %v1001 = vadd.f32 %v999, 1.0
        %v1002 = vadd.f32 %v1000, 1.0
        %v1003 = vmul.f32 %v1001, 0.5
        %v1004 = vmul.f32 %v1002, 0.5
        %v1005 = vtanh.pop %v983
        %v1006 = vtanh.pop %v987
        %v1007 = vmul.f32 %v984, 0.5
        %v1008 = vmul.f32 %v988, 0.5
        %v1009 = vtanh.pop %v1007
        %v1010 = vtanh.pop %v1008
        %v1011 = vadd.f32 %v1009, 1.0
        %v1012 = vadd.f32 %v1010, 1.0
        %v1013 = vmul.f32 %v1011, 0.5
        %v1014 = vmul.f32 %v1012, 0.5
        %v1015 = vmul.f32 %v1003, %v881
        %v1016 = vmul.f32 %v1004, %v882
        %v1017 = vmul.f32 %v995, %v1005
        %v1018 = vmul.f32 %v996, %v1006
        %v1019 = vadd.f32 %v1015, %v1017
        %v1020 = vadd.f32 %v1016, %v1018
        %v1021 = vtanh.pop %v1019
        %v1022 = vtanh.pop %v1020
        %v1023 = vmul.f32 %v1013, %v1021
        %v1024 = vmul.f32 %v1014, %v1022
        %s1025 = sadd.s32 %s874, 1
        %p1026 = scmp.lt.s32.totalorder %s1025, 8
        %s1027 = scalar_select %p1026, 1, 0
        %v1028 = vstv %s1027
        %vm1029 = vcmp.eq.s32.totalorder %v1028, 1
        %v1030 = vsel %vm1029, %v1023, %v879
        %v1031 = vsel %vm1029, %v1024, %v880
        %v1032 = vsel %vm1029, %v1019, %v881
        %v1033 = vsel %vm1029, %v1020, %v882
        %s1034 = smul.u32 4, 4
        %s1035 = smul.addr %s1034, 8
        %s1036 = scalar_lea.vmem [#allocation4], %s1035
        %v1037 = vld [vmem:[%s1036] sm:$0xff]
        %v1038 = vld [vmem:[%s1036 + $0x8] sm:$0xff]
        %v1039 = vld [vmem:[%s1036 + $0x10] sm:$0xff]
        %v1040 = vld [vmem:[%s1036 + $0x18] sm:$0xff]
        %v1041 = vld [vmem:[%s1036 + $0x20] sm:$0xff]
        %v1042 = vld [vmem:[%s1036 + $0x28] sm:$0xff]
        %v1043 = vld [vmem:[%s1036 + $0x30] sm:$0xff]
        %v1044 = vld [vmem:[%s1036 + $0x38] sm:$0xff]
        %v1045 = vpack.c.bf16 %v1031, %v1030
        %1046 = vmatprep.subr.bf16.mxu0 %v681
        %1047 = vmatpush1.bf16.msra.mxu0 %v680
        %1048 = vmatprep.subr.bf16.mxu0 %v685
        %1049 = vmatpush1.bf16.msra.mxu0 %v684
        %1050 = vmatprep.subr.bf16.mxu0 %v689
        %1051 = vmatpush1.bf16.msra.mxu0 %v688
        %1052 = vmatprep.subr.bf16.mxu0 %v693
        %1053 = vmatpush1.bf16.msra.mxu0 %v692
        %1054 = vmatprep.subr.bf16.mxu0 %v697
        %1055 = vmatpush1.bf16.msra.mxu0 %v696
        %1056 = vmatprep.subr.bf16.mxu0 %v701
        %1057 = vmatpush1.bf16.msra.mxu0 %v700
        %1058 = vmatprep.subr.bf16.mxu0 %v705
        %1059 = vmatpush1.bf16.msra.mxu0 %v704
        %1060 = vmatprep.subr.bf16.mxu0 %v709
        %1061 = vmatpush1.bf16.msra.mxu0 %v708
        %1062 = vmatprep.subr.bf16.mxu0 0
        %1063 = vmatpush1.bf16.msra.mxu0 0
        %1064 = vmatprep.subr.bf16.mxu0 0
        %1065 = vmatpush1.bf16.msra.mxu0 0
        %1066 = vmatprep.subr.bf16.mxu0 0
        %1067 = vmatpush1.bf16.msra.mxu0 0
        %1068 = vmatprep.subr.bf16.mxu0 0
        %1069 = vmatpush1.bf16.msra.mxu0 0
        %1070 = vmatprep.subr.bf16.mxu0 0
        %1071 = vmatpush1.bf16.msra.mxu0 0
        %1072 = vmatprep.subr.bf16.mxu0 0
        %1073 = vmatpush1.bf16.msra.mxu0 0
        %1074 = vmatprep.subr.bf16.mxu0 0
        %1075 = vmatpush1.bf16.msra.mxu0 0
        %1076 = vmatprep.subr.bf16.mxu0 0
        %1077 = vmatpush1.bf16.msra.mxu0 0
        %1078 = vmatprep.mubr.bf16.mxu0 0
        %1079 = vmatmul.mubr.bf16.gmra.mrb[0].mxu0 %v1045
        %v1080 = vpop.f32.mrb[0].mxu0
        %v1081 = vadd.f32 0.0, %v1080
        %v1082 = vpop.f32.mrb[0].mxu0
        %v1083 = vadd.f32 0.0, %v1082
        %v1084 = vpop.f32.mrb[0].mxu0
        %v1085 = vadd.f32 0.0, %v1084
        %v1086 = vpop.f32.mrb[0].mxu0
        %v1087 = vadd.f32 0.0, %v1086
        %1088 = vdwg.mxu0
        %1089 = vmatprep.subr.bf16.mxu0 %v683
        %1090 = vmatpush1.bf16.msra.mxu0 %v682
        %1091 = vmatprep.subr.bf16.mxu0 %v687
        %1092 = vmatpush1.bf16.msra.mxu0 %v686
        %1093 = vmatprep.subr.bf16.mxu0 %v691
        %1094 = vmatpush1.bf16.msra.mxu0 %v690
        %1095 = vmatprep.subr.bf16.mxu0 %v695
        %1096 = vmatpush1.bf16.msra.mxu0 %v694
        %1097 = vmatprep.subr.bf16.mxu0 %v699
        %1098 = vmatpush1.bf16.msra.mxu0 %v698
        %1099 = vmatprep.subr.bf16.mxu0 %v703
        %1100 = vmatpush1.bf16.msra.mxu0 %v702
        %1101 = vmatprep.subr.bf16.mxu0 %v707
        %1102 = vmatpush1.bf16.msra.mxu0 %v706
        %1103 = vmatprep.subr.bf16.mxu0 %v711
        %1104 = vmatpush1.bf16.msra.mxu0 %v710
        %1105 = vmatprep.subr.bf16.mxu0 0
        %1106 = vmatpush1.bf16.msra.mxu0 0
        %1107 = vmatprep.subr.bf16.mxu0 0
        %1108 = vmatpush1.bf16.msra.mxu0 0
        %1109 = vmatprep.subr.bf16.mxu0 0
        %1110 = vmatpush1.bf16.msra.mxu0 0
        %1111 = vmatprep.subr.bf16.mxu0 0
        %1112 = vmatpush1.bf16.msra.mxu0 0
        %1113 = vmatprep.subr.bf16.mxu0 0
        %1114 = vmatpush1.bf16.msra.mxu0 0
        %1115 = vmatprep.subr.bf16.mxu0 0
        %1116 = vmatpush1.bf16.msra.mxu0 0
        %1117 = vmatprep.subr.bf16.mxu0 0
        %1118 = vmatpush1.bf16.msra.mxu0 0
        %1119 = vmatprep.subr.bf16.mxu0 0
        %1120 = vmatpush1.bf16.msra.mxu0 0
        %1121 = vmatprep.mubr.bf16.mxu0 0
        %1122 = vmatmul.mubr.bf16.gmra.mrb[0].mxu0 %v1045
        %v1123 = vpop.f32.mrb[0].mxu0
        %v1124 = vadd.f32 0.0, %v1123
        %v1125 = vpop.f32.mrb[0].mxu0
        %v1126 = vadd.f32 0.0, %v1125
        %v1127 = vpop.f32.mrb[0].mxu0
        %v1128 = vadd.f32 0.0, %v1127
        %v1129 = vpop.f32.mrb[0].mxu0
        %v1130 = vadd.f32 0.0, %v1129
        %1131 = vdwg.mxu0
        %v1132 = vadd.f32 %v1037, %v1081
        %v1133 = vadd.f32 %v1038, %v1083
        %v1134 = vadd.f32 %v1039, %v1124
        %v1135 = vadd.f32 %v1040, %v1126
        %v1136 = vadd.f32 %v1041, %v1085
        %v1137 = vadd.f32 %v1042, %v1087
        %v1138 = vadd.f32 %v1043, %v1128
        %v1139 = vadd.f32 %v1044, %v1130
        %v1140 = vmul.f32 %v1132, 0.5
        %v1141 = vmul.f32 %v1136, 0.5
        %v1142 = vtanh.pop %v1140
        %v1143 = vtanh.pop %v1141
        %v1144 = vadd.f32 %v1142, 1.0
        %v1145 = vadd.f32 %v1143, 1.0
        %v1146 = vmul.f32 %v1144, 0.5
        %v1147 = vmul.f32 %v1145, 0.5
        %v1148 = vmul.f32 %v1133, 0.5
        %v1149 = vmul.f32 %v1137, 0.5
        %v1150 = vtanh.pop %v1148
        %v1151 = vtanh.pop %v1149
        %v1152 = vadd.f32 %v1150, 1.0
        %v1153 = vadd.f32 %v1151, 1.0
        %v1154 = vmul.f32 %v1152, 0.5
        %v1155 = vmul.f32 %v1153, 0.5
        %v1156 = vtanh.pop %v1134
        %v1157 = vtanh.pop %v1138
        %v1158 = vmul.f32 %v1135, 0.5
        %v1159 = vmul.f32 %v1139, 0.5
        %v1160 = vtanh.pop %v1158
        %v1161 = vtanh.pop %v1159
        %v1162 = vadd.f32 %v1160, 1.0
        %v1163 = vadd.f32 %v1161, 1.0
        %v1164 = vmul.f32 %v1162, 0.5
        %v1165 = vmul.f32 %v1163, 0.5
        %v1166 = vmul.f32 %v1154, %v1032
        %v1167 = vmul.f32 %v1155, %v1033
        %v1168 = vmul.f32 %v1146, %v1156
        %v1169 = vmul.f32 %v1147, %v1157
        %v1170 = vadd.f32 %v1166, %v1168
        %v1171 = vadd.f32 %v1167, %v1169
        %v1172 = vtanh.pop %v1170
        %v1173 = vtanh.pop %v1171
        %v1174 = vmul.f32 %v1164, %v1172
        %v1175 = vmul.f32 %v1165, %v1173
        %s1176 = sadd.s32 %s874, 2
        %p1177 = scmp.lt.s32.totalorder %s1176, 8
        %s1178 = scalar_select %p1177, 1, 0
        %v1179 = vstv %s1178
        %vm1180 = vcmp.eq.s32.totalorder %v1179, 1
        %v1181 = vsel %vm1180, %v1174, %v1030
        %v1182 = vsel %vm1180, %v1175, %v1031
        %v1183 = vsel %vm1180, %v1170, %v1032
        %v1184 = vsel %vm1180, %v1171, %v1033
        %1185 = vst [vmem:[#allocation2] sm:$0xff] %v1181
        %1186 = vst [vmem:[#allocation2 + $0x8] sm:$0xff] %v1182
        %1187 = vst [vmem:[#allocation3] sm:$0xff] %v1183
        %1188 = vst [vmem:[#allocation3 + $0x8] sm:$0xff] %v1184
        %p1189 = scmp.eq.s32.totalorder %s25, 2
        // Predicated region
        $region57: #{tpu_custom_call.1} parent=43 // pred_check
          %p1190 = pneg %p1189
        $region58: #{tpu_custom_call.1} parent=43 // pred_check_branch
          %1192 = sbr.rel (%p1190) target = $region60
        $region59: #{tpu_custom_call.1} parent=43 // pred_region
          %v1193 = vld [vmem:[#allocation8] sm:$0xff]
          %v1194 = vld [vmem:[#allocation8 + $0x8] sm:$0xff]
          %v1195 = vld [vmem:[#allocation8 + $0x10] sm:$0xff]
          %v1196 = vld [vmem:[#allocation8 + $0x18] sm:$0xff]
          %v1197 = vld [vmem:[#allocation8 + $0x20] sm:$0xff]
          %v1198 = vld [vmem:[#allocation8 + $0x28] sm:$0xff]
          %v1199 = vld [vmem:[#allocation8 + $0x30] sm:$0xff]
          %v1200 = vld [vmem:[#allocation8 + $0x38] sm:$0xff]
          %v1201 = vld [vmem:[#allocation8 + $0x40] sm:$0xff]
          %v1202 = vld [vmem:[#allocation8 + $0x48] sm:$0xff]
          %v1203 = vld [vmem:[#allocation8 + $0x50] sm:$0xff]
          %v1204 = vld [vmem:[#allocation8 + $0x58] sm:$0xff]
          %v1205 = vld [vmem:[#allocation8 + $0x60] sm:$0xff]
          %v1206 = vld [vmem:[#allocation8 + $0x68] sm:$0xff]
          %v1207 = vld [vmem:[#allocation8 + $0x70] sm:$0xff]
          %v1208 = vld [vmem:[#allocation8 + $0x78] sm:$0xff]
          %v1209 = vld [vmem:[%s5] sm:$0x1]
          %v1211 = vlaneseq
          %v1212 = vshrl.u32 %v1211, 7
          %v1213 = vsub.s32 0, %v1212
          %v1214 = vrot.slane %v1209, %v1213
          %1216 = vmatprep.subr.mxu0 0.0
          %1217 = vmatpush1.msra.mxu0 %v1193
          %1218 = vmatprep.subr.mxu0 0.0
          %1219 = vmatpush1.msra.mxu0 %v1194
          %1220 = vmatprep.subr.mxu0 0.0
          %1221 = vmatpush1.msra.mxu0 %v1195
          %1222 = vmatprep.subr.mxu0 0.0
          %1223 = vmatpush1.msra.mxu0 %v1196
          %1224 = vmatprep.subr.mxu0 0.0
          %1225 = vmatpush1.msra.mxu0 %v1197
          %1226 = vmatprep.subr.mxu0 0.0
          %1227 = vmatpush1.msra.mxu0 %v1198
          %1228 = vmatprep.subr.mxu0 0.0
          %1229 = vmatpush1.msra.mxu0 %v1199
          %1230 = vmatprep.subr.mxu0 0.0
          %1231 = vmatpush1.msra.mxu0 %v1200
          %1232 = vmatprep.subr.mxu0 0.0
          %1233 = vmatpush1.msra.mxu0 %v1201
          %1234 = vmatprep.subr.mxu0 0.0
          %1235 = vmatpush1.msra.mxu0 %v1202
          %1236 = vmatprep.subr.mxu0 0.0
          %1237 = vmatpush1.msra.mxu0 %v1203
          %1238 = vmatprep.subr.mxu0 0.0
          %1239 = vmatpush1.msra.mxu0 %v1204
          %1240 = vmatprep.subr.mxu0 0.0
          %1241 = vmatpush1.msra.mxu0 %v1205
          %1242 = vmatprep.subr.mxu0 0.0
          %1243 = vmatpush1.msra.mxu0 %v1206
          %1244 = vmatprep.subr.mxu0 0.0
          %1245 = vmatpush1.msra.mxu0 %v1207
          %1246 = vmatprep.subr.mxu0 0.0
          %1247 = vmatpush1.msra.mxu0 %v1208
          %1248 = vmatprep.subr.mxu0 0.0
          %1249 = vmatpush1.msra.mxu0 0.0
          %1250 = vmatprep.subr.mxu0 0.0
          %1251 = vmatpush1.msra.mxu0 0.0
          %1252 = vmatprep.subr.mxu0 0.0
          %1253 = vmatpush1.msra.mxu0 0.0
          %1254 = vmatprep.subr.mxu0 0.0
          %1255 = vmatpush1.msra.mxu0 0.0
          %1256 = vmatprep.subr.mxu0 0.0
          %1257 = vmatpush1.msra.mxu0 0.0
          %1258 = vmatprep.subr.mxu0 0.0
          %1259 = vmatpush1.msra.mxu0 0.0
          %1260 = vmatprep.subr.mxu0 0.0
          %1261 = vmatpush1.msra.mxu0 0.0
          %1262 = vmatprep.subr.mxu0 0.0
          %1263 = vmatpush1.msra.mxu0 0.0
          %1264 = vmatprep.subr.mxu0 0.0
          %1265 = vmatpush1.msra.mxu0 0.0
          %1266 = vmatprep.subr.mxu0 0.0
          %1267 = vmatpush1.msra.mxu0 0.0
          %1268 = vmatprep.subr.mxu0 0.0
          %1269 = vmatpush1.msra.mxu0 0.0
          %1270 = vmatprep.subr.mxu0 0.0
          %1271 = vmatpush1.msra.mxu0 0.0
          %1272 = vmatprep.subr.mxu0 0.0
          %1273 = vmatpush1.msra.mxu0 0.0
          %1274 = vmatprep.subr.mxu0 0.0
          %1275 = vmatpush1.msra.mxu0 0.0
          %1276 = vmatprep.subr.mxu0 0.0
          %1277 = vmatpush1.msra.mxu0 0.0
          %1278 = vmatprep.subr.mxu0 0.0
          %1279 = vmatpush1.msra.mxu0 0.0
          %1280 = vmatprep.mubr.f32.mxu0 0.0
          %1281 = vmatmul.mubr.f32.gmra.mrb[0].mxu0 %v1181
          %v1282 = vpop.f32.mrb[0].mxu0
          %v1283 = vadd.f32 %v1214, %v1282
          %v1284 = vpop.f32.mrb[0].mxu0
          %1285 = vmatprep.mubr.f32.mxu0 0.0
          %1286 = vmatmul.mubr.f32.gmra.mrb[0].mxu0 %v1182
          %v1287 = vpop.f32.mrb[0].mxu0
          %v1288 = vadd.f32 %v1214, %v1287
          %v1289 = vpop.f32.mrb[0].mxu0
          %1290 = vdwg.mxu0
          %1291 = vmax.xlane.f32.xlu0 %v1283
          %v1292 = vpop.xlane.xlu0 %1291
          %1293 = vmax.xlane.f32.xlu0 %v1288
          %v1294 = vpop.xlane.xlu0 %1293
          %v1295 = vsub.f32 %v1283, %v1292
          %v1296 = vsub.f32 %v1288, %v1294
          %v1297 = vmul.f32 %v1295, 1.442695
          %v1298 = vpow.pop %v1297
          %v1299 = vmul.f32 %v1296, 1.442695
          %v1300 = vpow.pop %v1299
          %1301 = vadd.xlane.f32.xlu0 %v1298
          %v1302 = vpop.xlane.xlu0 %1301
          %1303 = vadd.xlane.f32.xlu0 %v1300
          %v1304 = vpop.xlane.xlu0 %1303
          %v1305 = vrcp.pop %v1302
          %v1306 = vrcp.pop %v1304
          %v1307 = vmul.f32 %v1298, %v1305
          %v1308 = vmul.f32 %v1300, %v1306
          %1309 = vst [vmem:[#allocation10] sm:$0xff] %v1307
          %1310 = vst [vmem:[#allocation10 + $0x8] sm:$0xff] %v1308
        $region60: #{tpu_custom_call.1} parent=43 // pred_fallthru
          _
        // Predicated region
        $region61: #{tpu_custom_call.1} parent=43 // pred_check
          %p1311 = pneg %p183
        $region62: #{tpu_custom_call.1} parent=43 // pred_check_branch
          %1313 = sbr.rel (%p1311) target = $region64
        $region63: #{tpu_custom_call.1} parent=43 // pred_region
          %s1314 = smul.u32 2, %s24
          %s1316 = ssub.s32 256, 256
          %1317 = vsyncadd [#allocation7], %s1316
          %s1318 = smul.addr %s1314, 128
          %s1319 = scalar_lea.hbm %s6, %s1318
          %s1320 = sshll.u32 [#allocation10], 4
          %s1321 = int_to_ptr.vmem [resolvable:$true] %s1320
          %1326 = dma.vmem_to_hbm [thread:$0]  %s1321, 256, %s1319, [#allocation7], 128, 128, 8
        $region64: #{tpu_custom_call.1} parent=43 // pred_fallthru
          _
        // Predicated region
        $region65: #{tpu_custom_call.1} parent=43 // pred_check
          %p1327 = pneg %p183
        $region66: #{tpu_custom_call.1} parent=43 // pred_check_branch
          %1329 = sbr.rel (%p1327) target = $region68
        $region67: #{tpu_custom_call.1} parent=43 // pred_region
          %1330 = dma.done [#allocation7], 256
        $region68: #{tpu_custom_call.1} parent=43 // pred_fallthru
          _
      $region44: #{tpu_custom_call.1} parent=5 // pred_fallthru
        _
      %p1331 = scmp.le.s32.totalorder 2, %s15
      // Predicated region
      $region69: #{tpu_custom_call.1} parent=5 // pred_check
        %p1332 = pneg %p1331
      $region70: #{tpu_custom_call.1} parent=5 // pred_check_branch
        %1334 = sbr.rel (%p1332) target = $region72
      $region71: #{tpu_custom_call.1} parent=5 // pred_region
        %s1335 = ssub.s32 %s15, 2
      $region72: #{tpu_custom_call.1} parent=5 // pred_fallthru
        _
    $region6: #{tpu_custom_call.1} parent=1 // loop_footer
      %s19 = sadd.s32 1, %s15
    $region7: #{tpu_custom_call.1} parent=1 // loop_footer_branch
      %14 = sbr.rel target = $region3
    $region8: #{tpu_custom_call.1} parent=1 // loop_exit
      _
    %1336 = vsyncpa [#allocation6], 1
    %s1337 = scalar_lea.sflag [#allocation6], 1
    %1338 = vsyncpa %s1337, 1
    %1339 = vsyncpa [#allocation9], 1
    %1340 = vsyncpa [#allocation7], 1
    %s1341 = scalar_lea.sflag [#allocation7], 1
    %1342 = vsyncpa %s1341, 1

</llo_original>
